<compile_context>
chip_gen: v5e
topology: v5e:2x2
jax: 0.10.0
libtpu: 0.0.40
codegen_flags: <defaults>
</compile_context>

<pallas_src>
import jax
import jax.numpy as jnp
from jax.experimental import pallas as pl
from jax.experimental.pallas import tpu as pltpu

LANES = 128


def _rup(n, m):
    return ((n + m - 1) // m) * m


# ----------------------------------------------------------------------------
# Fused kernel builder (Bb batch rows per grid step)
# ----------------------------------------------------------------------------
def _build_kernel(*, T, Bb, K, P, cfg_f, cfg_b, n_w):
    """cfg_*: static tuple of (dilation, has_downsample, CPi, CPo) per TemporalBlock."""
    M = Bb * T

    def kernel(*refs):
        x_ref, xproj_ref = refs[0], refs[1]
        w_refs = refs[2:2 + n_w]
        o_ref = refs[2 + n_w]
        scr_f = refs[3 + n_w]            # VMEM [Bb, P+T, CPmax] bf16, pad rows at front
        scr_b = refs[4 + n_w]            # VMEM [Bb, P+T, CPmax] bf16, pad rows at back

        widx = [0]

        def next_w():
            r = w_refs[widx[0]]
            widx[0] += 1
            return r

        # Zero only the pad rows (data regions are fully overwritten every step).
        # Done every step (cheap) instead of @pl.when(program_id==0): with megacore
        # "parallel" sharding the second core never executes grid step 0.
        scr_f[:, 0:P, :] = jnp.zeros((Bb, P, scr_f.shape[2]), scr_f.dtype)
        scr_b[:, T:T + P, :] = jnp.zeros((Bb, P, scr_b.shape[2]), scr_b.dtype)

        def conv_relu(h, w_taps, b_ref, d, scr, row0, anti, CPi):
            # Dilated (anti-)causal conv (== Conv1d(padding=(K-1)d) + Chomp1d) fused
            # with its ReLU.  h: bf16 [M, CPi].  K accumulated tap matmuls, no im2col.
            if K > 1:
                scr[:, row0:row0 + T, :CPi] = h.reshape(Bb, T, CPi)
            # Tap K-1 has zero temporal shift in both directions -> use h directly.
            y = jnp.dot(h, w_taps[K - 1][...], preferred_element_type=jnp.float32)
            for k in range(K - 1):
                s = (K - 1 - k) * d                       # temporal offset of tap k
                start = s if anti else row0 - s
                xk = scr[:, start:start + T, :CPi].reshape(M, CPi)
                y = y + jnp.dot(xk, w_taps[k][...],
                                preferred_element_type=jnp.float32)
            y = y + b_ref[...]                            # f32 bias
            return jnp.maximum(y, 0.0)

        def run_tcn(h0, cfg, scr, row0, anti):
            # anti=False: forward (causal) TCN.  anti=True: backward TCN computed as the
            # anti-causal twin (flip . causal-TCN . flip) on the un-flipped input.
            h = h0
            for dilation, has_down, CPi, CPo in cfg:
                w1 = [next_w() for _ in range(K)]
                b1 = next_w()
                w2 = [next_w() for _ in range(K)]
                b2 = next_w()
                out = conv_relu(h, w1, b1, dilation, scr, row0, anti, CPi)
                # TODO(synk): nn.Dropout(p=0.2) is identity at inference; not modeled.
                out = conv_relu(out.astype(jnp.bfloat16), w2, b2, dilation,
                                scr, row0, anti, CPo)
                if has_down:
                    wd, bd = next_w(), next_w()
                    res = jnp.dot(h, wd[...], preferred_element_type=jnp.float32)
                    res = res + bd[...]
                else:
                    res = h.astype(jnp.float32)
                h = jnp.maximum(out + res, 0.0).astype(jnp.bfloat16)
            return h

        # Widen x from F real channels to a lane-dense width with a tiny [F,CP0] matmul
        # per batch row (avoids reshaping the narrow F<128 input block and any HBM-side
        # padding of x).
        xproj = xproj_ref[...]
        h0 = jnp.concatenate(
            [jnp.dot(x_ref[b].astype(jnp.bfloat16), xproj,
                     preferred_element_type=jnp.float32) for b in range(Bb)],
            axis=0).astype(jnp.bfloat16)                  # [M, CP0]

        hf = run_tcn(h0, cfg_f, scr_f, P, anti=False)
        hb = run_tcn(h0, cfg_b, scr_b, 0, anti=True)

        # Final Linear over [fwd ; bwd] without materializing the concatenation.
        fc_wf, fc_wb, fc_bias = next_w(), next_w(), next_w()
        y = jnp.dot(hf, fc_wf[...], preferred_element_type=jnp.float32)
        y = y + jnp.dot(hb, fc_wb[...], preferred_element_type=jnp.float32)
        y = y + fc_bias[...]
        for b in range(Bb):
            o_ref[b] = y[b * T:(b + 1) * T, :].astype(o_ref.dtype)

    return kernel


# ----------------------------------------------------------------------------
# Wrapper: one-time weight padding (per-layer widths, bf16) + single pallas_call
# ----------------------------------------------------------------------------
def _pad2(w, r, c):
    w = w.astype(jnp.bfloat16)
    return jnp.pad(w, ((0, r - w.shape[0]), (0, c - w.shape[1])))


def _pad_bias(b, c):
    return jnp.pad(b.astype(jnp.float32), (0, c - b.shape[0])).reshape(1, c)


def bidirectional_tcn(x, fwd_params, bwd_params, fc_w, fc_b, *, kernel_size):
    """x: [B, T, F] float32 -> [B, T, num_channels[-1]] float32."""
    B, T, F = x.shape
    K = kernel_size
    c_last = fwd_params[-1]["w1"].shape[2]
    c_out = fc_w.shape[1]

    CP0 = _rup(F, LANES)
    CPh = _rup(c_out, LANES)
    CP_last = _rup(c_last, LANES)

    flat_w, cfgs, cp_widths = [], {}, [CP0]
    for name, params in (("fwd", fwd_params), ("bwd", bwd_params)):
        cfg = []
        for lp in params:
            _, in_c, out_c = lp["w1"].shape
            CPi, CPo = _rup(in_c, LANES), _rup(out_c, LANES)   # per-layer lane padding
            cp_widths += [CPi, CPo]
            has_down = lp["wd"] is not None
            cfg.append((int(lp["dilation"]), has_down, CPi, CPo))
            flat_w += [_pad2(lp["w1"][k], CPi, CPo) for k in range(K)]
            flat_w += [_pad_bias(lp["b1"], CPo)]
            flat_w += [_pad2(lp["w2"][k], CPo, CPo) for k in range(K)]
            flat_w += [_pad_bias(lp["b2"], CPo)]
            if has_down:
                flat_w += [_pad2(lp["wd"][0], CPi, CPo), _pad_bias(lp["bd"], CPo)]
        cfgs[name] = tuple(cfg)

    # Final Linear split into forward/backward halves (removes the [B,T,2C] concat).
    flat_w += [_pad2(fc_w[:c_last], CP_last, CPh),
               _pad2(fc_w[c_last:], CP_last, CPh),
               _pad_bias(fc_b, CPh)]

    CPmax = max(cp_widths)
    x_proj = jnp.eye(F, CP0, dtype=jnp.bfloat16)      # on-chip lane-widening projection

    max_pad = max((K - 1) * d for d, *_ in cfgs["fwd"] + cfgs["bwd"])
    P = _rup(max(max_pad, 1), 8)

    # Rows per grid step: grow the MXU M dimension (target <= 256) but keep >= 2 grid
    # steps when B allows so a 2-TensorCore chip (v7x) keeps both cores busy.
    Bb = 1
    for d in range(1, B + 1):
        if B % d == 0 and d * T <= 256:
            Bb = d
    if Bb == B and B > 1:
        Bb = max(d for d in range(1, B) if B % d == 0)
    grid = (B // Bb,)

    kern = _build_kernel(T=T, Bb=Bb, K=K, P=P,
                         cfg_f=cfgs["fwd"], cfg_b=cfgs["bwd"], n_w=len(flat_w))

    in_specs = [pl.BlockSpec((Bb, T, F), lambda i: (i, 0, 0)),     # Bb batch rows
                pl.BlockSpec(x_proj.shape, lambda i: (0, 0))]      # resident
    # TODO(synk): on v7x with wide channels, mark these invariant weights
    #             pipeline_mode=pl.Buffered(1) to avoid double-buffered residency.
    in_specs += [pl.BlockSpec(w.shape, lambda i: (0, 0)) for w in flat_w]

    out = pl.pallas_call(
        kern,
        grid=grid,
        in_specs=in_specs,
        out_specs=pl.BlockSpec((Bb, T, CPh), lambda i: (i, 0, 0)),  # lane-dense output
        out_shape=jax.ShapeDtypeStruct((B, T, CPh), x.dtype),
        scratch_shapes=[pltpu.VMEM((Bb, P + T, CPmax), jnp.bfloat16),   # fwd staging
                        pltpu.VMEM((Bb, P + T, CPmax), jnp.bfloat16)],  # bwd staging
        compiler_params=pltpu.CompilerParams(dimension_semantics=("parallel",)),
    )(x, x_proj, *flat_w)
    # TODO(synk): a fused downstream consumer could take the lane-padded [B,T,CPh]
    #             output directly and skip this extra HBM slice pass.
    return out[:, :, :c_out]


# ----------------------------------------------------------------------------
# Pure-JAX reference (mirrors the PyTorch module, weight_norm folded, dropout=id)
# ----------------------------------------------------------------------------
def _ref_causal_conv(x, w, b, d):
    B, T, _ = x.shape
    K = w.shape[0]
    pad = (K - 1) * d
    xp = jnp.pad(x, ((0, 0), (pad, 0), (0, 0)))
    y = jnp.zeros((B, T, w.shape[2]), jnp.float32)
    for k in range(K):
        y = y + jnp.einsum("btc,cd->btd", xp[:, k * d:k * d + T, :], w[k],
                           precision=jax.lax.Precision.HIGHEST)
    return y + b


def _ref_tcn(x, layers):
    h = x
    for lp in layers:
        d = lp["dilation"]
        out = jax.nn.relu(_ref_causal_conv(h, lp["w1"], lp["b1"], d))
        out = jax.nn.relu(_ref_causal_conv(out, lp["w2"], lp["b2"], d))
        res = h if lp["wd"] is None else _ref_causal_conv(h, lp["wd"], lp["bd"], 1)
        h = jax.nn.relu(out + res)
    return h


def _ref_bidirectional_tcn(x, fwd_params, bwd_params, fc_w, fc_b):
    f = _ref_tcn(x, fwd_params)
    b = jnp.flip(_ref_tcn(jnp.flip(x, 1), bwd_params), 1)
    comb = jnp.concatenate([f, b], axis=2)
    return jnp.einsum("btc,cd->btd", comb, fc_w,
                      precision=jax.lax.Precision.HIGHEST) + fc_b


# ----------------------------------------------------------------------------
# Deterministic synthetic parameters (weights ~ N(0, 0.01), like init_weights)
# ----------------------------------------------------------------------------
def init_tcn_params(key, num_inputs, num_channels, kernel_size):
    layers = []
    for i, out_c in enumerate(num_channels):
        in_c = num_inputs if i == 0 else num_channels[i - 1]
        key, k1, k2, k3, k4, k5, k6 = jax.random.split(key, 7)
        layer = {
            "w1": 0.01 * jax.random.normal(k1, (kernel_size, in_c, out_c), jnp.float32),
            "b1": 0.01 * jax.random.normal(k2, (out_c,), jnp.float32),
            "w2": 0.01 * jax.random.normal(k3, (kernel_size, out_c, out_c), jnp.float32),
            "b2": 0.01 * jax.random.normal(k4, (out_c,), jnp.float32),
            "dilation": 2 ** i,
        }
        if in_c != out_c:
            layer["wd"] = 0.01 * jax.random.normal(k5, (1, in_c, out_c), jnp.float32)
            layer["bd"] = 0.01 * jax.random.normal(k6, (out_c,), jnp.float32)
        else:
            layer["wd"] = None
            layer["bd"] = None
        layers.append(layer)
    return layers


if __name__ == "__main__":
    key = jax.random.PRNGKey(0)
    B, T, F = 4, 16, 4
    num_channels = [8, 16]
    kernel_size = 2

    kx, kf, kb, kfc = jax.random.split(key, 4)
    x = jax.random.normal(kx, (B, T, F), jnp.float32)

    fwd_params = init_tcn_params(kf, F, num_channels, kernel_size)
    bwd_params = init_tcn_params(kb, F, num_channels, kernel_size)

    C = num_channels[-1]
    kw, kbias = jax.random.split(kfc)
    # fc_w is stored [2C, C] (transpose of torch.nn.Linear.weight), fc_b is [C].
    fc_w = 0.01 * jax.random.normal(kw, (2 * C, C), jnp.float32)
    fc_b = 0.01 * jax.random.normal(kbias, (C,), jnp.float32)

    out = bidirectional_tcn(x, fwd_params, bwd_params, fc_w, fc_b,
                            kernel_size=kernel_size)
    jax.block_until_ready(out)
    assert out.shape == (B, T, C), out.shape

    ref = _ref_bidirectional_tcn(x, fwd_params, bwd_params, fc_w, fc_b)
    max_err = float(jnp.max(jnp.abs(out - ref)))
    # bf16 weights/activations with f32 accumulation -> slightly looser atol.
    assert jnp.allclose(out, ref, rtol=2e-2, atol=5e-4), f"max|diff|={max_err}"
    print("KERNEL_OK")
</pallas_src>

<mosaic_0001>
module attributes {stable_mosaic.version = 11 : i64} {
  func.func @kernel(%arg0: i32, %arg1: memref<2x16x4xf32, #tpu.memory_space<vmem>>, %arg2: memref<4x128xbf16, #tpu.memory_space<vmem>>, %arg3: memref<128x128xbf16, #tpu.memory_space<vmem>>, %arg4: memref<128x128xbf16, #tpu.memory_space<vmem>>, %arg5: memref<1x128xf32, #tpu.memory_space<vmem>>, %arg6: memref<128x128xbf16, #tpu.memory_space<vmem>>, %arg7: memref<128x128xbf16, #tpu.memory_space<vmem>>, %arg8: memref<1x128xf32, #tpu.memory_space<vmem>>, %arg9: memref<128x128xbf16, #tpu.memory_space<vmem>>, %arg10: memref<1x128xf32, #tpu.memory_space<vmem>>, %arg11: memref<128x128xbf16, #tpu.memory_space<vmem>>, %arg12: memref<128x128xbf16, #tpu.memory_space<vmem>>, %arg13: memref<1x128xf32, #tpu.memory_space<vmem>>, %arg14: memref<128x128xbf16, #tpu.memory_space<vmem>>, %arg15: memref<128x128xbf16, #tpu.memory_space<vmem>>, %arg16: memref<1x128xf32, #tpu.memory_space<vmem>>, %arg17: memref<128x128xbf16, #tpu.memory_space<vmem>>, %arg18: memref<1x128xf32, #tpu.memory_space<vmem>>, %arg19: memref<128x128xbf16, #tpu.memory_space<vmem>>, %arg20: memref<128x128xbf16, #tpu.memory_space<vmem>>, %arg21: memref<1x128xf32, #tpu.memory_space<vmem>>, %arg22: memref<128x128xbf16, #tpu.memory_space<vmem>>, %arg23: memref<128x128xbf16, #tpu.memory_space<vmem>>, %arg24: memref<1x128xf32, #tpu.memory_space<vmem>>, %arg25: memref<128x128xbf16, #tpu.memory_space<vmem>>, %arg26: memref<1x128xf32, #tpu.memory_space<vmem>>, %arg27: memref<128x128xbf16, #tpu.memory_space<vmem>>, %arg28: memref<128x128xbf16, #tpu.memory_space<vmem>>, %arg29: memref<1x128xf32, #tpu.memory_space<vmem>>, %arg30: memref<128x128xbf16, #tpu.memory_space<vmem>>, %arg31: memref<128x128xbf16, #tpu.memory_space<vmem>>, %arg32: memref<1x128xf32, #tpu.memory_space<vmem>>, %arg33: memref<128x128xbf16, #tpu.memory_space<vmem>>, %arg34: memref<1x128xf32, #tpu.memory_space<vmem>>, %arg35: memref<128x128xbf16, #tpu.memory_space<vmem>>, %arg36: memref<128x128xbf16, #tpu.memory_space<vmem>>, %arg37: memref<1x128xf32, #tpu.memory_space<vmem>>, %arg38: memref<2x16x128xf32, #tpu.memory_space<vmem>>, %arg39: memref<2x24x128xbf16, #tpu.memory_space<vmem>>, %arg40: memref<2x24x128xbf16, #tpu.memory_space<vmem>>) attributes {dimension_semantics = [#tpu.dimension_semantics<parallel>], iteration_bounds = array<i64: 2>, scalar_prefetch = 0 : i64, scratch_operands = 2 : i64, tpu.core_type = #tpu.core_type<tc>, window_params = [{transform_indices = @transform_0, window_bounds = array<i64: 2, 16, 4>}, {pipeline_mode = #tpu.pipeline_mode<synchronous>, transform_indices = @transform_1, window_bounds = array<i64: 4, 128>}, {pipeline_mode = #tpu.pipeline_mode<synchronous>, transform_indices = @transform_2, window_bounds = array<i64: 128, 128>}, {pipeline_mode = #tpu.pipeline_mode<synchronous>, transform_indices = @transform_3, window_bounds = array<i64: 128, 128>}, {pipeline_mode = #tpu.pipeline_mode<synchronous>, transform_indices = @transform_4, window_bounds = array<i64: 1, 128>}, {pipeline_mode = #tpu.pipeline_mode<synchronous>, transform_indices = @transform_5, window_bounds = array<i64: 128, 128>}, {pipeline_mode = #tpu.pipeline_mode<synchronous>, transform_indices = @transform_6, window_bounds = array<i64: 128, 128>}, {pipeline_mode = #tpu.pipeline_mode<synchronous>, transform_indices = @transform_7, window_bounds = array<i64: 1, 128>}, {pipeline_mode = #tpu.pipeline_mode<synchronous>, transform_indices = @transform_8, window_bounds = array<i64: 128, 128>}, {pipeline_mode = #tpu.pipeline_mode<synchronous>, transform_indices = @transform_9, window_bounds = array<i64: 1, 128>}, {pipeline_mode = #tpu.pipeline_mode<synchronous>, transform_indices = @transform_10, window_bounds = array<i64: 128, 128>}, {pipeline_mode = #tpu.pipeline_mode<synchronous>, transform_indices = @transform_11, window_bounds = array<i64: 128, 128>}, {pipeline_mode = #tpu.pipeline_mode<synchronous>, transform_indices = @transform_12, window_bounds = array<i64: 1, 128>}, {pipeline_mode = #tpu.pipeline_mode<synchronous>, transform_indices = @transform_13, window_bounds = array<i64: 128, 128>}, {pipeline_mode = #tpu.pipeline_mode<synchronous>, transform_indices = @transform_14, window_bounds = array<i64: 128, 128>}, {pipeline_mode = #tpu.pipeline_mode<synchronous>, transform_indices = @transform_15, window_bounds = array<i64: 1, 128>}, {pipeline_mode = #tpu.pipeline_mode<synchronous>, transform_indices = @transform_16, window_bounds = array<i64: 128, 128>}, {pipeline_mode = #tpu.pipeline_mode<synchronous>, transform_indices = @transform_17, window_bounds = array<i64: 1, 128>}, {pipeline_mode = #tpu.pipeline_mode<synchronous>, transform_indices = @transform_18, window_bounds = array<i64: 128, 128>}, {pipeline_mode = #tpu.pipeline_mode<synchronous>, transform_indices = @transform_19, window_bounds = array<i64: 128, 128>}, {pipeline_mode = #tpu.pipeline_mode<synchronous>, transform_indices = @transform_20, window_bounds = array<i64: 1, 128>}, {pipeline_mode = #tpu.pipeline_mode<synchronous>, transform_indices = @transform_21, window_bounds = array<i64: 128, 128>}, {pipeline_mode = #tpu.pipeline_mode<synchronous>, transform_indices = @transform_22, window_bounds = array<i64: 128, 128>}, {pipeline_mode = #tpu.pipeline_mode<synchronous>, transform_indices = @transform_23, window_bounds = array<i64: 1, 128>}, {pipeline_mode = #tpu.pipeline_mode<synchronous>, transform_indices = @transform_24, window_bounds = array<i64: 128, 128>}, {pipeline_mode = #tpu.pipeline_mode<synchronous>, transform_indices = @transform_25, window_bounds = array<i64: 1, 128>}, {pipeline_mode = #tpu.pipeline_mode<synchronous>, transform_indices = @transform_26, window_bounds = array<i64: 128, 128>}, {pipeline_mode = #tpu.pipeline_mode<synchronous>, transform_indices = @transform_27, window_bounds = array<i64: 128, 128>}, {pipeline_mode = #tpu.pipeline_mode<synchronous>, transform_indices = @transform_28, window_bounds = array<i64: 1, 128>}, {pipeline_mode = #tpu.pipeline_mode<synchronous>, transform_indices = @transform_29, window_bounds = array<i64: 128, 128>}, {pipeline_mode = #tpu.pipeline_mode<synchronous>, transform_indices = @transform_30, window_bounds = array<i64: 128, 128>}, {pipeline_mode = #tpu.pipeline_mode<synchronous>, transform_indices = @transform_31, window_bounds = array<i64: 1, 128>}, {pipeline_mode = #tpu.pipeline_mode<synchronous>, transform_indices = @transform_32, window_bounds = array<i64: 128, 128>}, {pipeline_mode = #tpu.pipeline_mode<synchronous>, transform_indices = @transform_33, window_bounds = array<i64: 1, 128>}, {pipeline_mode = #tpu.pipeline_mode<synchronous>, transform_indices = @transform_34, window_bounds = array<i64: 128, 128>}, {pipeline_mode = #tpu.pipeline_mode<synchronous>, transform_indices = @transform_35, window_bounds = array<i64: 128, 128>}, {pipeline_mode = #tpu.pipeline_mode<synchronous>, transform_indices = @transform_36, window_bounds = array<i64: 1, 128>}, {transform_indices = @transform_37, window_bounds = array<i64: 2, 16, 128>}]} {
    %cst = arith.constant 0.000000e+00 : bf16
    %0 = vector.broadcast %cst : bf16 to vector<2x8x128xbf16>
    %c0 = arith.constant 0 : index
    %c0_0 = arith.constant 0 : index
    %c0_1 = arith.constant 0 : index
    %1 = vector.load %arg39[%c0, %c0_0, %c0_1] : memref<2x24x128xbf16, #tpu.memory_space<vmem>>, vector<2x8x128xbf16>
    tpu.vector_store %arg39[%c0, %c0_0, %c0_1], %0 {strides = array<i32>} : memref<2x24x128xbf16, #tpu.memory_space<vmem>>, vector<2x8x128xbf16>,
    %cst_2 = arith.constant 0.000000e+00 : bf16
    %2 = vector.broadcast %cst_2 : bf16 to vector<2x8x128xbf16>
    %c0_3 = arith.constant 0 : index
    %c16 = arith.constant 16 : index
    %c0_4 = arith.constant 0 : index
    %3 = vector.load %arg40[%c0_3, %c16, %c0_4] : memref<2x24x128xbf16, #tpu.memory_space<vmem>>, vector<2x8x128xbf16>
    tpu.vector_store %arg40[%c0_3, %c16, %c0_4], %2 {strides = array<i32>} : memref<2x24x128xbf16, #tpu.memory_space<vmem>>, vector<2x8x128xbf16>,
    %c0_5 = arith.constant 0 : index
    %c0_6 = arith.constant 0 : index
    %4 = vector.load %arg2[%c0_5, %c0_6] : memref<4x128xbf16, #tpu.memory_space<vmem>>, vector<4x128xbf16>
    %c0_7 = arith.constant 0 : index
    %c0_8 = arith.constant 0 : index
    %c0_9 = arith.constant 0 : index
    %5 = vector.load %arg1[%c0_7, %c0_8, %c0_9] : memref<2x16x4xf32, #tpu.memory_space<vmem>>, vector<1x16x4xf32>
    %6 = vector.shape_cast %5 : vector<1x16x4xf32> to vector<16x4xf32>
    %7 = arith.truncf %6 : vector<16x4xf32> to vector<16x4xbf16>
    %cst_10 = arith.constant dense<0.000000e+00> : vector<16x128xf32>
    %8 = tpu.matmul %7, %4, %cst_10 {dimension_numbers = #tpu.dot_dimension_numbers<[1], [0], [0], [1], [0, 0, 1, 1], [], []>} : vector<16x4xbf16>, vector<4x128xbf16>, vector<16x128xf32> -> vector<16x128xf32>
    %c1 = arith.constant 1 : index
    %c0_11 = arith.constant 0 : index
    %c0_12 = arith.constant 0 : index
    %9 = vector.load %arg1[%c1, %c0_11, %c0_12] : memref<2x16x4xf32, #tpu.memory_space<vmem>>, vector<1x16x4xf32>
    %10 = vector.shape_cast %9 : vector<1x16x4xf32> to vector<16x4xf32>
    %11 = arith.truncf %10 : vector<16x4xf32> to vector<16x4xbf16>
    %cst_13 = arith.constant dense<0.000000e+00> : vector<16x128xf32>
    %12 = tpu.matmul %11, %4, %cst_13 {dimension_numbers = #tpu.dot_dimension_numbers<[1], [0], [0], [1], [0, 0, 1, 1], [], []>} : vector<16x4xbf16>, vector<4x128xbf16>, vector<16x128xf32> -> vector<16x128xf32>
    %13 = tpu.concatenate %8, %12 in 0 : vector<16x128xf32>, vector<16x128xf32> -> vector<32x128xf32>
    %14 = arith.truncf %13 : vector<32x128xf32> to vector<32x128xbf16>
    %15 = vector.shape_cast %14 : vector<32x128xbf16> to vector<2x16x128xbf16>
    %c0_14 = arith.constant 0 : index
    %c8 = arith.constant 8 : index
    %c0_15 = arith.constant 0 : index
    %16 = vector.load %arg39[%c0_14, %c8, %c0_15] : memref<2x24x128xbf16, #tpu.memory_space<vmem>>, vector<2x16x128xbf16>
    tpu.vector_store %arg39[%c0_14, %c8, %c0_15], %15 {strides = array<i32>} : memref<2x24x128xbf16, #tpu.memory_space<vmem>>, vector<2x16x128xbf16>,
    %c0_16 = arith.constant 0 : index
    %c0_17 = arith.constant 0 : index
    %17 = vector.load %arg4[%c0_16, %c0_17] : memref<128x128xbf16, #tpu.memory_space<vmem>>, vector<128x128xbf16>
    %cst_18 = arith.constant dense<0.000000e+00> : vector<32x128xf32>
    %18 = tpu.matmul %14, %17, %cst_18 {dimension_numbers = #tpu.dot_dimension_numbers<[1], [0], [0], [1], [0, 0, 1, 1], [], []>} : vector<32x128xbf16>, vector<128x128xbf16>, vector<32x128xf32> -> vector<32x128xf32>
    %c0_19 = arith.constant 0 : index
    %c7 = arith.constant 7 : index
    %c0_20 = arith.constant 0 : index
    %19 = vector.load %arg39[%c0_19, %c7, %c0_20] : memref<2x24x128xbf16, #tpu.memory_space<vmem>>, vector<2x16x128xbf16>
    %20 = vector.shape_cast %19 : vector<2x16x128xbf16> to vector<32x128xbf16>
    %c0_21 = arith.constant 0 : index
    %c0_22 = arith.constant 0 : index
    %21 = vector.load %arg3[%c0_21, %c0_22] : memref<128x128xbf16, #tpu.memory_space<vmem>>, vector<128x128xbf16>
    %cst_23 = arith.constant dense<0.000000e+00> : vector<32x128xf32>
    %22 = tpu.matmul %20, %21, %cst_23 {dimension_numbers = #tpu.dot_dimension_numbers<[1], [0], [0], [1], [0, 0, 1, 1], [], []>} : vector<32x128xbf16>, vector<128x128xbf16>, vector<32x128xf32> -> vector<32x128xf32>
    %23 = arith.addf %18, %22 : vector<32x128xf32>
    %c0_24 = arith.constant 0 : index
    %c0_25 = arith.constant 0 : index
    %24 = vector.load %arg5[%c0_24, %c0_25] : memref<1x128xf32, #tpu.memory_space<vmem>>, vector<1x128xf32>
    %25 = vector.broadcast %24 : vector<1x128xf32> to vector<32x128xf32>
    %26 = arith.addf %23, %25 : vector<32x128xf32>
    %cst_26 = arith.constant 0.000000e+00 : f32
    %27 = vector.broadcast %cst_26 : f32 to vector<32x128xf32>
    %28 = arith.maximumf %26, %27 : vector<32x128xf32>
    %29 = arith.truncf %28 : vector<32x128xf32> to vector<32x128xbf16>
    %30 = vector.shape_cast %29 : vector<32x128xbf16> to vector<2x16x128xbf16>
    %c0_27 = arith.constant 0 : index
    %c8_28 = arith.constant 8 : index
    %c0_29 = arith.constant 0 : index
    %31 = vector.load %arg39[%c0_27, %c8_28, %c0_29] : memref<2x24x128xbf16, #tpu.memory_space<vmem>>, vector<2x16x128xbf16>
    tpu.vector_store %arg39[%c0_27, %c8_28, %c0_29], %30 {strides = array<i32>} : memref<2x24x128xbf16, #tpu.memory_space<vmem>>, vector<2x16x128xbf16>,
    %c0_30 = arith.constant 0 : index
    %c0_31 = arith.constant 0 : index
    %32 = vector.load %arg7[%c0_30, %c0_31] : memref<128x128xbf16, #tpu.memory_space<vmem>>, vector<128x128xbf16>
    %cst_32 = arith.constant dense<0.000000e+00> : vector<32x128xf32>
    %33 = tpu.matmul %29, %32, %cst_32 {dimension_numbers = #tpu.dot_dimension_numbers<[1], [0], [0], [1], [0, 0, 1, 1], [], []>} : vector<32x128xbf16>, vector<128x128xbf16>, vector<32x128xf32> -> vector<32x128xf32>
    %c0_33 = arith.constant 0 : index
    %c7_34 = arith.constant 7 : index
    %c0_35 = arith.constant 0 : index
    %34 = vector.load %arg39[%c0_33, %c7_34, %c0_35] : memref<2x24x128xbf16, #tpu.memory_space<vmem>>, vector<2x16x128xbf16>
    %35 = vector.shape_cast %34 : vector<2x16x128xbf16> to vector<32x128xbf16>
    %c0_36 = arith.constant 0 : index
    %c0_37 = arith.constant 0 : index
    %36 = vector.load %arg6[%c0_36, %c0_37] : memref<128x128xbf16, #tpu.memory_space<vmem>>, vector<128x128xbf16>
    %cst_38 = arith.constant dense<0.000000e+00> : vector<32x128xf32>
    %37 = tpu.matmul %35, %36, %cst_38 {dimension_numbers = #tpu.dot_dimension_numbers<[1], [0], [0], [1], [0, 0, 1, 1], [], []>} : vector<32x128xbf16>, vector<128x128xbf16>, vector<32x128xf32> -> vector<32x128xf32>
    %38 = arith.addf %33, %37 : vector<32x128xf32>
    %c0_39 = arith.constant 0 : index
    %c0_40 = arith.constant 0 : index
    %39 = vector.load %arg8[%c0_39, %c0_40] : memref<1x128xf32, #tpu.memory_space<vmem>>, vector<1x128xf32>
    %40 = vector.broadcast %39 : vector<1x128xf32> to vector<32x128xf32>
    %41 = arith.addf %38, %40 : vector<32x128xf32>
    %cst_41 = arith.constant 0.000000e+00 : f32
    %42 = vector.broadcast %cst_41 : f32 to vector<32x128xf32>
    %43 = arith.maximumf %41, %42 : vector<32x128xf32>
    %c0_42 = arith.constant 0 : index
    %c0_43 = arith.constant 0 : index
    %44 = vector.load %arg9[%c0_42, %c0_43] : memref<128x128xbf16, #tpu.memory_space<vmem>>, vector<128x128xbf16>
    %cst_44 = arith.constant dense<0.000000e+00> : vector<32x128xf32>
    %45 = tpu.matmul %14, %44, %cst_44 {dimension_numbers = #tpu.dot_dimension_numbers<[1], [0], [0], [1], [0, 0, 1, 1], [], []>} : vector<32x128xbf16>, vector<128x128xbf16>, vector<32x128xf32> -> vector<32x128xf32>
    %c0_45 = arith.constant 0 : index
    %c0_46 = arith.constant 0 : index
    %46 = vector.load %arg10[%c0_45, %c0_46] : memref<1x128xf32, #tpu.memory_space<vmem>>, vector<1x128xf32>
    %47 = vector.broadcast %46 : vector<1x128xf32> to vector<32x128xf32>
    %48 = arith.addf %45, %47 : vector<32x128xf32>
    %49 = arith.addf %43, %48 : vector<32x128xf32>
    %cst_47 = arith.constant 0.000000e+00 : f32
    %50 = vector.broadcast %cst_47 : f32 to vector<32x128xf32>
    %51 = arith.maximumf %49, %50 : vector<32x128xf32>
    %52 = arith.truncf %51 : vector<32x128xf32> to vector<32x128xbf16>
    %53 = vector.shape_cast %52 : vector<32x128xbf16> to vector<2x16x128xbf16>
    %c0_48 = arith.constant 0 : index
    %c8_49 = arith.constant 8 : index
    %c0_50 = arith.constant 0 : index
    %54 = vector.load %arg39[%c0_48, %c8_49, %c0_50] : memref<2x24x128xbf16, #tpu.memory_space<vmem>>, vector<2x16x128xbf16>
    tpu.vector_store %arg39[%c0_48, %c8_49, %c0_50], %53 {strides = array<i32>} : memref<2x24x128xbf16, #tpu.memory_space<vmem>>, vector<2x16x128xbf16>,
    %c0_51 = arith.constant 0 : index
    %c0_52 = arith.constant 0 : index
    %55 = vector.load %arg12[%c0_51, %c0_52] : memref<128x128xbf16, #tpu.memory_space<vmem>>, vector<128x128xbf16>
    %cst_53 = arith.constant dense<0.000000e+00> : vector<32x128xf32>
    %56 = tpu.matmul %52, %55, %cst_53 {dimension_numbers = #tpu.dot_dimension_numbers<[1], [0], [0], [1], [0, 0, 1, 1], [], []>} : vector<32x128xbf16>, vector<128x128xbf16>, vector<32x128xf32> -> vector<32x128xf32>
    %c0_54 = arith.constant 0 : index
    %c6 = arith.constant 6 : index
    %c0_55 = arith.constant 0 : index
    %57 = vector.load %arg39[%c0_54, %c6, %c0_55] : memref<2x24x128xbf16, #tpu.memory_space<vmem>>, vector<2x16x128xbf16>
    %58 = vector.shape_cast %57 : vector<2x16x128xbf16> to vector<32x128xbf16>
    %c0_56 = arith.constant 0 : index
    %c0_57 = arith.constant 0 : index
    %59 = vector.load %arg11[%c0_56, %c0_57] : memref<128x128xbf16, #tpu.memory_space<vmem>>, vector<128x128xbf16>
    %cst_58 = arith.constant dense<0.000000e+00> : vector<32x128xf32>
    %60 = tpu.matmul %58, %59, %cst_58 {dimension_numbers = #tpu.dot_dimension_numbers<[1], [0], [0], [1], [0, 0, 1, 1], [], []>} : vector<32x128xbf16>, vector<128x128xbf16>, vector<32x128xf32> -> vector<32x128xf32>
    %61 = arith.addf %56, %60 : vector<32x128xf32>
    %c0_59 = arith.constant 0 : index
    %c0_60 = arith.constant 0 : index
    %62 = vector.load %arg13[%c0_59, %c0_60] : memref<1x128xf32, #tpu.memory_space<vmem>>, vector<1x128xf32>
    %63 = vector.broadcast %62 : vector<1x128xf32> to vector<32x128xf32>
    %64 = arith.addf %61, %63 : vector<32x128xf32>
    %cst_61 = arith.constant 0.000000e+00 : f32
    %65 = vector.broadcast %cst_61 : f32 to vector<32x128xf32>
    %66 = arith.maximumf %64, %65 : vector<32x128xf32>
    %67 = arith.truncf %66 : vector<32x128xf32> to vector<32x128xbf16>
    %68 = vector.shape_cast %67 : vector<32x128xbf16> to vector<2x16x128xbf16>
    %c0_62 = arith.constant 0 : index
    %c8_63 = arith.constant 8 : index
    %c0_64 = arith.constant 0 : index
    %69 = vector.load %arg39[%c0_62, %c8_63, %c0_64] : memref<2x24x128xbf16, #tpu.memory_space<vmem>>, vector<2x16x128xbf16>
    tpu.vector_store %arg39[%c0_62, %c8_63, %c0_64], %68 {strides = array<i32>} : memref<2x24x128xbf16, #tpu.memory_space<vmem>>, vector<2x16x128xbf16>,
    %c0_65 = arith.constant 0 : index
    %c0_66 = arith.constant 0 : index
    %70 = vector.load %arg15[%c0_65, %c0_66] : memref<128x128xbf16, #tpu.memory_space<vmem>>, vector<128x128xbf16>
    %cst_67 = arith.constant dense<0.000000e+00> : vector<32x128xf32>
    %71 = tpu.matmul %67, %70, %cst_67 {dimension_numbers = #tpu.dot_dimension_numbers<[1], [0], [0], [1], [0, 0, 1, 1], [], []>} : vector<32x128xbf16>, vector<128x128xbf16>, vector<32x128xf32> -> vector<32x128xf32>
    %c0_68 = arith.constant 0 : index
    %c6_69 = arith.constant 6 : index
    %c0_70 = arith.constant 0 : index
    %72 = vector.load %arg39[%c0_68, %c6_69, %c0_70] : memref<2x24x128xbf16, #tpu.memory_space<vmem>>, vector<2x16x128xbf16>
    %73 = vector.shape_cast %72 : vector<2x16x128xbf16> to vector<32x128xbf16>
    %c0_71 = arith.constant 0 : index
    %c0_72 = arith.constant 0 : index
    %74 = vector.load %arg14[%c0_71, %c0_72] : memref<128x128xbf16, #tpu.memory_space<vmem>>, vector<128x128xbf16>
    %cst_73 = arith.constant dense<0.000000e+00> : vector<32x128xf32>
    %75 = tpu.matmul %73, %74, %cst_73 {dimension_numbers = #tpu.dot_dimension_numbers<[1], [0], [0], [1], [0, 0, 1, 1], [], []>} : vector<32x128xbf16>, vector<128x128xbf16>, vector<32x128xf32> -> vector<32x128xf32>
    %76 = arith.addf %71, %75 : vector<32x128xf32>
    %c0_74 = arith.constant 0 : index
    %c0_75 = arith.constant 0 : index
    %77 = vector.load %arg16[%c0_74, %c0_75] : memref<1x128xf32, #tpu.memory_space<vmem>>, vector<1x128xf32>
    %78 = vector.broadcast %77 : vector<1x128xf32> to vector<32x128xf32>
    %79 = arith.addf %76, %78 : vector<32x128xf32>
    %cst_76 = arith.constant 0.000000e+00 : f32
    %80 = vector.broadcast %cst_76 : f32 to vector<32x128xf32>
    %81 = arith.maximumf %79, %80 : vector<32x128xf32>
    %c0_77 = arith.constant 0 : index
    %c0_78 = arith.constant 0 : index
    %82 = vector.load %arg17[%c0_77, %c0_78] : memref<128x128xbf16, #tpu.memory_space<vmem>>, vector<128x128xbf16>
    %cst_79 = arith.constant dense<0.000000e+00> : vector<32x128xf32>
    %83 = tpu.matmul %52, %82, %cst_79 {dimension_numbers = #tpu.dot_dimension_numbers<[1], [0], [0], [1], [0, 0, 1, 1], [], []>} : vector<32x128xbf16>, vector<128x128xbf16>, vector<32x128xf32> -> vector<32x128xf32>
    %c0_80 = arith.constant 0 : index
    %c0_81 = arith.constant 0 : index
    %84 = vector.load %arg18[%c0_80, %c0_81] : memref<1x128xf32, #tpu.memory_space<vmem>>, vector<1x128xf32>
    %85 = vector.broadcast %84 : vector<1x128xf32> to vector<32x128xf32>
    %86 = arith.addf %83, %85 : vector<32x128xf32>
    %87 = arith.addf %81, %86 : vector<32x128xf32>
    %cst_82 = arith.constant 0.000000e+00 : f32
    %88 = vector.broadcast %cst_82 : f32 to vector<32x128xf32>
    %89 = arith.maximumf %87, %88 : vector<32x128xf32>
    %90 = arith.truncf %89 : vector<32x128xf32> to vector<32x128xbf16>
    %91 = vector.shape_cast %14 : vector<32x128xbf16> to vector<2x16x128xbf16>
    %c0_83 = arith.constant 0 : index
    %c0_84 = arith.constant 0 : index
    %c0_85 = arith.constant 0 : index
    %92 = vector.load %arg40[%c0_83, %c0_84, %c0_85] : memref<2x24x128xbf16, #tpu.memory_space<vmem>>, vector<2x16x128xbf16>
    tpu.vector_store %arg40[%c0_83, %c0_84, %c0_85], %91 {strides = array<i32>} : memref<2x24x128xbf16, #tpu.memory_space<vmem>>, vector<2x16x128xbf16>,
    %c0_86 = arith.constant 0 : index
    %c0_87 = arith.constant 0 : index
    %93 = vector.load %arg20[%c0_86, %c0_87] : memref<128x128xbf16, #tpu.memory_space<vmem>>, vector<128x128xbf16>
    %cst_88 = arith.constant dense<0.000000e+00> : vector<32x128xf32>
    %94 = tpu.matmul %14, %93, %cst_88 {dimension_numbers = #tpu.dot_dimension_numbers<[1], [0], [0], [1], [0, 0, 1, 1], [], []>} : vector<32x128xbf16>, vector<128x128xbf16>, vector<32x128xf32> -> vector<32x128xf32>
    %c0_89 = arith.constant 0 : index
    %c1_90 = arith.constant 1 : index
    %c0_91 = arith.constant 0 : index
    %95 = vector.load %arg40[%c0_89, %c1_90, %c0_91] : memref<2x24x128xbf16, #tpu.memory_space<vmem>>, vector<2x16x128xbf16>
    %96 = vector.shape_cast %95 : vector<2x16x128xbf16> to vector<32x128xbf16>
    %c0_92 = arith.constant 0 : index
    %c0_93 = arith.constant 0 : index
    %97 = vector.load %arg19[%c0_92, %c0_93] : memref<128x128xbf16, #tpu.memory_space<vmem>>, vector<128x128xbf16>
    %cst_94 = arith.constant dense<0.000000e+00> : vector<32x128xf32>
    %98 = tpu.matmul %96, %97, %cst_94 {dimension_numbers = #tpu.dot_dimension_numbers<[1], [0], [0], [1], [0, 0, 1, 1], [], []>} : vector<32x128xbf16>, vector<128x128xbf16>, vector<32x128xf32> -> vector<32x128xf32>
    %99 = arith.addf %94, %98 : vector<32x128xf32>
    %c0_95 = arith.constant 0 : index
    %c0_96 = arith.constant 0 : index
    %100 = vector.load %arg21[%c0_95, %c0_96] : memref<1x128xf32, #tpu.memory_space<vmem>>, vector<1x128xf32>
    %101 = vector.broadcast %100 : vector<1x128xf32> to vector<32x128xf32>
    %102 = arith.addf %99, %101 : vector<32x128xf32>
    %cst_97 = arith.constant 0.000000e+00 : f32
    %103 = vector.broadcast %cst_97 : f32 to vector<32x128xf32>
    %104 = arith.maximumf %102, %103 : vector<32x128xf32>
    %105 = arith.truncf %104 : vector<32x128xf32> to vector<32x128xbf16>
    %106 = vector.shape_cast %105 : vector<32x128xbf16> to vector<2x16x128xbf16>
    %c0_98 = arith.constant 0 : index
    %c0_99 = arith.constant 0 : index
    %c0_100 = arith.constant 0 : index
    %107 = vector.load %arg40[%c0_98, %c0_99, %c0_100] : memref<2x24x128xbf16, #tpu.memory_space<vmem>>, vector<2x16x128xbf16>
    tpu.vector_store %arg40[%c0_98, %c0_99, %c0_100], %106 {strides = array<i32>} : memref<2x24x128xbf16, #tpu.memory_space<vmem>>, vector<2x16x128xbf16>,
    %c0_101 = arith.constant 0 : index
    %c0_102 = arith.constant 0 : index
    %108 = vector.load %arg23[%c0_101, %c0_102] : memref<128x128xbf16, #tpu.memory_space<vmem>>, vector<128x128xbf16>
    %cst_103 = arith.constant dense<0.000000e+00> : vector<32x128xf32>
    %109 = tpu.matmul %105, %108, %cst_103 {dimension_numbers = #tpu.dot_dimension_numbers<[1], [0], [0], [1], [0, 0, 1, 1], [], []>} : vector<32x128xbf16>, vector<128x128xbf16>, vector<32x128xf32> -> vector<32x128xf32>
    %c0_104 = arith.constant 0 : index
    %c1_105 = arith.constant 1 : index
    %c0_106 = arith.constant 0 : index
    %110 = vector.load %arg40[%c0_104, %c1_105, %c0_106] : memref<2x24x128xbf16, #tpu.memory_space<vmem>>, vector<2x16x128xbf16>
    %111 = vector.shape_cast %110 : vector<2x16x128xbf16> to vector<32x128xbf16>
    %c0_107 = arith.constant 0 : index
    %c0_108 = arith.constant 0 : index
    %112 = vector.load %arg22[%c0_107, %c0_108] : memref<128x128xbf16, #tpu.memory_space<vmem>>, vector<128x128xbf16>
    %cst_109 = arith.constant dense<0.000000e+00> : vector<32x128xf32>
    %113 = tpu.matmul %111, %112, %cst_109 {dimension_numbers = #tpu.dot_dimension_numbers<[1], [0], [0], [1], [0, 0, 1, 1], [], []>} : vector<32x128xbf16>, vector<128x128xbf16>, vector<32x128xf32> -> vector<32x128xf32>
    %114 = arith.addf %109, %113 : vector<32x128xf32>
    %c0_110 = arith.constant 0 : index
    %c0_111 = arith.constant 0 : index
    %115 = vector.load %arg24[%c0_110, %c0_111] : memref<1x128xf32, #tpu.memory_space<vmem>>, vector<1x128xf32>
    %116 = vector.broadcast %115 : vector<1x128xf32> to vector<32x128xf32>
    %117 = arith.addf %114, %116 : vector<32x128xf32>
    %cst_112 = arith.constant 0.000000e+00 : f32
    %118 = vector.broadcast %cst_112 : f32 to vector<32x128xf32>
    %119 = arith.maximumf %117, %118 : vector<32x128xf32>
    %c0_113 = arith.constant 0 : index
    %c0_114 = arith.constant 0 : index
    %120 = vector.load %arg25[%c0_113, %c0_114] : memref<128x128xbf16, #tpu.memory_space<vmem>>, vector<128x128xbf16>
    %cst_115 = arith.constant dense<0.000000e+00> : vector<32x128xf32>
    %121 = tpu.matmul %14, %120, %cst_115 {dimension_numbers = #tpu.dot_dimension_numbers<[1], [0], [0], [1], [0, 0, 1, 1], [], []>} : vector<32x128xbf16>, vector<128x128xbf16>, vector<32x128xf32> -> vector<32x128xf32>
    %c0_116 = arith.constant 0 : index
    %c0_117 = arith.constant 0 : index
    %122 = vector.load %arg26[%c0_116, %c0_117] : memref<1x128xf32, #tpu.memory_space<vmem>>, vector<1x128xf32>
    %123 = vector.broadcast %122 : vector<1x128xf32> to vector<32x128xf32>
    %124 = arith.addf %121, %123 : vector<32x128xf32>
    %125 = arith.addf %119, %124 : vector<32x128xf32>
    %cst_118 = arith.constant 0.000000e+00 : f32
    %126 = vector.broadcast %cst_118 : f32 to vector<32x128xf32>
    %127 = arith.maximumf %125, %126 : vector<32x128xf32>
    %128 = arith.truncf %127 : vector<32x128xf32> to vector<32x128xbf16>
    %129 = vector.shape_cast %128 : vector<32x128xbf16> to vector<2x16x128xbf16>
    %c0_119 = arith.constant 0 : index
    %c0_120 = arith.constant 0 : index
    %c0_121 = arith.constant 0 : index
    %130 = vector.load %arg40[%c0_119, %c0_120, %c0_121] : memref<2x24x128xbf16, #tpu.memory_space<vmem>>, vector<2x16x128xbf16>
    tpu.vector_store %arg40[%c0_119, %c0_120, %c0_121], %129 {strides = array<i32>} : memref<2x24x128xbf16, #tpu.memory_space<vmem>>, vector<2x16x128xbf16>,
    %c0_122 = arith.constant 0 : index
    %c0_123 = arith.constant 0 : index
    %131 = vector.load %arg28[%c0_122, %c0_123] : memref<128x128xbf16, #tpu.memory_space<vmem>>, vector<128x128xbf16>
    %cst_124 = arith.constant dense<0.000000e+00> : vector<32x128xf32>
    %132 = tpu.matmul %128, %131, %cst_124 {dimension_numbers = #tpu.dot_dimension_numbers<[1], [0], [0], [1], [0, 0, 1, 1], [], []>} : vector<32x128xbf16>, vector<128x128xbf16>, vector<32x128xf32> -> vector<32x128xf32>
    %c0_125 = arith.constant 0 : index
    %c2 = arith.constant 2 : index
    %c0_126 = arith.constant 0 : index
    %133 = vector.load %arg40[%c0_125, %c2, %c0_126] : memref<2x24x128xbf16, #tpu.memory_space<vmem>>, vector<2x16x128xbf16>
    %134 = vector.shape_cast %133 : vector<2x16x128xbf16> to vector<32x128xbf16>
    %c0_127 = arith.constant 0 : index
    %c0_128 = arith.constant 0 : index
    %135 = vector.load %arg27[%c0_127, %c0_128] : memref<128x128xbf16, #tpu.memory_space<vmem>>, vector<128x128xbf16>
    %cst_129 = arith.constant dense<0.000000e+00> : vector<32x128xf32>
    %136 = tpu.matmul %134, %135, %cst_129 {dimension_numbers = #tpu.dot_dimension_numbers<[1], [0], [0], [1], [0, 0, 1, 1], [], []>} : vector<32x128xbf16>, vector<128x128xbf16>, vector<32x128xf32> -> vector<32x128xf32>
    %137 = arith.addf %132, %136 : vector<32x128xf32>
    %c0_130 = arith.constant 0 : index
    %c0_131 = arith.constant 0 : index
    %138 = vector.load %arg29[%c0_130, %c0_131] : memref<1x128xf32, #tpu.memory_space<vmem>>, vector<1x128xf32>
    %139 = vector.broadcast %138 : vector<1x128xf32> to vector<32x128xf32>
    %140 = arith.addf %137, %139 : vector<32x128xf32>
    %cst_132 = arith.constant 0.000000e+00 : f32
    %141 = vector.broadcast %cst_132 : f32 to vector<32x128xf32>
    %142 = arith.maximumf %140, %141 : vector<32x128xf32>
    %143 = arith.truncf %142 : vector<32x128xf32> to vector<32x128xbf16>
    %144 = vector.shape_cast %143 : vector<32x128xbf16> to vector<2x16x128xbf16>
    %c0_133 = arith.constant 0 : index
    %c0_134 = arith.constant 0 : index
    %c0_135 = arith.constant 0 : index
    %145 = vector.load %arg40[%c0_133, %c0_134, %c0_135] : memref<2x24x128xbf16, #tpu.memory_space<vmem>>, vector<2x16x128xbf16>
    tpu.vector_store %arg40[%c0_133, %c0_134, %c0_135], %144 {strides = array<i32>} : memref<2x24x128xbf16, #tpu.memory_space<vmem>>, vector<2x16x128xbf16>,
    %c0_136 = arith.constant 0 : index
    %c0_137 = arith.constant 0 : index
    %146 = vector.load %arg31[%c0_136, %c0_137] : memref<128x128xbf16, #tpu.memory_space<vmem>>, vector<128x128xbf16>
    %cst_138 = arith.constant dense<0.000000e+00> : vector<32x128xf32>
    %147 = tpu.matmul %143, %146, %cst_138 {dimension_numbers = #tpu.dot_dimension_numbers<[1], [0], [0], [1], [0, 0, 1, 1], [], []>} : vector<32x128xbf16>, vector<128x128xbf16>, vector<32x128xf32> -> vector<32x128xf32>
    %c0_139 = arith.constant 0 : index
    %c2_140 = arith.constant 2 : index
    %c0_141 = arith.constant 0 : index
    %148 = vector.load %arg40[%c0_139, %c2_140, %c0_141] : memref<2x24x128xbf16, #tpu.memory_space<vmem>>, vector<2x16x128xbf16>
    %149 = vector.shape_cast %148 : vector<2x16x128xbf16> to vector<32x128xbf16>
    %c0_142 = arith.constant 0 : index
    %c0_143 = arith.constant 0 : index
    %150 = vector.load %arg30[%c0_142, %c0_143] : memref<128x128xbf16, #tpu.memory_space<vmem>>, vector<128x128xbf16>
    %cst_144 = arith.constant dense<0.000000e+00> : vector<32x128xf32>
    %151 = tpu.matmul %149, %150, %cst_144 {dimension_numbers = #tpu.dot_dimension_numbers<[1], [0], [0], [1], [0, 0, 1, 1], [], []>} : vector<32x128xbf16>, vector<128x128xbf16>, vector<32x128xf32> -> vector<32x128xf32>
    %152 = arith.addf %147, %151 : vector<32x128xf32>
    %c0_145 = arith.constant 0 : index
    %c0_146 = arith.constant 0 : index
    %153 = vector.load %arg32[%c0_145, %c0_146] : memref<1x128xf32, #tpu.memory_space<vmem>>, vector<1x128xf32>
    %154 = vector.broadcast %153 : vector<1x128xf32> to vector<32x128xf32>
    %155 = arith.addf %152, %154 : vector<32x128xf32>
    %cst_147 = arith.constant 0.000000e+00 : f32
    %156 = vector.broadcast %cst_147 : f32 to vector<32x128xf32>
    %157 = arith.maximumf %155, %156 : vector<32x128xf32>
    %c0_148 = arith.constant 0 : index
    %c0_149 = arith.constant 0 : index
    %158 = vector.load %arg33[%c0_148, %c0_149] : memref<128x128xbf16, #tpu.memory_space<vmem>>, vector<128x128xbf16>
    %cst_150 = arith.constant dense<0.000000e+00> : vector<32x128xf32>
    %159 = tpu.matmul %128, %158, %cst_150 {dimension_numbers = #tpu.dot_dimension_numbers<[1], [0], [0], [1], [0, 0, 1, 1], [], []>} : vector<32x128xbf16>, vector<128x128xbf16>, vector<32x128xf32> -> vector<32x128xf32>
    %c0_151 = arith.constant 0 : index
    %c0_152 = arith.constant 0 : index
    %160 = vector.load %arg34[%c0_151, %c0_152] : memref<1x128xf32, #tpu.memory_space<vmem>>, vector<1x128xf32>
    %161 = vector.broadcast %160 : vector<1x128xf32> to vector<32x128xf32>
    %162 = arith.addf %159, %161 : vector<32x128xf32>
    %163 = arith.addf %157, %162 : vector<32x128xf32>
    %cst_153 = arith.constant 0.000000e+00 : f32
    %164 = vector.broadcast %cst_153 : f32 to vector<32x128xf32>
    %165 = arith.maximumf %163, %164 : vector<32x128xf32>
    %166 = arith.truncf %165 : vector<32x128xf32> to vector<32x128xbf16>
    %c0_154 = arith.constant 0 : index
    %c0_155 = arith.constant 0 : index
    %167 = vector.load %arg35[%c0_154, %c0_155] : memref<128x128xbf16, #tpu.memory_space<vmem>>, vector<128x128xbf16>
    %cst_156 = arith.constant dense<0.000000e+00> : vector<32x128xf32>
    %168 = tpu.matmul %90, %167, %cst_156 {dimension_numbers = #tpu.dot_dimension_numbers<[1], [0], [0], [1], [0, 0, 1, 1], [], []>} : vector<32x128xbf16>, vector<128x128xbf16>, vector<32x128xf32> -> vector<32x128xf32>
    %c0_157 = arith.constant 0 : index
    %c0_158 = arith.constant 0 : index
    %169 = vector.load %arg36[%c0_157, %c0_158] : memref<128x128xbf16, #tpu.memory_space<vmem>>, vector<128x128xbf16>
    %cst_159 = arith.constant dense<0.000000e+00> : vector<32x128xf32>
    %170 = tpu.matmul %166, %169, %cst_159 {dimension_numbers = #tpu.dot_dimension_numbers<[1], [0], [0], [1], [0, 0, 1, 1], [], []>} : vector<32x128xbf16>, vector<128x128xbf16>, vector<32x128xf32> -> vector<32x128xf32>
    %171 = arith.addf %168, %170 : vector<32x128xf32>
    %c0_160 = arith.constant 0 : index
    %c0_161 = arith.constant 0 : index
    %172 = vector.load %arg37[%c0_160, %c0_161] : memref<1x128xf32, #tpu.memory_space<vmem>>, vector<1x128xf32>
    %173 = vector.broadcast %172 : vector<1x128xf32> to vector<32x128xf32>
    %174 = arith.addf %171, %173 : vector<32x128xf32>
    %175 = vector.extract_strided_slice %174 {offsets = [0, 0], sizes = [16, 128], strides = [1, 1]} : vector<32x128xf32> to vector<16x128xf32>
    %c0_162 = arith.constant 0 : index
    %c0_163 = arith.constant 0 : index
    %c0_164 = arith.constant 0 : index
    %176 = vector.load %arg38[%c0_162, %c0_163, %c0_164] : memref<2x16x128xf32, #tpu.memory_space<vmem>>, vector<1x16x128xf32>
    %177 = vector.shape_cast %176 : vector<1x16x128xf32> to vector<16x128xf32>
    %178 = vector.shape_cast %175 : vector<16x128xf32> to vector<1x16x128xf32>
    tpu.vector_store %arg38[%c0_162, %c0_163, %c0_164], %178 {strides = array<i32>} : memref<2x16x128xf32, #tpu.memory_space<vmem>>, vector<1x16x128xf32>,
    %179 = vector.extract_strided_slice %174 {offsets = [16, 0], sizes = [16, 128], strides = [1, 1]} : vector<32x128xf32> to vector<16x128xf32>
    %c1_165 = arith.constant 1 : index
    %c0_166 = arith.constant 0 : index
    %c0_167 = arith.constant 0 : index
    %180 = vector.load %arg38[%c1_165, %c0_166, %c0_167] : memref<2x16x128xf32, #tpu.memory_space<vmem>>, vector<1x16x128xf32>
    %181 = vector.shape_cast %180 : vector<1x16x128xf32> to vector<16x128xf32>
    %182 = vector.shape_cast %179 : vector<16x128xf32> to vector<1x16x128xf32>
    tpu.vector_store %arg38[%c1_165, %c0_166, %c0_167], %182 {strides = array<i32>} : memref<2x16x128xf32, #tpu.memory_space<vmem>>, vector<1x16x128xf32>,
    return
  }
  func.func @transform_0(%arg0: i32) -> (i32, i32, i32) {
    %c0_i32 = arith.constant 0 : i32
    %c0_i32_0 = arith.constant 0 : i32
    %c0_i32_1 = arith.constant 0 : i32
    return %arg0, %c0_i32, %c0_i32_0 : i32, i32, i32
  }
  func.func @transform_1(%arg0: i32) -> (i32, i32) {
    %c0_i32 = arith.constant 0 : i32
    %c0_i32_0 = arith.constant 0 : i32
    %c0_i32_1 = arith.constant 0 : i32
    return %c0_i32, %c0_i32_0 : i32, i32
  }
  func.func @transform_2(%arg0: i32) -> (i32, i32) {
    %c0_i32 = arith.constant 0 : i32
    %c0_i32_0 = arith.constant 0 : i32
    %c0_i32_1 = arith.constant 0 : i32
    return %c0_i32, %c0_i32_0 : i32, i32
  }
  func.func @transform_3(%arg0: i32) -> (i32, i32) {
    %c0_i32 = arith.constant 0 : i32
    %c0_i32_0 = arith.constant 0 : i32
    %c0_i32_1 = arith.constant 0 : i32
    return %c0_i32, %c0_i32_0 : i32, i32
  }
  func.func @transform_4(%arg0: i32) -> (i32, i32) {
    %c0_i32 = arith.constant 0 : i32
    %c0_i32_0 = arith.constant 0 : i32
    %c0_i32_1 = arith.constant 0 : i32
    return %c0_i32, %c0_i32_0 : i32, i32
  }
  func.func @transform_5(%arg0: i32) -> (i32, i32) {
    %c0_i32 = arith.constant 0 : i32
    %c0_i32_0 = arith.constant 0 : i32
    %c0_i32_1 = arith.constant 0 : i32
    return %c0_i32, %c0_i32_0 : i32, i32
  }
  func.func @transform_6(%arg0: i32) -> (i32, i32) {
    %c0_i32 = arith.constant 0 : i32
    %c0_i32_0 = arith.constant 0 : i32
    %c0_i32_1 = arith.constant 0 : i32
    return %c0_i32, %c0_i32_0 : i32, i32
  }
  func.func @transform_7(%arg0: i32) -> (i32, i32) {
    %c0_i32 = arith.constant 0 : i32
    %c0_i32_0 = arith.constant 0 : i32
    %c0_i32_1 = arith.constant 0 : i32
    return %c0_i32, %c0_i32_0 : i32, i32
  }
  func.func @transform_8(%arg0: i32) -> (i32, i32) {
    %c0_i32 = arith.constant 0 : i32
    %c0_i32_0 = arith.constant 0 : i32
    %c0_i32_1 = arith.constant 0 : i32
    return %c0_i32, %c0_i32_0 : i32, i32
  }
  func.func @transform_9(%arg0: i32) -> (i32, i32) {
    %c0_i32 = arith.constant 0 : i32
    %c0_i32_0 = arith.constant 0 : i32
    %c0_i32_1 = arith.constant 0 : i32
    return %c0_i32, %c0_i32_0 : i32, i32
  }
  func.func @transform_10(%arg0: i32) -> (i32, i32) {
    %c0_i32 = arith.constant 0 : i32
    %c0_i32_0 = arith.constant 0 : i32
    %c0_i32_1 = arith.constant 0 : i32
    return %c0_i32, %c0_i32_0 : i32, i32
  }
  func.func @transform_11(%arg0: i32) -> (i32, i32) {
    %c0_i32 = arith.constant 0 : i32
    %c0_i32_0 = arith.constant 0 : i32
    %c0_i32_1 = arith.constant 0 : i32
    return %c0_i32, %c0_i32_0 : i32, i32
  }
  func.func @transform_12(%arg0: i32) -> (i32, i32) {
    %c0_i32 = arith.constant 0 : i32
    %c0_i32_0 = arith.constant 0 : i32
    %c0_i32_1 = arith.constant 0 : i32
    return %c0_i32, %c0_i32_0 : i32, i32
  }
  func.func @transform_13(%arg0: i32) -> (i32, i32) {
    %c0_i32 = arith.constant 0 : i32
    %c0_i32_0 = arith.constant 0 : i32
    %c0_i32_1 = arith.constant 0 : i32
    return %c0_i32, %c0_i32_0 : i32, i32
  }
  func.func @transform_14(%arg0: i32) -> (i32, i32) {
    %c0_i32 = arith.constant 0 : i32
    %c0_i32_0 = arith.constant 0 : i32
    %c0_i32_1 = arith.constant 0 : i32
    return %c0_i32, %c0_i32_0 : i32, i32
  }
  func.func @transform_15(%arg0: i32) -> (i32, i32) {
    %c0_i32 = arith.constant 0 : i32
    %c0_i32_0 = arith.constant 0 : i32
    %c0_i32_1 = arith.constant 0 : i32
    return %c0_i32, %c0_i32_0 : i32, i32
  }
  func.func @transform_16(%arg0: i32) -> (i32, i32) {
    %c0_i32 = arith.constant 0 : i32
    %c0_i32_0 = arith.constant 0 : i32
    %c0_i32_1 = arith.constant 0 : i32
    return %c0_i32, %c0_i32_0 : i32, i32
  }
  func.func @transform_17(%arg0: i32) -> (i32, i32) {
    %c0_i32 = arith.constant 0 : i32
    %c0_i32_0 = arith.constant 0 : i32
    %c0_i32_1 = arith.constant 0 : i32
    return %c0_i32, %c0_i32_0 : i32, i32
  }
  func.func @transform_18(%arg0: i32) -> (i32, i32) {
    %c0_i32 = arith.constant 0 : i32
    %c0_i32_0 = arith.constant 0 : i32
    %c0_i32_1 = arith.constant 0 : i32
    return %c0_i32, %c0_i32_0 : i32, i32
  }
  func.func @transform_19(%arg0: i32) -> (i32, i32) {
    %c0_i32 = arith.constant 0 : i32
    %c0_i32_0 = arith.constant 0 : i32
    %c0_i32_1 = arith.constant 0 : i32
    return %c0_i32, %c0_i32_0 : i32, i32
  }
  func.func @transform_20(%arg0: i32) -> (i32, i32) {
    %c0_i32 = arith.constant 0 : i32
    %c0_i32_0 = arith.constant 0 : i32
    %c0_i32_1 = arith.constant 0 : i32
    return %c0_i32, %c0_i32_0 : i32, i32
  }
  func.func @transform_21(%arg0: i32) -> (i32, i32) {
    %c0_i32 = arith.constant 0 : i32
    %c0_i32_0 = arith.constant 0 : i32
    %c0_i32_1 = arith.constant 0 : i32
    return %c0_i32, %c0_i32_0 : i32, i32
  }
  func.func @transform_22(%arg0: i32) -> (i32, i32) {
    %c0_i32 = arith.constant 0 : i32
    %c0_i32_0 = arith.constant 0 : i32
    %c0_i32_1 = arith.constant 0 : i32
    return %c0_i32, %c0_i32_0 : i32, i32
  }
  func.func @transform_23(%arg0: i32) -> (i32, i32) {
    %c0_i32 = arith.constant 0 : i32
    %c0_i32_0 = arith.constant 0 : i32
    %c0_i32_1 = arith.constant 0 : i32
    return %c0_i32, %c0_i32_0 : i32, i32
  }
  func.func @transform_24(%arg0: i32) -> (i32, i32) {
    %c0_i32 = arith.constant 0 : i32
    %c0_i32_0 = arith.constant 0 : i32
    %c0_i32_1 = arith.constant 0 : i32
    return %c0_i32, %c0_i32_0 : i32, i32
  }
  func.func @transform_25(%arg0: i32) -> (i32, i32) {
    %c0_i32 = arith.constant 0 : i32
    %c0_i32_0 = arith.constant 0 : i32
    %c0_i32_1 = arith.constant 0 : i32
    return %c0_i32, %c0_i32_0 : i32, i32
  }
  func.func @transform_26(%arg0: i32) -> (i32, i32) {
    %c0_i32 = arith.constant 0 : i32
    %c0_i32_0 = arith.constant 0 : i32
    %c0_i32_1 = arith.constant 0 : i32
    return %c0_i32, %c0_i32_0 : i32, i32
  }
  func.func @transform_27(%arg0: i32) -> (i32, i32) {
    %c0_i32 = arith.constant 0 : i32
    %c0_i32_0 = arith.constant 0 : i32
    %c0_i32_1 = arith.constant 0 : i32
    return %c0_i32, %c0_i32_0 : i32, i32
  }
  func.func @transform_28(%arg0: i32) -> (i32, i32) {
    %c0_i32 = arith.constant 0 : i32
    %c0_i32_0 = arith.constant 0 : i32
    %c0_i32_1 = arith.constant 0 : i32
    return %c0_i32, %c0_i32_0 : i32, i32
  }
  func.func @transform_29(%arg0: i32) -> (i32, i32) {
    %c0_i32 = arith.constant 0 : i32
    %c0_i32_0 = arith.constant 0 : i32
    %c0_i32_1 = arith.constant 0 : i32
    return %c0_i32, %c0_i32_0 : i32, i32
  }
  func.func @transform_30(%arg0: i32) -> (i32, i32) {
    %c0_i32 = arith.constant 0 : i32
    %c0_i32_0 = arith.constant 0 : i32
    %c0_i32_1 = arith.constant 0 : i32
    return %c0_i32, %c0_i32_0 : i32, i32
  }
  func.func @transform_31(%arg0: i32) -> (i32, i32) {
    %c0_i32 = arith.constant 0 : i32
    %c0_i32_0 = arith.constant 0 : i32
    %c0_i32_1 = arith.constant 0 : i32
    return %c0_i32, %c0_i32_0 : i32, i32
  }
  func.func @transform_32(%arg0: i32) -> (i32, i32) {
    %c0_i32 = arith.constant 0 : i32
    %c0_i32_0 = arith.constant 0 : i32
    %c0_i32_1 = arith.constant 0 : i32
    return %c0_i32, %c0_i32_0 : i32, i32
  }
  func.func @transform_33(%arg0: i32) -> (i32, i32) {
    %c0_i32 = arith.constant 0 : i32
    %c0_i32_0 = arith.constant 0 : i32
    %c0_i32_1 = arith.constant 0 : i32
    return %c0_i32, %c0_i32_0 : i32, i32
  }
  func.func @transform_34(%arg0: i32) -> (i32, i32) {
    %c0_i32 = arith.constant 0 : i32
    %c0_i32_0 = arith.constant 0 : i32
    %c0_i32_1 = arith.constant 0 : i32
    return %c0_i32, %c0_i32_0 : i32, i32
  }
  func.func @transform_35(%arg0: i32) -> (i32, i32) {
    %c0_i32 = arith.constant 0 : i32
    %c0_i32_0 = arith.constant 0 : i32
    %c0_i32_1 = arith.constant 0 : i32
    return %c0_i32, %c0_i32_0 : i32, i32
  }
  func.func @transform_36(%arg0: i32) -> (i32, i32) {
    %c0_i32 = arith.constant 0 : i32
    %c0_i32_0 = arith.constant 0 : i32
    %c0_i32_1 = arith.constant 0 : i32
    return %c0_i32, %c0_i32_0 : i32, i32
  }
  func.func @transform_37(%arg0: i32) -> (i32, i32, i32) {
    %c0_i32 = arith.constant 0 : i32
    %c0_i32_0 = arith.constant 0 : i32
    %c0_i32_1 = arith.constant 0 : i32
    return %arg0, %c0_i32, %c0_i32_0 : i32, i32, i32
  }
}

</mosaic_0001>

<llo_original>
// kernel: tpu_custom_call.1
$region0: #{tpu_custom_call.1}
  #allocation0 [shape = 'u32[]', space=smem, size = 0x4, offset = 0x4, fixed_abs, tag = 'smem constant byte address 0x4 - core index']
  #allocation1 [shape = 'u32[72,128]{1,0:T(1,128)}', space=vmem, size = 0x9000, scoped, tag = 'internal scratch']
  #allocation2 [shape = 'bf16[2,24,128]{2,1,0:T(8,128)(2,1)}', space=vmem, size = 0x3000, scoped, tag = 'scratch operand']
  #allocation3 [shape = 'bf16[2,24,128]{2,1,0:T(8,128)(2,1)}', space=vmem, size = 0x3000, scoped, tag = 'scratch operand']
  %s0 = inlined_call_operand.smem [shape: u32[38], index: -1, kind: input, shape index: {}]
  %s1 = sld [smem:[%s0]]
  %s2 = scalar_lea.smem %s0, 1
  %s3 = sld [smem:[%s2]]
  %s4 = scalar_lea.smem %s0, 2
  %s5 = sld [smem:[%s4]]
  %s6 = scalar_lea.smem %s0, 3
  %s7 = sld [smem:[%s6]]
  %s8 = scalar_lea.smem %s0, 4
  %s9 = sld [smem:[%s8]]
  %s10 = scalar_lea.smem %s0, 5
  %s11 = sld [smem:[%s10]]
  %s12 = scalar_lea.smem %s0, 6
  %s13 = sld [smem:[%s12]]
  %s14 = scalar_lea.smem %s0, 7
  %s15 = sld [smem:[%s14]]
  %s16 = scalar_lea.smem %s0, 8
  %s17 = sld [smem:[%s16]]
  %s18 = scalar_lea.smem %s0, 9
  %s19 = sld [smem:[%s18]]
  %s20 = scalar_lea.smem %s0, 10
  %s21 = sld [smem:[%s20]]
  %s22 = scalar_lea.smem %s0, 11
  %s23 = sld [smem:[%s22]]
  %s24 = scalar_lea.smem %s0, 12
  %s25 = sld [smem:[%s24]]
  %s26 = scalar_lea.smem %s0, 13
  %s27 = sld [smem:[%s26]]
  %s28 = scalar_lea.smem %s0, 14
  %s29 = sld [smem:[%s28]]
  %s30 = scalar_lea.smem %s0, 15
  %s31 = sld [smem:[%s30]]
  %s32 = scalar_lea.smem %s0, 16
  %s33 = sld [smem:[%s32]]
  %s34 = scalar_lea.smem %s0, 17
  %s35 = sld [smem:[%s34]]
  %s36 = scalar_lea.smem %s0, 18
  %s37 = sld [smem:[%s36]]
  %s38 = scalar_lea.smem %s0, 19
  %s39 = sld [smem:[%s38]]
  %s40 = scalar_lea.smem %s0, 20
  %s41 = sld [smem:[%s40]]
  %s42 = scalar_lea.smem %s0, 21
  %s43 = sld [smem:[%s42]]
  %s44 = scalar_lea.smem %s0, 22
  %s45 = sld [smem:[%s44]]
  %s46 = scalar_lea.smem %s0, 23
  %s47 = sld [smem:[%s46]]
  %s48 = scalar_lea.smem %s0, 24
  %s49 = sld [smem:[%s48]]
  %s50 = scalar_lea.smem %s0, 25
  %s51 = sld [smem:[%s50]]
  %s52 = scalar_lea.smem %s0, 26
  %s53 = sld [smem:[%s52]]
  %s54 = scalar_lea.smem %s0, 27
  %s55 = sld [smem:[%s54]]
  %s56 = scalar_lea.smem %s0, 28
  %s57 = sld [smem:[%s56]]
  %s58 = scalar_lea.smem %s0, 29
  %s59 = sld [smem:[%s58]]
  %s60 = scalar_lea.smem %s0, 30
  %s61 = sld [smem:[%s60]]
  %s62 = scalar_lea.smem %s0, 31
  %s63 = sld [smem:[%s62]]
  %s64 = scalar_lea.smem %s0, 32
  %s65 = sld [smem:[%s64]]
  %s66 = scalar_lea.smem %s0, 33
  %s67 = sld [smem:[%s66]]
  %s68 = scalar_lea.smem %s0, 34
  %s69 = sld [smem:[%s68]]
  %s70 = scalar_lea.smem %s0, 35
  %s71 = sld [smem:[%s70]]
  %s72 = scalar_lea.smem %s0, 36
  %s73 = sld [smem:[%s72]]
  %s74 = scalar_lea.smem %s0, 37
  %s75 = sld [smem:[%s74]]
  %s76 = sld [smem:[#allocation0]]
  $region265: #{tpu_custom_call.1} parent=0
    _
  %s78 = ssub.s32 1, %s76
  %s79 = scalar_select 0, %s78, %s76
  $region1: #{tpu_custom_call.1} parent=0
    #allocation4 [shape = 'u8[32768]{0}', space=vmem, size = 0x8000, scoped, tag = 'input window, operand 3, single buffered']
    #allocation5 [shape = 's32[2]{0}', space=sflag, size = 0x8, scoped, tag = 'scoped memory for tpu_custom_call.1']
    #allocation6 [shape = 's32[2]{0}', space=sflag, size = 0x8, scoped, tag = 'scoped memory for tpu_custom_call.1']
    #allocation7 [shape = 'u8[32768]{0}', space=vmem, size = 0x8000, scoped, tag = 'input window, operand 5, single buffered']
    #allocation8 [shape = 's32[1]{0}', space=sflag, size = 0x4, scoped, tag = 'scoped memory for tpu_custom_call.1']
    #allocation9 [shape = 'u8[32768]{0}', space=vmem, size = 0x8000, scoped, tag = 'input window, operand 6, single buffered']
    #allocation10 [shape = 'u8[32768]{0}', space=vmem, size = 0x8000, scoped, tag = 'input window, operand 8, single buffered']
    #allocation11 [shape = 's32[1]{0}', space=sflag, size = 0x4, scoped, tag = 'scoped memory for tpu_custom_call.1']
    #allocation12 [shape = 'u8[32768]{0}', space=vmem, size = 0x8000, scoped, tag = 'input window, operand 10, single buffered']
    #allocation13 [shape = 'u8[32768]{0}', space=vmem, size = 0x8000, scoped, tag = 'input window, operand 11, single buffered']
    #allocation14 [shape = 's32[1]{0}', space=sflag, size = 0x4, scoped, tag = 'scoped memory for tpu_custom_call.1']
    #allocation15 [shape = 'u8[32768]{0}', space=vmem, size = 0x8000, scoped, tag = 'input window, operand 13, single buffered']
    #allocation16 [shape = 'u8[32768]{0}', space=vmem, size = 0x8000, scoped, tag = 'input window, operand 14, single buffered']
    #allocation17 [shape = 's32[1]{0}', space=sflag, size = 0x4, scoped, tag = 'scoped memory for tpu_custom_call.1']
    #allocation18 [shape = 'u8[32768]{0}', space=vmem, size = 0x8000, scoped, tag = 'input window, operand 16, single buffered']
    #allocation19 [shape = 'u8[32768]{0}', space=vmem, size = 0x8000, scoped, tag = 'input window, operand 18, single buffered']
    #allocation20 [shape = 's32[1]{0}', space=sflag, size = 0x4, scoped, tag = 'scoped memory for tpu_custom_call.1']
    #allocation21 [shape = 'u8[32768]{0}', space=vmem, size = 0x8000, scoped, tag = 'input window, operand 19, single buffered']
    #allocation22 [shape = 'u8[32768]{0}', space=vmem, size = 0x8000, scoped, tag = 'input window, operand 21, single buffered']
    #allocation23 [shape = 's32[1]{0}', space=sflag, size = 0x4, scoped, tag = 'scoped memory for tpu_custom_call.1']
    #allocation24 [shape = 'u8[32768]{0}', space=vmem, size = 0x8000, scoped, tag = 'input window, operand 22, single buffered']
    #allocation25 [shape = 'u8[32768]{0}', space=vmem, size = 0x8000, scoped, tag = 'input window, operand 24, single buffered']
    #allocation26 [shape = 's32[1]{0}', space=sflag, size = 0x4, scoped, tag = 'scoped memory for tpu_custom_call.1']
    #allocation27 [shape = 'u8[32768]{0}', space=vmem, size = 0x8000, scoped, tag = 'input window, operand 26, single buffered']
    #allocation28 [shape = 'u8[32768]{0}', space=vmem, size = 0x8000, scoped, tag = 'input window, operand 27, single buffered']
    #allocation29 [shape = 's32[1]{0}', space=sflag, size = 0x4, scoped, tag = 'scoped memory for tpu_custom_call.1']
    #allocation30 [shape = 'u8[32768]{0}', space=vmem, size = 0x8000, scoped, tag = 'input window, operand 29, single buffered']
    #allocation31 [shape = 'u8[32768]{0}', space=vmem, size = 0x8000, scoped, tag = 'input window, operand 30, single buffered']
    #allocation32 [shape = 's32[1]{0}', space=sflag, size = 0x4, scoped, tag = 'scoped memory for tpu_custom_call.1']
    #allocation33 [shape = 'u8[32768]{0}', space=vmem, size = 0x8000, scoped, tag = 'input window, operand 32, single buffered']
    #allocation34 [shape = 'u8[32768]{0}', space=vmem, size = 0x8000, scoped, tag = 'input window, operand 34, single buffered']
    #allocation35 [shape = 's32[1]{0}', space=sflag, size = 0x4, scoped, tag = 'scoped memory for tpu_custom_call.1']
    #allocation36 [shape = 'u8[32768]{0}', space=vmem, size = 0x8000, scoped, tag = 'input window, operand 35, single buffered']
    #allocation37 [shape = 'u8[32768]{0}', space=vmem, size = 0x8000, scoped, tag = 'output window, operand 0']
    %80 = vsyncpa [#allocation5], 0
    %81 = vsyncpa [#allocation8], 0
    %82 = vsyncpa [#allocation11], 0
    %83 = vsyncpa [#allocation14], 0
    %84 = vsyncpa [#allocation17], 0
    %85 = vsyncpa [#allocation20], 0
    %86 = vsyncpa [#allocation23], 0
    %87 = vsyncpa [#allocation26], 0
    %88 = vsyncpa [#allocation29], 0
    %89 = vsyncpa [#allocation32], 0
    %90 = vsyncpa [#allocation35], 0
    %91 = vsyncpa [#allocation6], 0
    %s92 = scalar_lea.sflag [#allocation6], 1
    %93 = vsyncpa %s92, 0
    loop: start=0, step=1, limit=4
    $region2: #{tpu_custom_call.1} parent=1 // loop_pre_header
      _
    $region3: #{tpu_custom_call.1} parent=1 // loop_header
      %s95 = sphi 0, %s99
      %p96 = scmp.ge.s32.totalorder %s95, 4
      %s105 = sphi 0, %s107
      %s108 = sphi 0, %s105
      %s109 = sphi 0, %s108
      %s125 = sphi 0, %s109
      %s129 = sphi 0, %s129
      %s131 = sphi 0, %s129
      %s132 = sphi 0, %s131
      %s146 = sphi 0, %s132
      %s150 = sphi 0, %s150
      %s152 = sphi 0, %s150
      %s153 = sphi 0, %s152
      %s167 = sphi 0, %s153
      %s171 = sphi 0, %s171
      %s173 = sphi 0, %s171
      %s174 = sphi 0, %s173
      %s188 = sphi 0, %s174
      %s192 = sphi 0, %s192
      %s194 = sphi 0, %s192
      %s195 = sphi 0, %s194
      %s209 = sphi 0, %s195
      %s213 = sphi 0, %s213
      %s215 = sphi 0, %s213
      %s216 = sphi 0, %s215
      %s230 = sphi 0, %s216
      %s234 = sphi 0, %s234
      %s236 = sphi 0, %s234
      %s237 = sphi 0, %s236
      %s251 = sphi 0, %s237
      %s255 = sphi 0, %s255
      %s257 = sphi 0, %s255
      %s258 = sphi 0, %s257
      %s272 = sphi 0, %s258
      %s276 = sphi 0, %s276
      %s278 = sphi 0, %s276
      %s279 = sphi 0, %s278
      %s293 = sphi 0, %s279
      %s297 = sphi 0, %s297
      %s299 = sphi 0, %s297
      %s300 = sphi 0, %s299
      %s314 = sphi 0, %s300
      %s318 = sphi 0, %s318
      %s320 = sphi 0, %s318
      %s321 = sphi 0, %s320
      %s335 = sphi 0, %s321
      %s339 = sphi 0, %s339
      %s341 = sphi 0, %s339
      %s342 = sphi 0, %s341
      %s356 = sphi 0, %s342
      %s360 = sphi 0, %s360
      %s362 = sphi 0, %s360
      %s363 = sphi 0, %s362
      %s377 = sphi 0, %s363
      %s381 = sphi 0, %s381
      %s383 = sphi 0, %s381
      %s384 = sphi 0, %s383
      %s398 = sphi 0, %s384
      %s402 = sphi 0, %s402
      %s404 = sphi 0, %s402
      %s405 = sphi 0, %s404
      %s419 = sphi 0, %s405
      %s423 = sphi 0, %s423
      %s425 = sphi 0, %s423
      %s426 = sphi 0, %s425
      %s440 = sphi 0, %s426
      %s444 = sphi 0, %s444
      %s446 = sphi 0, %s444
      %s447 = sphi 0, %s446
      %s461 = sphi 0, %s447
      %s465 = sphi 0, %s465
      %s467 = sphi 0, %s465
      %s468 = sphi 0, %s467
      %s482 = sphi 0, %s468
      %s486 = sphi 0, %s486
      %s488 = sphi 0, %s486
      %s489 = sphi 0, %s488
      %s503 = sphi 0, %s489
      %s507 = sphi 0, %s507
      %s509 = sphi 0, %s507
      %s510 = sphi 0, %s509
      %s524 = sphi 0, %s510
      %s528 = sphi 0, %s528
      %s530 = sphi 0, %s528
      %s531 = sphi 0, %s530
      %s545 = sphi 0, %s531
      %s549 = sphi 0, %s549
      %s551 = sphi 0, %s549
      %s552 = sphi 0, %s551
      %s566 = sphi 0, %s552
      %s570 = sphi 0, %s570
      %s572 = sphi 0, %s570
      %s573 = sphi 0, %s572
      %s587 = sphi 0, %s573
      %s591 = sphi 0, %s591
      %s593 = sphi 0, %s591
      %s594 = sphi 0, %s593
      %s608 = sphi 0, %s594
      %s612 = sphi 0, %s612
      %s614 = sphi 0, %s612
      %s615 = sphi 0, %s614
      %s629 = sphi 0, %s615
      %s633 = sphi 0, %s633
      %s635 = sphi 0, %s633
      %s636 = sphi 0, %s635
      %s650 = sphi 0, %s636
      %s654 = sphi 0, %s654
      %s656 = sphi 0, %s654
      %s657 = sphi 0, %s656
      %s671 = sphi 0, %s657
      %s675 = sphi 0, %s675
      %s677 = sphi 0, %s675
      %s678 = sphi 0, %s677
      %s692 = sphi 0, %s678
      %s696 = sphi 0, %s696
      %s698 = sphi 0, %s696
      %s699 = sphi 0, %s698
      %s713 = sphi 0, %s699
      %s717 = sphi 0, %s717
      %s719 = sphi 0, %s717
      %s720 = sphi 0, %s719
      %s734 = sphi 0, %s720
      %s738 = sphi 0, %s738
      %s740 = sphi 0, %s738
      %s741 = sphi 0, %s740
      %s755 = sphi 0, %s741
      %s759 = sphi 0, %s759
      %s761 = sphi 0, %s759
      %s762 = sphi 0, %s761
      %s776 = sphi 0, %s762
      %s780 = sphi 0, %s780
      %s782 = sphi 0, %s780
      %s783 = sphi 0, %s782
      %s797 = sphi 0, %s783
      %s801 = sphi 0, %s801
      %s803 = sphi 0, %s801
      %s804 = sphi 0, %s803
      %s818 = sphi 0, %s804
      %s822 = sphi 0, %s822
      %s824 = sphi 0, %s822
      %s825 = sphi 0, %s824
      %s839 = sphi 0, %s825
      %s843 = sphi 0, %s843
      %s845 = sphi 0, %s843
      %s846 = sphi 0, %s845
      %s860 = sphi 0, %s846
      %s864 = sphi 0, %s864
      %s866 = sphi 0, %s864
      %s867 = sphi 0, %s866
      %s881 = sphi 0, %s867
      %s887 = sphi 0, %s889
      %s890 = sphi 0, %s887
      %s891 = sphi 0, %s890
      %s907 = sphi 0, %s891
    $region4: #{tpu_custom_call.1} parent=1 // loop_header_branch
      %98 = sbr.rel (%p96) target = $region8
    $region5: #{tpu_custom_call.1} parent=1 // loop_body
      %s100 = ssub.s32 %s95, 1
      %s101 = ssub.s32 %s95, 2
      %s102 = sadd.s32 %s95, 1
      %s103 = ssub.s32 %s95, %s102
      %p104 = scmp.eq.s32.totalorder %s103, 0
      %s106 = sadd.s32 %s105, 1
      %s107 = scalar_select %p104, %s105, %s106
      %p110 = pneg %p104
      %p111 = scmp.eq.s32.totalorder %s95, 1
      %p112 = por %p110, %p111
      %p113 = scmp.ne.s32.totalorder %s105, %s108
      %p114 = scmp.eq.s32.totalorder %s95, 0
      %p115 = por %p113, %p114
      %p116 = scmp.ne.s32.totalorder %s105, %s108
      %p117 = scmp.eq.s32.totalorder %s100, 1
      %p118 = por %p116, %p117
      %p119 = scmp.ne.s32.totalorder %s108, %s109
      %p120 = scmp.eq.s32.totalorder %s100, 0
      %p121 = por %p119, %p120
      %p122 = scmp.ne.s32.totalorder %s108, %s109
      %p123 = scmp.eq.s32.totalorder %s101, 1
      %p124 = por %p122, %p123
      %p126 = scmp.ne.s32.totalorder %s109, %s125
      %p127 = scmp.eq.s32.totalorder %s101, 0
      %p128 = por %p126, %p127
      %s130 = sadd.s32 %s129, 1
      %p133 = scmp.eq.s32.totalorder %s95, 1
      %p134 = scmp.ne.s32.totalorder %s129, %s131
      %p135 = scmp.eq.s32.totalorder %s95, 0
      %p136 = por %p134, %p135
      %p137 = scmp.ne.s32.totalorder %s129, %s131
      %p138 = scmp.eq.s32.totalorder %s100, 1
      %p139 = por %p137, %p138
      %p140 = scmp.ne.s32.totalorder %s131, %s132
      %p141 = scmp.eq.s32.totalorder %s100, 0
      %p142 = por %p140, %p141
      %p143 = scmp.ne.s32.totalorder %s131, %s132
      %p144 = scmp.eq.s32.totalorder %s101, 1
      %p145 = por %p143, %p144
      %p147 = scmp.ne.s32.totalorder %s132, %s146
      %p148 = scmp.eq.s32.totalorder %s101, 0
      %p149 = por %p147, %p148
      %s151 = sadd.s32 %s150, 1
      %p154 = scmp.eq.s32.totalorder %s95, 1
      %p155 = scmp.ne.s32.totalorder %s150, %s152
      %p156 = scmp.eq.s32.totalorder %s95, 0
      %p157 = por %p155, %p156
      %p158 = scmp.ne.s32.totalorder %s150, %s152
      %p159 = scmp.eq.s32.totalorder %s100, 1
      %p160 = por %p158, %p159
      %p161 = scmp.ne.s32.totalorder %s152, %s153
      %p162 = scmp.eq.s32.totalorder %s100, 0
      %p163 = por %p161, %p162
      %p164 = scmp.ne.s32.totalorder %s152, %s153
      %p165 = scmp.eq.s32.totalorder %s101, 1
      %p166 = por %p164, %p165
      %p168 = scmp.ne.s32.totalorder %s153, %s167
      %p169 = scmp.eq.s32.totalorder %s101, 0
      %p170 = por %p168, %p169
      %s172 = sadd.s32 %s171, 1
      %p175 = scmp.eq.s32.totalorder %s95, 1
      %p176 = scmp.ne.s32.totalorder %s171, %s173
      %p177 = scmp.eq.s32.totalorder %s95, 0
      %p178 = por %p176, %p177
      %p179 = scmp.ne.s32.totalorder %s171, %s173
      %p180 = scmp.eq.s32.totalorder %s100, 1
      %p181 = por %p179, %p180
      %p182 = scmp.ne.s32.totalorder %s173, %s174
      %p183 = scmp.eq.s32.totalorder %s100, 0
      %p184 = por %p182, %p183
      %p185 = scmp.ne.s32.totalorder %s173, %s174
      %p186 = scmp.eq.s32.totalorder %s101, 1
      %p187 = por %p185, %p186
      %p189 = scmp.ne.s32.totalorder %s174, %s188
      %p190 = scmp.eq.s32.totalorder %s101, 0
      %p191 = por %p189, %p190
      %s193 = sadd.s32 %s192, 1
      %p196 = scmp.eq.s32.totalorder %s95, 1
      %p197 = scmp.ne.s32.totalorder %s192, %s194
      %p198 = scmp.eq.s32.totalorder %s95, 0
      %p199 = por %p197, %p198
      %p200 = scmp.ne.s32.totalorder %s192, %s194
      %p201 = scmp.eq.s32.totalorder %s100, 1
      %p202 = por %p200, %p201
      %p203 = scmp.ne.s32.totalorder %s194, %s195
      %p204 = scmp.eq.s32.totalorder %s100, 0
      %p205 = por %p203, %p204
      %p206 = scmp.ne.s32.totalorder %s194, %s195
      %p207 = scmp.eq.s32.totalorder %s101, 1
      %p208 = por %p206, %p207
      %p210 = scmp.ne.s32.totalorder %s195, %s209
      %p211 = scmp.eq.s32.totalorder %s101, 0
      %p212 = por %p210, %p211
      %s214 = sadd.s32 %s213, 1
      %p217 = scmp.eq.s32.totalorder %s95, 1
      %p218 = scmp.ne.s32.totalorder %s213, %s215
      %p219 = scmp.eq.s32.totalorder %s95, 0
      %p220 = por %p218, %p219
      %p221 = scmp.ne.s32.totalorder %s213, %s215
      %p222 = scmp.eq.s32.totalorder %s100, 1
      %p223 = por %p221, %p222
      %p224 = scmp.ne.s32.totalorder %s215, %s216
      %p225 = scmp.eq.s32.totalorder %s100, 0
      %p226 = por %p224, %p225
      %p227 = scmp.ne.s32.totalorder %s215, %s216
      %p228 = scmp.eq.s32.totalorder %s101, 1
      %p229 = por %p227, %p228
      %p231 = scmp.ne.s32.totalorder %s216, %s230
      %p232 = scmp.eq.s32.totalorder %s101, 0
      %p233 = por %p231, %p232
      %s235 = sadd.s32 %s234, 1
      %p238 = scmp.eq.s32.totalorder %s95, 1
      %p239 = scmp.ne.s32.totalorder %s234, %s236
      %p240 = scmp.eq.s32.totalorder %s95, 0
      %p241 = por %p239, %p240
      %p242 = scmp.ne.s32.totalorder %s234, %s236
      %p243 = scmp.eq.s32.totalorder %s100, 1
      %p244 = por %p242, %p243
      %p245 = scmp.ne.s32.totalorder %s236, %s237
      %p246 = scmp.eq.s32.totalorder %s100, 0
      %p247 = por %p245, %p246
      %p248 = scmp.ne.s32.totalorder %s236, %s237
      %p249 = scmp.eq.s32.totalorder %s101, 1
      %p250 = por %p248, %p249
      %p252 = scmp.ne.s32.totalorder %s237, %s251
      %p253 = scmp.eq.s32.totalorder %s101, 0
      %p254 = por %p252, %p253
      %s256 = sadd.s32 %s255, 1
      %p259 = scmp.eq.s32.totalorder %s95, 1
      %p260 = scmp.ne.s32.totalorder %s255, %s257
      %p261 = scmp.eq.s32.totalorder %s95, 0
      %p262 = por %p260, %p261
      %p263 = scmp.ne.s32.totalorder %s255, %s257
      %p264 = scmp.eq.s32.totalorder %s100, 1
      %p265 = por %p263, %p264
      %p266 = scmp.ne.s32.totalorder %s257, %s258
      %p267 = scmp.eq.s32.totalorder %s100, 0
      %p268 = por %p266, %p267
      %p269 = scmp.ne.s32.totalorder %s257, %s258
      %p270 = scmp.eq.s32.totalorder %s101, 1
      %p271 = por %p269, %p270
      %p273 = scmp.ne.s32.totalorder %s258, %s272
      %p274 = scmp.eq.s32.totalorder %s101, 0
      %p275 = por %p273, %p274
      %s277 = sadd.s32 %s276, 1
      %p280 = scmp.eq.s32.totalorder %s95, 1
      %p281 = scmp.ne.s32.totalorder %s276, %s278
      %p282 = scmp.eq.s32.totalorder %s95, 0
      %p283 = por %p281, %p282
      %p284 = scmp.ne.s32.totalorder %s276, %s278
      %p285 = scmp.eq.s32.totalorder %s100, 1
      %p286 = por %p284, %p285
      %p287 = scmp.ne.s32.totalorder %s278, %s279
      %p288 = scmp.eq.s32.totalorder %s100, 0
      %p289 = por %p287, %p288
      %p290 = scmp.ne.s32.totalorder %s278, %s279
      %p291 = scmp.eq.s32.totalorder %s101, 1
      %p292 = por %p290, %p291
      %p294 = scmp.ne.s32.totalorder %s279, %s293
      %p295 = scmp.eq.s32.totalorder %s101, 0
      %p296 = por %p294, %p295
      %s298 = sadd.s32 %s297, 1
      %p301 = scmp.eq.s32.totalorder %s95, 1
      %p302 = scmp.ne.s32.totalorder %s297, %s299
      %p303 = scmp.eq.s32.totalorder %s95, 0
      %p304 = por %p302, %p303
      %p305 = scmp.ne.s32.totalorder %s297, %s299
      %p306 = scmp.eq.s32.totalorder %s100, 1
      %p307 = por %p305, %p306
      %p308 = scmp.ne.s32.totalorder %s299, %s300
      %p309 = scmp.eq.s32.totalorder %s100, 0
      %p310 = por %p308, %p309
      %p311 = scmp.ne.s32.totalorder %s299, %s300
      %p312 = scmp.eq.s32.totalorder %s101, 1
      %p313 = por %p311, %p312
      %p315 = scmp.ne.s32.totalorder %s300, %s314
      %p316 = scmp.eq.s32.totalorder %s101, 0
      %p317 = por %p315, %p316
      %s319 = sadd.s32 %s318, 1
      %p322 = scmp.eq.s32.totalorder %s95, 1
      %p323 = scmp.ne.s32.totalorder %s318, %s320
      %p324 = scmp.eq.s32.totalorder %s95, 0
      %p325 = por %p323, %p324
      %p326 = scmp.ne.s32.totalorder %s318, %s320
      %p327 = scmp.eq.s32.totalorder %s100, 1
      %p328 = por %p326, %p327
      %p329 = scmp.ne.s32.totalorder %s320, %s321
      %p330 = scmp.eq.s32.totalorder %s100, 0
      %p331 = por %p329, %p330
      %p332 = scmp.ne.s32.totalorder %s320, %s321
      %p333 = scmp.eq.s32.totalorder %s101, 1
      %p334 = por %p332, %p333
      %p336 = scmp.ne.s32.totalorder %s321, %s335
      %p337 = scmp.eq.s32.totalorder %s101, 0
      %p338 = por %p336, %p337
      %s340 = sadd.s32 %s339, 1
      %p343 = scmp.eq.s32.totalorder %s95, 1
      %p344 = scmp.ne.s32.totalorder %s339, %s341
      %p345 = scmp.eq.s32.totalorder %s95, 0
      %p346 = por %p344, %p345
      %p347 = scmp.ne.s32.totalorder %s339, %s341
      %p348 = scmp.eq.s32.totalorder %s100, 1
      %p349 = por %p347, %p348
      %p350 = scmp.ne.s32.totalorder %s341, %s342
      %p351 = scmp.eq.s32.totalorder %s100, 0
      %p352 = por %p350, %p351
      %p353 = scmp.ne.s32.totalorder %s341, %s342
      %p354 = scmp.eq.s32.totalorder %s101, 1
      %p355 = por %p353, %p354
      %p357 = scmp.ne.s32.totalorder %s342, %s356
      %p358 = scmp.eq.s32.totalorder %s101, 0
      %p359 = por %p357, %p358
      %s361 = sadd.s32 %s360, 1
      %p364 = scmp.eq.s32.totalorder %s95, 1
      %p365 = scmp.ne.s32.totalorder %s360, %s362
      %p366 = scmp.eq.s32.totalorder %s95, 0
      %p367 = por %p365, %p366
      %p368 = scmp.ne.s32.totalorder %s360, %s362
      %p369 = scmp.eq.s32.totalorder %s100, 1
      %p370 = por %p368, %p369
      %p371 = scmp.ne.s32.totalorder %s362, %s363
      %p372 = scmp.eq.s32.totalorder %s100, 0
      %p373 = por %p371, %p372
      %p374 = scmp.ne.s32.totalorder %s362, %s363
      %p375 = scmp.eq.s32.totalorder %s101, 1
      %p376 = por %p374, %p375
      %p378 = scmp.ne.s32.totalorder %s363, %s377
      %p379 = scmp.eq.s32.totalorder %s101, 0
      %p380 = por %p378, %p379
      %s382 = sadd.s32 %s381, 1
      %p385 = scmp.eq.s32.totalorder %s95, 1
      %p386 = scmp.ne.s32.totalorder %s381, %s383
      %p387 = scmp.eq.s32.totalorder %s95, 0
      %p388 = por %p386, %p387
      %p389 = scmp.ne.s32.totalorder %s381, %s383
      %p390 = scmp.eq.s32.totalorder %s100, 1
      %p391 = por %p389, %p390
      %p392 = scmp.ne.s32.totalorder %s383, %s384
      %p393 = scmp.eq.s32.totalorder %s100, 0
      %p394 = por %p392, %p393
      %p395 = scmp.ne.s32.totalorder %s383, %s384
      %p396 = scmp.eq.s32.totalorder %s101, 1
      %p397 = por %p395, %p396
      %p399 = scmp.ne.s32.totalorder %s384, %s398
      %p400 = scmp.eq.s32.totalorder %s101, 0
      %p401 = por %p399, %p400
      %s403 = sadd.s32 %s402, 1
      %p406 = scmp.eq.s32.totalorder %s95, 1
      %p407 = scmp.ne.s32.totalorder %s402, %s404
      %p408 = scmp.eq.s32.totalorder %s95, 0
      %p409 = por %p407, %p408
      %p410 = scmp.ne.s32.totalorder %s402, %s404
      %p411 = scmp.eq.s32.totalorder %s100, 1
      %p412 = por %p410, %p411
      %p413 = scmp.ne.s32.totalorder %s404, %s405
      %p414 = scmp.eq.s32.totalorder %s100, 0
      %p415 = por %p413, %p414
      %p416 = scmp.ne.s32.totalorder %s404, %s405
      %p417 = scmp.eq.s32.totalorder %s101, 1
      %p418 = por %p416, %p417
      %p420 = scmp.ne.s32.totalorder %s405, %s419
      %p421 = scmp.eq.s32.totalorder %s101, 0
      %p422 = por %p420, %p421
      %s424 = sadd.s32 %s423, 1
      %p427 = scmp.eq.s32.totalorder %s95, 1
      %p428 = scmp.ne.s32.totalorder %s423, %s425
      %p429 = scmp.eq.s32.totalorder %s95, 0
      %p430 = por %p428, %p429
      %p431 = scmp.ne.s32.totalorder %s423, %s425
      %p432 = scmp.eq.s32.totalorder %s100, 1
      %p433 = por %p431, %p432
      %p434 = scmp.ne.s32.totalorder %s425, %s426
      %p435 = scmp.eq.s32.totalorder %s100, 0
      %p436 = por %p434, %p435
      %p437 = scmp.ne.s32.totalorder %s425, %s426
      %p438 = scmp.eq.s32.totalorder %s101, 1
      %p439 = por %p437, %p438
      %p441 = scmp.ne.s32.totalorder %s426, %s440
      %p442 = scmp.eq.s32.totalorder %s101, 0
      %p443 = por %p441, %p442
      %s445 = sadd.s32 %s444, 1
      %p448 = scmp.eq.s32.totalorder %s95, 1
      %p449 = scmp.ne.s32.totalorder %s444, %s446
      %p450 = scmp.eq.s32.totalorder %s95, 0
      %p451 = por %p449, %p450
      %p452 = scmp.ne.s32.totalorder %s444, %s446
      %p453 = scmp.eq.s32.totalorder %s100, 1
      %p454 = por %p452, %p453
      %p455 = scmp.ne.s32.totalorder %s446, %s447
      %p456 = scmp.eq.s32.totalorder %s100, 0
      %p457 = por %p455, %p456
      %p458 = scmp.ne.s32.totalorder %s446, %s447
      %p459 = scmp.eq.s32.totalorder %s101, 1
      %p460 = por %p458, %p459
      %p462 = scmp.ne.s32.totalorder %s447, %s461
      %p463 = scmp.eq.s32.totalorder %s101, 0
      %p464 = por %p462, %p463
      %s466 = sadd.s32 %s465, 1
      %p469 = scmp.eq.s32.totalorder %s95, 1
      %p470 = scmp.ne.s32.totalorder %s465, %s467
      %p471 = scmp.eq.s32.totalorder %s95, 0
      %p472 = por %p470, %p471
      %p473 = scmp.ne.s32.totalorder %s465, %s467
      %p474 = scmp.eq.s32.totalorder %s100, 1
      %p475 = por %p473, %p474
      %p476 = scmp.ne.s32.totalorder %s467, %s468
      %p477 = scmp.eq.s32.totalorder %s100, 0
      %p478 = por %p476, %p477
      %p479 = scmp.ne.s32.totalorder %s467, %s468
      %p480 = scmp.eq.s32.totalorder %s101, 1
      %p481 = por %p479, %p480
      %p483 = scmp.ne.s32.totalorder %s468, %s482
      %p484 = scmp.eq.s32.totalorder %s101, 0
      %p485 = por %p483, %p484
      %s487 = sadd.s32 %s486, 1
      %p490 = scmp.eq.s32.totalorder %s95, 1
      %p491 = scmp.ne.s32.totalorder %s486, %s488
      %p492 = scmp.eq.s32.totalorder %s95, 0
      %p493 = por %p491, %p492
      %p494 = scmp.ne.s32.totalorder %s486, %s488
      %p495 = scmp.eq.s32.totalorder %s100, 1
      %p496 = por %p494, %p495
      %p497 = scmp.ne.s32.totalorder %s488, %s489
      %p498 = scmp.eq.s32.totalorder %s100, 0
      %p499 = por %p497, %p498
      %p500 = scmp.ne.s32.totalorder %s488, %s489
      %p501 = scmp.eq.s32.totalorder %s101, 1
      %p502 = por %p500, %p501
      %p504 = scmp.ne.s32.totalorder %s489, %s503
      %p505 = scmp.eq.s32.totalorder %s101, 0
      %p506 = por %p504, %p505
      %s508 = sadd.s32 %s507, 1
      %p511 = scmp.eq.s32.totalorder %s95, 1
      %p512 = scmp.ne.s32.totalorder %s507, %s509
      %p513 = scmp.eq.s32.totalorder %s95, 0
      %p514 = por %p512, %p513
      %p515 = scmp.ne.s32.totalorder %s507, %s509
      %p516 = scmp.eq.s32.totalorder %s100, 1
      %p517 = por %p515, %p516
      %p518 = scmp.ne.s32.totalorder %s509, %s510
      %p519 = scmp.eq.s32.totalorder %s100, 0
      %p520 = por %p518, %p519
      %p521 = scmp.ne.s32.totalorder %s509, %s510
      %p522 = scmp.eq.s32.totalorder %s101, 1
      %p523 = por %p521, %p522
      %p525 = scmp.ne.s32.totalorder %s510, %s524
      %p526 = scmp.eq.s32.totalorder %s101, 0
      %p527 = por %p525, %p526
      %s529 = sadd.s32 %s528, 1
      %p532 = scmp.eq.s32.totalorder %s95, 1
      %p533 = scmp.ne.s32.totalorder %s528, %s530
      %p534 = scmp.eq.s32.totalorder %s95, 0
      %p535 = por %p533, %p534
      %p536 = scmp.ne.s32.totalorder %s528, %s530
      %p537 = scmp.eq.s32.totalorder %s100, 1
      %p538 = por %p536, %p537
      %p539 = scmp.ne.s32.totalorder %s530, %s531
      %p540 = scmp.eq.s32.totalorder %s100, 0
      %p541 = por %p539, %p540
      %p542 = scmp.ne.s32.totalorder %s530, %s531
      %p543 = scmp.eq.s32.totalorder %s101, 1
      %p544 = por %p542, %p543
      %p546 = scmp.ne.s32.totalorder %s531, %s545
      %p547 = scmp.eq.s32.totalorder %s101, 0
      %p548 = por %p546, %p547
      %s550 = sadd.s32 %s549, 1
      %p553 = scmp.eq.s32.totalorder %s95, 1
      %p554 = scmp.ne.s32.totalorder %s549, %s551
      %p555 = scmp.eq.s32.totalorder %s95, 0
      %p556 = por %p554, %p555
      %p557 = scmp.ne.s32.totalorder %s549, %s551
      %p558 = scmp.eq.s32.totalorder %s100, 1
      %p559 = por %p557, %p558
      %p560 = scmp.ne.s32.totalorder %s551, %s552
      %p561 = scmp.eq.s32.totalorder %s100, 0
      %p562 = por %p560, %p561
      %p563 = scmp.ne.s32.totalorder %s551, %s552
      %p564 = scmp.eq.s32.totalorder %s101, 1
      %p565 = por %p563, %p564
      %p567 = scmp.ne.s32.totalorder %s552, %s566
      %p568 = scmp.eq.s32.totalorder %s101, 0
      %p569 = por %p567, %p568
      %s571 = sadd.s32 %s570, 1
      %p574 = scmp.eq.s32.totalorder %s95, 1
      %p575 = scmp.ne.s32.totalorder %s570, %s572
      %p576 = scmp.eq.s32.totalorder %s95, 0
      %p577 = por %p575, %p576
      %p578 = scmp.ne.s32.totalorder %s570, %s572
      %p579 = scmp.eq.s32.totalorder %s100, 1
      %p580 = por %p578, %p579
      %p581 = scmp.ne.s32.totalorder %s572, %s573
      %p582 = scmp.eq.s32.totalorder %s100, 0
      %p583 = por %p581, %p582
      %p584 = scmp.ne.s32.totalorder %s572, %s573
      %p585 = scmp.eq.s32.totalorder %s101, 1
      %p586 = por %p584, %p585
      %p588 = scmp.ne.s32.totalorder %s573, %s587
      %p589 = scmp.eq.s32.totalorder %s101, 0
      %p590 = por %p588, %p589
      %s592 = sadd.s32 %s591, 1
      %p595 = scmp.eq.s32.totalorder %s95, 1
      %p596 = scmp.ne.s32.totalorder %s591, %s593
      %p597 = scmp.eq.s32.totalorder %s95, 0
      %p598 = por %p596, %p597
      %p599 = scmp.ne.s32.totalorder %s591, %s593
      %p600 = scmp.eq.s32.totalorder %s100, 1
      %p601 = por %p599, %p600
      %p602 = scmp.ne.s32.totalorder %s593, %s594
      %p603 = scmp.eq.s32.totalorder %s100, 0
      %p604 = por %p602, %p603
      %p605 = scmp.ne.s32.totalorder %s593, %s594
      %p606 = scmp.eq.s32.totalorder %s101, 1
      %p607 = por %p605, %p606
      %p609 = scmp.ne.s32.totalorder %s594, %s608
      %p610 = scmp.eq.s32.totalorder %s101, 0
      %p611 = por %p609, %p610
      %s613 = sadd.s32 %s612, 1
      %p616 = scmp.eq.s32.totalorder %s95, 1
      %p617 = scmp.ne.s32.totalorder %s612, %s614
      %p618 = scmp.eq.s32.totalorder %s95, 0
      %p619 = por %p617, %p618
      %p620 = scmp.ne.s32.totalorder %s612, %s614
      %p621 = scmp.eq.s32.totalorder %s100, 1
      %p622 = por %p620, %p621
      %p623 = scmp.ne.s32.totalorder %s614, %s615
      %p624 = scmp.eq.s32.totalorder %s100, 0
      %p625 = por %p623, %p624
      %p626 = scmp.ne.s32.totalorder %s614, %s615
      %p627 = scmp.eq.s32.totalorder %s101, 1
      %p628 = por %p626, %p627
      %p630 = scmp.ne.s32.totalorder %s615, %s629
      %p631 = scmp.eq.s32.totalorder %s101, 0
      %p632 = por %p630, %p631
      %s634 = sadd.s32 %s633, 1
      %p637 = scmp.eq.s32.totalorder %s95, 1
      %p638 = scmp.ne.s32.totalorder %s633, %s635
      %p639 = scmp.eq.s32.totalorder %s95, 0
      %p640 = por %p638, %p639
      %p641 = scmp.ne.s32.totalorder %s633, %s635
      %p642 = scmp.eq.s32.totalorder %s100, 1
      %p643 = por %p641, %p642
      %p644 = scmp.ne.s32.totalorder %s635, %s636
      %p645 = scmp.eq.s32.totalorder %s100, 0
      %p646 = por %p644, %p645
      %p647 = scmp.ne.s32.totalorder %s635, %s636
      %p648 = scmp.eq.s32.totalorder %s101, 1
      %p649 = por %p647, %p648
      %p651 = scmp.ne.s32.totalorder %s636, %s650
      %p652 = scmp.eq.s32.totalorder %s101, 0
      %p653 = por %p651, %p652
      %s655 = sadd.s32 %s654, 1
      %p658 = scmp.eq.s32.totalorder %s95, 1
      %p659 = scmp.ne.s32.totalorder %s654, %s656
      %p660 = scmp.eq.s32.totalorder %s95, 0
      %p661 = por %p659, %p660
      %p662 = scmp.ne.s32.totalorder %s654, %s656
      %p663 = scmp.eq.s32.totalorder %s100, 1
      %p664 = por %p662, %p663
      %p665 = scmp.ne.s32.totalorder %s656, %s657
      %p666 = scmp.eq.s32.totalorder %s100, 0
      %p667 = por %p665, %p666
      %p668 = scmp.ne.s32.totalorder %s656, %s657
      %p669 = scmp.eq.s32.totalorder %s101, 1
      %p670 = por %p668, %p669
      %p672 = scmp.ne.s32.totalorder %s657, %s671
      %p673 = scmp.eq.s32.totalorder %s101, 0
      %p674 = por %p672, %p673
      %s676 = sadd.s32 %s675, 1
      %p679 = scmp.eq.s32.totalorder %s95, 1
      %p680 = scmp.ne.s32.totalorder %s675, %s677
      %p681 = scmp.eq.s32.totalorder %s95, 0
      %p682 = por %p680, %p681
      %p683 = scmp.ne.s32.totalorder %s675, %s677
      %p684 = scmp.eq.s32.totalorder %s100, 1
      %p685 = por %p683, %p684
      %p686 = scmp.ne.s32.totalorder %s677, %s678
      %p687 = scmp.eq.s32.totalorder %s100, 0
      %p688 = por %p686, %p687
      %p689 = scmp.ne.s32.totalorder %s677, %s678
      %p690 = scmp.eq.s32.totalorder %s101, 1
      %p691 = por %p689, %p690
      %p693 = scmp.ne.s32.totalorder %s678, %s692
      %p694 = scmp.eq.s32.totalorder %s101, 0
      %p695 = por %p693, %p694
      %s697 = sadd.s32 %s696, 1
      %p700 = scmp.eq.s32.totalorder %s95, 1
      %p701 = scmp.ne.s32.totalorder %s696, %s698
      %p702 = scmp.eq.s32.totalorder %s95, 0
      %p703 = por %p701, %p702
      %p704 = scmp.ne.s32.totalorder %s696, %s698
      %p705 = scmp.eq.s32.totalorder %s100, 1
      %p706 = por %p704, %p705
      %p707 = scmp.ne.s32.totalorder %s698, %s699
      %p708 = scmp.eq.s32.totalorder %s100, 0
      %p709 = por %p707, %p708
      %p710 = scmp.ne.s32.totalorder %s698, %s699
      %p711 = scmp.eq.s32.totalorder %s101, 1
      %p712 = por %p710, %p711
      %p714 = scmp.ne.s32.totalorder %s699, %s713
      %p715 = scmp.eq.s32.totalorder %s101, 0
      %p716 = por %p714, %p715
      %s718 = sadd.s32 %s717, 1
      %p721 = scmp.eq.s32.totalorder %s95, 1
      %p722 = scmp.ne.s32.totalorder %s717, %s719
      %p723 = scmp.eq.s32.totalorder %s95, 0
      %p724 = por %p722, %p723
      %p725 = scmp.ne.s32.totalorder %s717, %s719
      %p726 = scmp.eq.s32.totalorder %s100, 1
      %p727 = por %p725, %p726
      %p728 = scmp.ne.s32.totalorder %s719, %s720
      %p729 = scmp.eq.s32.totalorder %s100, 0
      %p730 = por %p728, %p729
      %p731 = scmp.ne.s32.totalorder %s719, %s720
      %p732 = scmp.eq.s32.totalorder %s101, 1
      %p733 = por %p731, %p732
      %p735 = scmp.ne.s32.totalorder %s720, %s734
      %p736 = scmp.eq.s32.totalorder %s101, 0
      %p737 = por %p735, %p736
      %s739 = sadd.s32 %s738, 1
      %p742 = scmp.eq.s32.totalorder %s95, 1
      %p743 = scmp.ne.s32.totalorder %s738, %s740
      %p744 = scmp.eq.s32.totalorder %s95, 0
      %p745 = por %p743, %p744
      %p746 = scmp.ne.s32.totalorder %s738, %s740
      %p747 = scmp.eq.s32.totalorder %s100, 1
      %p748 = por %p746, %p747
      %p749 = scmp.ne.s32.totalorder %s740, %s741
      %p750 = scmp.eq.s32.totalorder %s100, 0
      %p751 = por %p749, %p750
      %p752 = scmp.ne.s32.totalorder %s740, %s741
      %p753 = scmp.eq.s32.totalorder %s101, 1
      %p754 = por %p752, %p753
      %p756 = scmp.ne.s32.totalorder %s741, %s755
      %p757 = scmp.eq.s32.totalorder %s101, 0
      %p758 = por %p756, %p757
      %s760 = sadd.s32 %s759, 1
      %p763 = scmp.eq.s32.totalorder %s95, 1
      %p764 = scmp.ne.s32.totalorder %s759, %s761
      %p765 = scmp.eq.s32.totalorder %s95, 0
      %p766 = por %p764, %p765
      %p767 = scmp.ne.s32.totalorder %s759, %s761
      %p768 = scmp.eq.s32.totalorder %s100, 1
      %p769 = por %p767, %p768
      %p770 = scmp.ne.s32.totalorder %s761, %s762
      %p771 = scmp.eq.s32.totalorder %s100, 0
      %p772 = por %p770, %p771
      %p773 = scmp.ne.s32.totalorder %s761, %s762
      %p774 = scmp.eq.s32.totalorder %s101, 1
      %p775 = por %p773, %p774
      %p777 = scmp.ne.s32.totalorder %s762, %s776
      %p778 = scmp.eq.s32.totalorder %s101, 0
      %p779 = por %p777, %p778
      %s781 = sadd.s32 %s780, 1
      %p784 = scmp.eq.s32.totalorder %s95, 1
      %p785 = scmp.ne.s32.totalorder %s780, %s782
      %p786 = scmp.eq.s32.totalorder %s95, 0
      %p787 = por %p785, %p786
      %p788 = scmp.ne.s32.totalorder %s780, %s782
      %p789 = scmp.eq.s32.totalorder %s100, 1
      %p790 = por %p788, %p789
      %p791 = scmp.ne.s32.totalorder %s782, %s783
      %p792 = scmp.eq.s32.totalorder %s100, 0
      %p793 = por %p791, %p792
      %p794 = scmp.ne.s32.totalorder %s782, %s783
      %p795 = scmp.eq.s32.totalorder %s101, 1
      %p796 = por %p794, %p795
      %p798 = scmp.ne.s32.totalorder %s783, %s797
      %p799 = scmp.eq.s32.totalorder %s101, 0
      %p800 = por %p798, %p799
      %s802 = sadd.s32 %s801, 1
      %p805 = scmp.eq.s32.totalorder %s95, 1
      %p806 = scmp.ne.s32.totalorder %s801, %s803
      %p807 = scmp.eq.s32.totalorder %s95, 0
      %p808 = por %p806, %p807
      %p809 = scmp.ne.s32.totalorder %s801, %s803
      %p810 = scmp.eq.s32.totalorder %s100, 1
      %p811 = por %p809, %p810
      %p812 = scmp.ne.s32.totalorder %s803, %s804
      %p813 = scmp.eq.s32.totalorder %s100, 0
      %p814 = por %p812, %p813
      %p815 = scmp.ne.s32.totalorder %s803, %s804
      %p816 = scmp.eq.s32.totalorder %s101, 1
      %p817 = por %p815, %p816
      %p819 = scmp.ne.s32.totalorder %s804, %s818
      %p820 = scmp.eq.s32.totalorder %s101, 0
      %p821 = por %p819, %p820
      %s823 = sadd.s32 %s822, 1
      %p826 = scmp.eq.s32.totalorder %s95, 1
      %p827 = scmp.ne.s32.totalorder %s822, %s824
      %p828 = scmp.eq.s32.totalorder %s95, 0
      %p829 = por %p827, %p828
      %p830 = scmp.ne.s32.totalorder %s822, %s824
      %p831 = scmp.eq.s32.totalorder %s100, 1
      %p832 = por %p830, %p831
      %p833 = scmp.ne.s32.totalorder %s824, %s825
      %p834 = scmp.eq.s32.totalorder %s100, 0
      %p835 = por %p833, %p834
      %p836 = scmp.ne.s32.totalorder %s824, %s825
      %p837 = scmp.eq.s32.totalorder %s101, 1
      %p838 = por %p836, %p837
      %p840 = scmp.ne.s32.totalorder %s825, %s839
      %p841 = scmp.eq.s32.totalorder %s101, 0
      %p842 = por %p840, %p841
      %s844 = sadd.s32 %s843, 1
      %p847 = scmp.eq.s32.totalorder %s95, 1
      %p848 = scmp.ne.s32.totalorder %s843, %s845
      %p849 = scmp.eq.s32.totalorder %s95, 0
      %p850 = por %p848, %p849
      %p851 = scmp.ne.s32.totalorder %s843, %s845
      %p852 = scmp.eq.s32.totalorder %s100, 1
      %p853 = por %p851, %p852
      %p854 = scmp.ne.s32.totalorder %s845, %s846
      %p855 = scmp.eq.s32.totalorder %s100, 0
      %p856 = por %p854, %p855
      %p857 = scmp.ne.s32.totalorder %s845, %s846
      %p858 = scmp.eq.s32.totalorder %s101, 1
      %p859 = por %p857, %p858
      %p861 = scmp.ne.s32.totalorder %s846, %s860
      %p862 = scmp.eq.s32.totalorder %s101, 0
      %p863 = por %p861, %p862
      %s865 = sadd.s32 %s864, 1
      %p868 = scmp.eq.s32.totalorder %s95, 1
      %p869 = scmp.ne.s32.totalorder %s864, %s866
      %p870 = scmp.eq.s32.totalorder %s95, 0
      %p871 = por %p869, %p870
      %p872 = scmp.ne.s32.totalorder %s864, %s866
      %p873 = scmp.eq.s32.totalorder %s100, 1
      %p874 = por %p872, %p873
      %p875 = scmp.ne.s32.totalorder %s866, %s867
      %p876 = scmp.eq.s32.totalorder %s100, 0
      %p877 = por %p875, %p876
      %p878 = scmp.ne.s32.totalorder %s866, %s867
      %p879 = scmp.eq.s32.totalorder %s101, 1
      %p880 = por %p878, %p879
      %p882 = scmp.ne.s32.totalorder %s867, %s881
      %p883 = scmp.eq.s32.totalorder %s101, 0
      %p884 = por %p882, %p883
      %s885 = ssub.s32 %s95, %s102
      %p886 = scmp.eq.s32.totalorder %s885, 0
      %s888 = sadd.s32 %s887, 1
      %s889 = scalar_select %p886, %s887, %s888
      %p892 = pneg %p886
      %p893 = scmp.eq.s32.totalorder %s95, 1
      %p894 = por %p892, %p893
      %p895 = scmp.ne.s32.totalorder %s887, %s890
      %p896 = scmp.eq.s32.totalorder %s95, 0
      %p897 = por %p895, %p896
      %p898 = scmp.ne.s32.totalorder %s887, %s890
      %p899 = scmp.eq.s32.totalorder %s100, 1
      %p900 = por %p898, %p899
      %p901 = scmp.ne.s32.totalorder %s890, %s891
      %p902 = scmp.eq.s32.totalorder %s100, 0
      %p903 = por %p901, %p902
      %p904 = scmp.ne.s32.totalorder %s890, %s891
      %p905 = scmp.eq.s32.totalorder %s101, 1
      %p906 = por %p904, %p905
      %p908 = scmp.ne.s32.totalorder %s891, %s907
      %p909 = scmp.eq.s32.totalorder %s101, 0
      %p910 = por %p908, %p909
      %p911 = scmp.le.s32.totalorder 1, %s95
      %p912 = scmp.lt.s32.totalorder %s95, 3
      %p913 = pnand %p911, %p912
      %p914 = pneg %p913
      // Predicated region
      $region9: #{tpu_custom_call.1} parent=5 // pred_check
        _
      $region10: #{tpu_custom_call.1} parent=5 // pred_check_branch
        %916 = sbr.rel (%p913) target = $region12
      $region11: #{tpu_custom_call.1} parent=5 // pred_region
        %s917 = ssub.s32 %s95, 1
        // Predicated region
        $region13: #{tpu_custom_call.1} parent=11 // pred_check
          %p918 = pneg %p142
        $region14: #{tpu_custom_call.1} parent=11 // pred_check_branch
          %920 = sbr.rel (%p918) target = $region16
        $region15: #{tpu_custom_call.1} parent=11 // pred_region
          _
        $region16: #{tpu_custom_call.1} parent=11 // pred_fallthru
          _
        // Predicated region
        $region17: #{tpu_custom_call.1} parent=11 // pred_check
          %p921 = pneg %p163
        $region18: #{tpu_custom_call.1} parent=11 // pred_check_branch
          %923 = sbr.rel (%p921) target = $region20
        $region19: #{tpu_custom_call.1} parent=11 // pred_region
          _
        $region20: #{tpu_custom_call.1} parent=11 // pred_fallthru
          _
        // Predicated region
        $region21: #{tpu_custom_call.1} parent=11 // pred_check
          %p924 = pneg %p184
        $region22: #{tpu_custom_call.1} parent=11 // pred_check_branch
          %926 = sbr.rel (%p924) target = $region24
        $region23: #{tpu_custom_call.1} parent=11 // pred_region
          %928 = vsyncadd [#allocation5], 0
          %s929 = sshll.u32 %s7, 4
          %s930 = int_to_ptr.hbm [resolvable:$true] %s929
          %s931 = sshll.u32 [#allocation4], 4
          %s932 = int_to_ptr.vmem [resolvable:$true] %s931
          %937 = dma.hbm_to_vmem [thread:$0]  %s930, 1024, %s932, [#allocation5], 64, 64, 4
        $region24: #{tpu_custom_call.1} parent=11 // pred_fallthru
          _
        // Predicated region
        $region25: #{tpu_custom_call.1} parent=11 // pred_check
          %p938 = pneg %p205
        $region26: #{tpu_custom_call.1} parent=11 // pred_check_branch
          %940 = sbr.rel (%p938) target = $region28
        $region27: #{tpu_custom_call.1} parent=11 // pred_region
          _
        $region28: #{tpu_custom_call.1} parent=11 // pred_fallthru
          _
        // Predicated region
        $region29: #{tpu_custom_call.1} parent=11 // pred_check
          %p941 = pneg %p226
        $region30: #{tpu_custom_call.1} parent=11 // pred_check_branch
          %943 = sbr.rel (%p941) target = $region32
        $region31: #{tpu_custom_call.1} parent=11 // pred_region
          %945 = vsyncadd [#allocation8], 0
          %s946 = sshll.u32 %s11, 4
          %s947 = int_to_ptr.hbm [resolvable:$true] %s946
          %s948 = sshll.u32 [#allocation7], 4
          %s949 = int_to_ptr.vmem [resolvable:$true] %s948
          %954 = dma.hbm_to_vmem [thread:$0]  %s947, 1024, %s949, [#allocation8], 64, 64, 4
        $region32: #{tpu_custom_call.1} parent=11 // pred_fallthru
          _
        // Predicated region
        $region33: #{tpu_custom_call.1} parent=11 // pred_check
          %p955 = pneg %p247
        $region34: #{tpu_custom_call.1} parent=11 // pred_check_branch
          %957 = sbr.rel (%p955) target = $region36
        $region35: #{tpu_custom_call.1} parent=11 // pred_region
          %959 = vsyncadd [#allocation8], 0
          %s960 = sshll.u32 %s13, 4
          %s961 = int_to_ptr.hbm [resolvable:$true] %s960
          %s962 = sshll.u32 [#allocation9], 4
          %s963 = int_to_ptr.vmem [resolvable:$true] %s962
          %968 = dma.hbm_to_vmem [thread:$0]  %s961, 1024, %s963, [#allocation8], 64, 64, 4
        $region36: #{tpu_custom_call.1} parent=11 // pred_fallthru
          _
        // Predicated region
        $region37: #{tpu_custom_call.1} parent=11 // pred_check
          %p969 = pneg %p268
        $region38: #{tpu_custom_call.1} parent=11 // pred_check_branch
          %971 = sbr.rel (%p969) target = $region40
        $region39: #{tpu_custom_call.1} parent=11 // pred_region
          _
        $region40: #{tpu_custom_call.1} parent=11 // pred_fallthru
          _
        // Predicated region
        $region41: #{tpu_custom_call.1} parent=11 // pred_check
          %p972 = pneg %p289
        $region42: #{tpu_custom_call.1} parent=11 // pred_check_branch
          %974 = sbr.rel (%p972) target = $region44
        $region43: #{tpu_custom_call.1} parent=11 // pred_region
          %976 = vsyncadd [#allocation11], 0
          %s977 = sshll.u32 %s17, 4
          %s978 = int_to_ptr.hbm [resolvable:$true] %s977
          %s979 = sshll.u32 [#allocation10], 4
          %s980 = int_to_ptr.vmem [resolvable:$true] %s979
          %985 = dma.hbm_to_vmem [thread:$0]  %s978, 1024, %s980, [#allocation11], 64, 64, 4
        $region44: #{tpu_custom_call.1} parent=11 // pred_fallthru
          _
        // Predicated region
        $region45: #{tpu_custom_call.1} parent=11 // pred_check
          %p986 = pneg %p310
        $region46: #{tpu_custom_call.1} parent=11 // pred_check_branch
          %988 = sbr.rel (%p986) target = $region48
        $region47: #{tpu_custom_call.1} parent=11 // pred_region
          _
        $region48: #{tpu_custom_call.1} parent=11 // pred_fallthru
          _
        // Predicated region
        $region49: #{tpu_custom_call.1} parent=11 // pred_check
          %p989 = pneg %p331
        $region50: #{tpu_custom_call.1} parent=11 // pred_check_branch
          %991 = sbr.rel (%p989) target = $region52
        $region51: #{tpu_custom_call.1} parent=11 // pred_region
          %993 = vsyncadd [#allocation11], 0
          %s994 = sshll.u32 %s21, 4
          %s995 = int_to_ptr.hbm [resolvable:$true] %s994
          %s996 = sshll.u32 [#allocation12], 4
          %s997 = int_to_ptr.vmem [resolvable:$true] %s996
          %1002 = dma.hbm_to_vmem [thread:$0]  %s995, 1024, %s997, [#allocation11], 64, 64, 4
        $region52: #{tpu_custom_call.1} parent=11 // pred_fallthru
          _
        // Predicated region
        $region53: #{tpu_custom_call.1} parent=11 // pred_check
          %p1003 = pneg %p352
        $region54: #{tpu_custom_call.1} parent=11 // pred_check_branch
          %1005 = sbr.rel (%p1003) target = $region56
        $region55: #{tpu_custom_call.1} parent=11 // pred_region
          %1007 = vsyncadd [#allocation14], 0
          %s1008 = sshll.u32 %s23, 4
          %s1009 = int_to_ptr.hbm [resolvable:$true] %s1008
          %s1010 = sshll.u32 [#allocation13], 4
          %s1011 = int_to_ptr.vmem [resolvable:$true] %s1010
          %1016 = dma.hbm_to_vmem [thread:$0]  %s1009, 1024, %s1011, [#allocation14], 64, 64, 4
        $region56: #{tpu_custom_call.1} parent=11 // pred_fallthru
          _
        // Predicated region
        $region57: #{tpu_custom_call.1} parent=11 // pred_check
          %p1017 = pneg %p373
        $region58: #{tpu_custom_call.1} parent=11 // pred_check_branch
          %1019 = sbr.rel (%p1017) target = $region60
        $region59: #{tpu_custom_call.1} parent=11 // pred_region
          _
        $region60: #{tpu_custom_call.1} parent=11 // pred_fallthru
          _
        // Predicated region
        $region61: #{tpu_custom_call.1} parent=11 // pred_check
          %p1020 = pneg %p394
        $region62: #{tpu_custom_call.1} parent=11 // pred_check_branch
          %1022 = sbr.rel (%p1020) target = $region64
        $region63: #{tpu_custom_call.1} parent=11 // pred_region
          %1024 = vsyncadd [#allocation14], 0
          %s1025 = sshll.u32 %s27, 4
          %s1026 = int_to_ptr.hbm [resolvable:$true] %s1025
          %s1027 = sshll.u32 [#allocation15], 4
          %s1028 = int_to_ptr.vmem [resolvable:$true] %s1027
          %1033 = dma.hbm_to_vmem [thread:$0]  %s1026, 1024, %s1028, [#allocation14], 64, 64, 4
        $region64: #{tpu_custom_call.1} parent=11 // pred_fallthru
          _
        // Predicated region
        $region65: #{tpu_custom_call.1} parent=11 // pred_check
          %p1034 = pneg %p415
        $region66: #{tpu_custom_call.1} parent=11 // pred_check_branch
          %1036 = sbr.rel (%p1034) target = $region68
        $region67: #{tpu_custom_call.1} parent=11 // pred_region
          %1038 = vsyncadd [#allocation17], 0
          %s1039 = sshll.u32 %s29, 4
          %s1040 = int_to_ptr.hbm [resolvable:$true] %s1039
          %s1041 = sshll.u32 [#allocation16], 4
          %s1042 = int_to_ptr.vmem [resolvable:$true] %s1041
          %1047 = dma.hbm_to_vmem [thread:$0]  %s1040, 1024, %s1042, [#allocation17], 64, 64, 4
        $region68: #{tpu_custom_call.1} parent=11 // pred_fallthru
          _
        // Predicated region
        $region69: #{tpu_custom_call.1} parent=11 // pred_check
          %p1048 = pneg %p436
        $region70: #{tpu_custom_call.1} parent=11 // pred_check_branch
          %1050 = sbr.rel (%p1048) target = $region72
        $region71: #{tpu_custom_call.1} parent=11 // pred_region
          _
        $region72: #{tpu_custom_call.1} parent=11 // pred_fallthru
          _
        // Predicated region
        $region73: #{tpu_custom_call.1} parent=11 // pred_check
          %p1051 = pneg %p457
        $region74: #{tpu_custom_call.1} parent=11 // pred_check_branch
          %1053 = sbr.rel (%p1051) target = $region76
        $region75: #{tpu_custom_call.1} parent=11 // pred_region
          %1055 = vsyncadd [#allocation17], 0
          %s1056 = sshll.u32 %s33, 4
          %s1057 = int_to_ptr.hbm [resolvable:$true] %s1056
          %s1058 = sshll.u32 [#allocation18], 4
          %s1059 = int_to_ptr.vmem [resolvable:$true] %s1058
          %1064 = dma.hbm_to_vmem [thread:$0]  %s1057, 1024, %s1059, [#allocation17], 64, 64, 4
        $region76: #{tpu_custom_call.1} parent=11 // pred_fallthru
          _
        // Predicated region
        $region77: #{tpu_custom_call.1} parent=11 // pred_check
          %p1065 = pneg %p478
        $region78: #{tpu_custom_call.1} parent=11 // pred_check_branch
          %1067 = sbr.rel (%p1065) target = $region80
        $region79: #{tpu_custom_call.1} parent=11 // pred_region
          _
        $region80: #{tpu_custom_call.1} parent=11 // pred_fallthru
          _
        // Predicated region
        $region81: #{tpu_custom_call.1} parent=11 // pred_check
          %p1068 = pneg %p499
        $region82: #{tpu_custom_call.1} parent=11 // pred_check_branch
          %1070 = sbr.rel (%p1068) target = $region84
        $region83: #{tpu_custom_call.1} parent=11 // pred_region
          %1072 = vsyncadd [#allocation20], 0
          %s1073 = sshll.u32 %s37, 4
          %s1074 = int_to_ptr.hbm [resolvable:$true] %s1073
          %s1075 = sshll.u32 [#allocation19], 4
          %s1076 = int_to_ptr.vmem [resolvable:$true] %s1075
          %1081 = dma.hbm_to_vmem [thread:$0]  %s1074, 1024, %s1076, [#allocation20], 64, 64, 4
        $region84: #{tpu_custom_call.1} parent=11 // pred_fallthru
          _
        // Predicated region
        $region85: #{tpu_custom_call.1} parent=11 // pred_check
          %p1082 = pneg %p520
        $region86: #{tpu_custom_call.1} parent=11 // pred_check_branch
          %1084 = sbr.rel (%p1082) target = $region88
        $region87: #{tpu_custom_call.1} parent=11 // pred_region
          %1086 = vsyncadd [#allocation20], 0
          %s1087 = sshll.u32 %s39, 4
          %s1088 = int_to_ptr.hbm [resolvable:$true] %s1087
          %s1089 = sshll.u32 [#allocation21], 4
          %s1090 = int_to_ptr.vmem [resolvable:$true] %s1089
          %1095 = dma.hbm_to_vmem [thread:$0]  %s1088, 1024, %s1090, [#allocation20], 64, 64, 4
        $region88: #{tpu_custom_call.1} parent=11 // pred_fallthru
          _
        // Predicated region
        $region89: #{tpu_custom_call.1} parent=11 // pred_check
          %p1096 = pneg %p541
        $region90: #{tpu_custom_call.1} parent=11 // pred_check_branch
          %1098 = sbr.rel (%p1096) target = $region92
        $region91: #{tpu_custom_call.1} parent=11 // pred_region
          _
        $region92: #{tpu_custom_call.1} parent=11 // pred_fallthru
          _
        // Predicated region
        $region93: #{tpu_custom_call.1} parent=11 // pred_check
          %p1099 = pneg %p562
        $region94: #{tpu_custom_call.1} parent=11 // pred_check_branch
          %1101 = sbr.rel (%p1099) target = $region96
        $region95: #{tpu_custom_call.1} parent=11 // pred_region
          %1103 = vsyncadd [#allocation23], 0
          %s1104 = sshll.u32 %s43, 4
          %s1105 = int_to_ptr.hbm [resolvable:$true] %s1104
          %s1106 = sshll.u32 [#allocation22], 4
          %s1107 = int_to_ptr.vmem [resolvable:$true] %s1106
          %1112 = dma.hbm_to_vmem [thread:$0]  %s1105, 1024, %s1107, [#allocation23], 64, 64, 4
        $region96: #{tpu_custom_call.1} parent=11 // pred_fallthru
          _
        // Predicated region
        $region97: #{tpu_custom_call.1} parent=11 // pred_check
          %p1113 = pneg %p583
        $region98: #{tpu_custom_call.1} parent=11 // pred_check_branch
          %1115 = sbr.rel (%p1113) target = $region100
        $region99: #{tpu_custom_call.1} parent=11 // pred_region
          %1117 = vsyncadd [#allocation23], 0
          %s1118 = sshll.u32 %s45, 4
          %s1119 = int_to_ptr.hbm [resolvable:$true] %s1118
          %s1120 = sshll.u32 [#allocation24], 4
          %s1121 = int_to_ptr.vmem [resolvable:$true] %s1120
          %1126 = dma.hbm_to_vmem [thread:$0]  %s1119, 1024, %s1121, [#allocation23], 64, 64, 4
        $region100: #{tpu_custom_call.1} parent=11 // pred_fallthru
          _
        // Predicated region
        $region101: #{tpu_custom_call.1} parent=11 // pred_check
          %p1127 = pneg %p604
        $region102: #{tpu_custom_call.1} parent=11 // pred_check_branch
          %1129 = sbr.rel (%p1127) target = $region104
        $region103: #{tpu_custom_call.1} parent=11 // pred_region
          _
        $region104: #{tpu_custom_call.1} parent=11 // pred_fallthru
          _
        // Predicated region
        $region105: #{tpu_custom_call.1} parent=11 // pred_check
          %p1130 = pneg %p625
        $region106: #{tpu_custom_call.1} parent=11 // pred_check_branch
          %1132 = sbr.rel (%p1130) target = $region108
        $region107: #{tpu_custom_call.1} parent=11 // pred_region
          %1134 = vsyncadd [#allocation26], 0
          %s1135 = sshll.u32 %s49, 4
          %s1136 = int_to_ptr.hbm [resolvable:$true] %s1135
          %s1137 = sshll.u32 [#allocation25], 4
          %s1138 = int_to_ptr.vmem [resolvable:$true] %s1137
          %1143 = dma.hbm_to_vmem [thread:$0]  %s1136, 1024, %s1138, [#allocation26], 64, 64, 4
        $region108: #{tpu_custom_call.1} parent=11 // pred_fallthru
          _
        // Predicated region
        $region109: #{tpu_custom_call.1} parent=11 // pred_check
          %p1144 = pneg %p646
        $region110: #{tpu_custom_call.1} parent=11 // pred_check_branch
          %1146 = sbr.rel (%p1144) target = $region112
        $region111: #{tpu_custom_call.1} parent=11 // pred_region
          _
        $region112: #{tpu_custom_call.1} parent=11 // pred_fallthru
          _
        // Predicated region
        $region113: #{tpu_custom_call.1} parent=11 // pred_check
          %p1147 = pneg %p667
        $region114: #{tpu_custom_call.1} parent=11 // pred_check_branch
          %1149 = sbr.rel (%p1147) target = $region116
        $region115: #{tpu_custom_call.1} parent=11 // pred_region
          %1151 = vsyncadd [#allocation26], 0
          %s1152 = sshll.u32 %s53, 4
          %s1153 = int_to_ptr.hbm [resolvable:$true] %s1152
          %s1154 = sshll.u32 [#allocation27], 4
          %s1155 = int_to_ptr.vmem [resolvable:$true] %s1154
          %1160 = dma.hbm_to_vmem [thread:$0]  %s1153, 1024, %s1155, [#allocation26], 64, 64, 4
        $region116: #{tpu_custom_call.1} parent=11 // pred_fallthru
          _
        // Predicated region
        $region117: #{tpu_custom_call.1} parent=11 // pred_check
          %p1161 = pneg %p688
        $region118: #{tpu_custom_call.1} parent=11 // pred_check_branch
          %1163 = sbr.rel (%p1161) target = $region120
        $region119: #{tpu_custom_call.1} parent=11 // pred_region
          %1165 = vsyncadd [#allocation29], 0
          %s1166 = sshll.u32 %s55, 4
          %s1167 = int_to_ptr.hbm [resolvable:$true] %s1166
          %s1168 = sshll.u32 [#allocation28], 4
          %s1169 = int_to_ptr.vmem [resolvable:$true] %s1168
          %1174 = dma.hbm_to_vmem [thread:$0]  %s1167, 1024, %s1169, [#allocation29], 64, 64, 4
        $region120: #{tpu_custom_call.1} parent=11 // pred_fallthru
          _
        // Predicated region
        $region121: #{tpu_custom_call.1} parent=11 // pred_check
          %p1175 = pneg %p709
        $region122: #{tpu_custom_call.1} parent=11 // pred_check_branch
          %1177 = sbr.rel (%p1175) target = $region124
        $region123: #{tpu_custom_call.1} parent=11 // pred_region
          _
        $region124: #{tpu_custom_call.1} parent=11 // pred_fallthru
          _
        // Predicated region
        $region125: #{tpu_custom_call.1} parent=11 // pred_check
          %p1178 = pneg %p730
        $region126: #{tpu_custom_call.1} parent=11 // pred_check_branch
          %1180 = sbr.rel (%p1178) target = $region128
        $region127: #{tpu_custom_call.1} parent=11 // pred_region
          %1182 = vsyncadd [#allocation29], 0
          %s1183 = sshll.u32 %s59, 4
          %s1184 = int_to_ptr.hbm [resolvable:$true] %s1183
          %s1185 = sshll.u32 [#allocation30], 4
          %s1186 = int_to_ptr.vmem [resolvable:$true] %s1185
          %1191 = dma.hbm_to_vmem [thread:$0]  %s1184, 1024, %s1186, [#allocation29], 64, 64, 4
        $region128: #{tpu_custom_call.1} parent=11 // pred_fallthru
          _
        // Predicated region
        $region129: #{tpu_custom_call.1} parent=11 // pred_check
          %p1192 = pneg %p751
        $region130: #{tpu_custom_call.1} parent=11 // pred_check_branch
          %1194 = sbr.rel (%p1192) target = $region132
        $region131: #{tpu_custom_call.1} parent=11 // pred_region
          %1196 = vsyncadd [#allocation32], 0
          %s1197 = sshll.u32 %s61, 4
          %s1198 = int_to_ptr.hbm [resolvable:$true] %s1197
          %s1199 = sshll.u32 [#allocation31], 4
          %s1200 = int_to_ptr.vmem [resolvable:$true] %s1199
          %1205 = dma.hbm_to_vmem [thread:$0]  %s1198, 1024, %s1200, [#allocation32], 64, 64, 4
        $region132: #{tpu_custom_call.1} parent=11 // pred_fallthru
          _
        // Predicated region
        $region133: #{tpu_custom_call.1} parent=11 // pred_check
          %p1206 = pneg %p772
        $region134: #{tpu_custom_call.1} parent=11 // pred_check_branch
          %1208 = sbr.rel (%p1206) target = $region136
        $region135: #{tpu_custom_call.1} parent=11 // pred_region
          _
        $region136: #{tpu_custom_call.1} parent=11 // pred_fallthru
          _
        // Predicated region
        $region137: #{tpu_custom_call.1} parent=11 // pred_check
          %p1209 = pneg %p793
        $region138: #{tpu_custom_call.1} parent=11 // pred_check_branch
          %1211 = sbr.rel (%p1209) target = $region140
        $region139: #{tpu_custom_call.1} parent=11 // pred_region
          %1213 = vsyncadd [#allocation32], 0
          %s1214 = sshll.u32 %s65, 4
          %s1215 = int_to_ptr.hbm [resolvable:$true] %s1214
          %s1216 = sshll.u32 [#allocation33], 4
          %s1217 = int_to_ptr.vmem [resolvable:$true] %s1216
          %1222 = dma.hbm_to_vmem [thread:$0]  %s1215, 1024, %s1217, [#allocation32], 64, 64, 4
        $region140: #{tpu_custom_call.1} parent=11 // pred_fallthru
          _
        // Predicated region
        $region141: #{tpu_custom_call.1} parent=11 // pred_check
          %p1223 = pneg %p814
        $region142: #{tpu_custom_call.1} parent=11 // pred_check_branch
          %1225 = sbr.rel (%p1223) target = $region144
        $region143: #{tpu_custom_call.1} parent=11 // pred_region
          _
        $region144: #{tpu_custom_call.1} parent=11 // pred_fallthru
          _
        // Predicated region
        $region145: #{tpu_custom_call.1} parent=11 // pred_check
          %p1226 = pneg %p835
        $region146: #{tpu_custom_call.1} parent=11 // pred_check_branch
          %1228 = sbr.rel (%p1226) target = $region148
        $region147: #{tpu_custom_call.1} parent=11 // pred_region
          %1230 = vsyncadd [#allocation35], 0
          %s1231 = sshll.u32 %s69, 4
          %s1232 = int_to_ptr.hbm [resolvable:$true] %s1231
          %s1233 = sshll.u32 [#allocation34], 4
          %s1234 = int_to_ptr.vmem [resolvable:$true] %s1233
          %1239 = dma.hbm_to_vmem [thread:$0]  %s1232, 1024, %s1234, [#allocation35], 64, 64, 4
        $region148: #{tpu_custom_call.1} parent=11 // pred_fallthru
          _
        // Predicated region
        $region149: #{tpu_custom_call.1} parent=11 // pred_check
          %p1240 = pneg %p856
        $region150: #{tpu_custom_call.1} parent=11 // pred_check_branch
          %1242 = sbr.rel (%p1240) target = $region152
        $region151: #{tpu_custom_call.1} parent=11 // pred_region
          %1244 = vsyncadd [#allocation35], 0
          %s1245 = sshll.u32 %s71, 4
          %s1246 = int_to_ptr.hbm [resolvable:$true] %s1245
          %s1247 = sshll.u32 [#allocation36], 4
          %s1248 = int_to_ptr.vmem [resolvable:$true] %s1247
          %1253 = dma.hbm_to_vmem [thread:$0]  %s1246, 1024, %s1248, [#allocation35], 64, 64, 4
        $region152: #{tpu_custom_call.1} parent=11 // pred_fallthru
          _
        // Predicated region
        $region153: #{tpu_custom_call.1} parent=11 // pred_check
          %p1254 = pneg %p877
        $region154: #{tpu_custom_call.1} parent=11 // pred_check_branch
          %1256 = sbr.rel (%p1254) target = $region156
        $region155: #{tpu_custom_call.1} parent=11 // pred_region
          _
        $region156: #{tpu_custom_call.1} parent=11 // pred_fallthru
          _
      $region12: #{tpu_custom_call.1} parent=5 // pred_fallthru
        _
      %p1257 = scmp.lt.s32.totalorder %s95, 2
      // Predicated region
      $region157: #{tpu_custom_call.1} parent=5 // pred_check
        %p1258 = pneg %p1257
      $region158: #{tpu_custom_call.1} parent=5 // pred_check_branch
        %1260 = sbr.rel (%p1258) target = $region160
      $region159: #{tpu_custom_call.1} parent=5 // pred_region
        // Predicated region
        $region161: #{tpu_custom_call.1} parent=159 // pred_check
          %p1261 = pneg %p115
        $region162: #{tpu_custom_call.1} parent=159 // pred_check_branch
          %1263 = sbr.rel (%p1261) target = $region164
        $region163: #{tpu_custom_call.1} parent=159 // pred_region
          %s1264 = smul.u32 2, %s95
          %p1265 = scmp.lt.s32.totalorder %s1264, 3
          %s1266 = scalar_select %p1265, %s1264, 3
          %s1267 = smul.addr %s1266, 2
          %s1268 = smul.addr %s1267, 8
          %s1269 = scalar_lea.vmem %s1, %s1268
          %s1270 = smul.u32 2, %s95
        $region164: #{tpu_custom_call.1} parent=159 // pred_fallthru
          _
      $region160: #{tpu_custom_call.1} parent=5 // pred_fallthru
        _
      %p1271 = scmp.le.s32.totalorder 1, %s95
      %p1272 = scmp.lt.s32.totalorder %s95, 3
      %p1273 = pnand %p1271, %p1272
      %p1274 = pneg %p1273
      // Predicated region
      $region165: #{tpu_custom_call.1} parent=5 // pred_check
        _
      $region166: #{tpu_custom_call.1} parent=5 // pred_check_branch
        %1276 = sbr.rel (%p1273) target = $region168
      $region167: #{tpu_custom_call.1} parent=5 // pred_region
        %s1277 = ssub.s32 %s95, 1
        // Predicated region
        $region169: #{tpu_custom_call.1} parent=167 // pred_check
          %p1278 = pneg %p184
        $region170: #{tpu_custom_call.1} parent=167 // pred_check_branch
          %1280 = sbr.rel (%p1278) target = $region172
        $region171: #{tpu_custom_call.1} parent=167 // pred_region
          %1282 = dma.done [#allocation5], 1024
        $region172: #{tpu_custom_call.1} parent=167 // pred_fallthru
          _
        // Predicated region
        $region173: #{tpu_custom_call.1} parent=167 // pred_check
          %p1283 = pneg %p226
        $region174: #{tpu_custom_call.1} parent=167 // pred_check_branch
          %1285 = sbr.rel (%p1283) target = $region176
        $region175: #{tpu_custom_call.1} parent=167 // pred_region
          %1287 = dma.done [#allocation8], 1024
        $region176: #{tpu_custom_call.1} parent=167 // pred_fallthru
          _
        // Predicated region
        $region177: #{tpu_custom_call.1} parent=167 // pred_check
          %p1288 = pneg %p247
        $region178: #{tpu_custom_call.1} parent=167 // pred_check_branch
          %1290 = sbr.rel (%p1288) target = $region180
        $region179: #{tpu_custom_call.1} parent=167 // pred_region
          %1292 = dma.done [#allocation8], 1024
        $region180: #{tpu_custom_call.1} parent=167 // pred_fallthru
          _
        // Predicated region
        $region181: #{tpu_custom_call.1} parent=167 // pred_check
          %p1293 = pneg %p289
        $region182: #{tpu_custom_call.1} parent=167 // pred_check_branch
          %1295 = sbr.rel (%p1293) target = $region184
        $region183: #{tpu_custom_call.1} parent=167 // pred_region
          %1297 = dma.done [#allocation11], 1024
        $region184: #{tpu_custom_call.1} parent=167 // pred_fallthru
          _
        // Predicated region
        $region185: #{tpu_custom_call.1} parent=167 // pred_check
          %p1298 = pneg %p331
        $region186: #{tpu_custom_call.1} parent=167 // pred_check_branch
          %1300 = sbr.rel (%p1298) target = $region188
        $region187: #{tpu_custom_call.1} parent=167 // pred_region
          %1302 = dma.done [#allocation11], 1024
        $region188: #{tpu_custom_call.1} parent=167 // pred_fallthru
          _
        // Predicated region
        $region189: #{tpu_custom_call.1} parent=167 // pred_check
          %p1303 = pneg %p352
        $region190: #{tpu_custom_call.1} parent=167 // pred_check_branch
          %1305 = sbr.rel (%p1303) target = $region192
        $region191: #{tpu_custom_call.1} parent=167 // pred_region
          %1307 = dma.done [#allocation14], 1024
        $region192: #{tpu_custom_call.1} parent=167 // pred_fallthru
          _
        // Predicated region
        $region193: #{tpu_custom_call.1} parent=167 // pred_check
          %p1308 = pneg %p394
        $region194: #{tpu_custom_call.1} parent=167 // pred_check_branch
          %1310 = sbr.rel (%p1308) target = $region196
        $region195: #{tpu_custom_call.1} parent=167 // pred_region
          %1312 = dma.done [#allocation14], 1024
        $region196: #{tpu_custom_call.1} parent=167 // pred_fallthru
          _
        // Predicated region
        $region197: #{tpu_custom_call.1} parent=167 // pred_check
          %p1313 = pneg %p415
        $region198: #{tpu_custom_call.1} parent=167 // pred_check_branch
          %1315 = sbr.rel (%p1313) target = $region200
        $region199: #{tpu_custom_call.1} parent=167 // pred_region
          %1317 = dma.done [#allocation17], 1024
        $region200: #{tpu_custom_call.1} parent=167 // pred_fallthru
          _
        // Predicated region
        $region201: #{tpu_custom_call.1} parent=167 // pred_check
          %p1318 = pneg %p457
        $region202: #{tpu_custom_call.1} parent=167 // pred_check_branch
          %1320 = sbr.rel (%p1318) target = $region204
        $region203: #{tpu_custom_call.1} parent=167 // pred_region
          %1322 = dma.done [#allocation17], 1024
        $region204: #{tpu_custom_call.1} parent=167 // pred_fallthru
          _
        // Predicated region
        $region205: #{tpu_custom_call.1} parent=167 // pred_check
          %p1323 = pneg %p499
        $region206: #{tpu_custom_call.1} parent=167 // pred_check_branch
          %1325 = sbr.rel (%p1323) target = $region208
        $region207: #{tpu_custom_call.1} parent=167 // pred_region
          %1327 = dma.done [#allocation20], 1024
        $region208: #{tpu_custom_call.1} parent=167 // pred_fallthru
          _
        // Predicated region
        $region209: #{tpu_custom_call.1} parent=167 // pred_check
          %p1328 = pneg %p520
        $region210: #{tpu_custom_call.1} parent=167 // pred_check_branch
          %1330 = sbr.rel (%p1328) target = $region212
        $region211: #{tpu_custom_call.1} parent=167 // pred_region
          %1332 = dma.done [#allocation20], 1024
        $region212: #{tpu_custom_call.1} parent=167 // pred_fallthru
          _
        // Predicated region
        $region213: #{tpu_custom_call.1} parent=167 // pred_check
          %p1333 = pneg %p562
        $region214: #{tpu_custom_call.1} parent=167 // pred_check_branch
          %1335 = sbr.rel (%p1333) target = $region216
        $region215: #{tpu_custom_call.1} parent=167 // pred_region
          %1337 = dma.done [#allocation23], 1024
        $region216: #{tpu_custom_call.1} parent=167 // pred_fallthru
          _
        // Predicated region
        $region217: #{tpu_custom_call.1} parent=167 // pred_check
          %p1338 = pneg %p583
        $region218: #{tpu_custom_call.1} parent=167 // pred_check_branch
          %1340 = sbr.rel (%p1338) target = $region220
        $region219: #{tpu_custom_call.1} parent=167 // pred_region
          %1342 = dma.done [#allocation23], 1024
        $region220: #{tpu_custom_call.1} parent=167 // pred_fallthru
          _
        // Predicated region
        $region221: #{tpu_custom_call.1} parent=167 // pred_check
          %p1343 = pneg %p625
        $region222: #{tpu_custom_call.1} parent=167 // pred_check_branch
          %1345 = sbr.rel (%p1343) target = $region224
        $region223: #{tpu_custom_call.1} parent=167 // pred_region
          %1347 = dma.done [#allocation26], 1024
        $region224: #{tpu_custom_call.1} parent=167 // pred_fallthru
          _
        // Predicated region
        $region225: #{tpu_custom_call.1} parent=167 // pred_check
          %p1348 = pneg %p667
        $region226: #{tpu_custom_call.1} parent=167 // pred_check_branch
          %1350 = sbr.rel (%p1348) target = $region228
        $region227: #{tpu_custom_call.1} parent=167 // pred_region
          %1352 = dma.done [#allocation26], 1024
        $region228: #{tpu_custom_call.1} parent=167 // pred_fallthru
          _
        // Predicated region
        $region229: #{tpu_custom_call.1} parent=167 // pred_check
          %p1353 = pneg %p688
        $region230: #{tpu_custom_call.1} parent=167 // pred_check_branch
          %1355 = sbr.rel (%p1353) target = $region232
        $region231: #{tpu_custom_call.1} parent=167 // pred_region
          %1357 = dma.done [#allocation29], 1024
        $region232: #{tpu_custom_call.1} parent=167 // pred_fallthru
          _
        // Predicated region
        $region233: #{tpu_custom_call.1} parent=167 // pred_check
          %p1358 = pneg %p730
        $region234: #{tpu_custom_call.1} parent=167 // pred_check_branch
          %1360 = sbr.rel (%p1358) target = $region236
        $region235: #{tpu_custom_call.1} parent=167 // pred_region
          %1362 = dma.done [#allocation29], 1024
        $region236: #{tpu_custom_call.1} parent=167 // pred_fallthru
          _
        // Predicated region
        $region237: #{tpu_custom_call.1} parent=167 // pred_check
          %p1363 = pneg %p751
        $region238: #{tpu_custom_call.1} parent=167 // pred_check_branch
          %1365 = sbr.rel (%p1363) target = $region240
        $region239: #{tpu_custom_call.1} parent=167 // pred_region
          %1367 = dma.done [#allocation32], 1024
        $region240: #{tpu_custom_call.1} parent=167 // pred_fallthru
          _
        // Predicated region
        $region241: #{tpu_custom_call.1} parent=167 // pred_check
          %p1368 = pneg %p793
        $region242: #{tpu_custom_call.1} parent=167 // pred_check_branch
          %1370 = sbr.rel (%p1368) target = $region244
        $region243: #{tpu_custom_call.1} parent=167 // pred_region
          %1372 = dma.done [#allocation32], 1024
        $region244: #{tpu_custom_call.1} parent=167 // pred_fallthru
          _
        // Predicated region
        $region245: #{tpu_custom_call.1} parent=167 // pred_check
          %p1373 = pneg %p835
        $region246: #{tpu_custom_call.1} parent=167 // pred_check_branch
          %1375 = sbr.rel (%p1373) target = $region248
        $region247: #{tpu_custom_call.1} parent=167 // pred_region
          %1377 = dma.done [#allocation35], 1024
        $region248: #{tpu_custom_call.1} parent=167 // pred_fallthru
          _
        // Predicated region
        $region249: #{tpu_custom_call.1} parent=167 // pred_check
          %p1378 = pneg %p856
        $region250: #{tpu_custom_call.1} parent=167 // pred_check_branch
          %1380 = sbr.rel (%p1378) target = $region252
        $region251: #{tpu_custom_call.1} parent=167 // pred_region
          %1382 = dma.done [#allocation35], 1024
        $region252: #{tpu_custom_call.1} parent=167 // pred_fallthru
          _
        %s1383 = smul.u32 2, %s100
        %p1384 = scmp.lt.s32.totalorder %s1383, 3
        %s1385 = scalar_select %p1384, %s1383, 3
        %s1386 = smul.addr %s1385, 2
        %s1387 = smul.addr %s1386, 8
        %s1388 = scalar_lea.vmem %s1, %s1387
        %p1389 = pneg %p121
        %p1390 = pneg %p118
        %p1391 = pneg %p142
        %p1392 = pneg %p139
        %p1393 = pneg %p163
        %p1394 = pneg %p160
        %p1395 = pneg %p184
        %p1396 = pneg %p181
        %p1397 = pneg %p205
        %p1398 = pneg %p202
        %p1399 = pneg %p226
        %p1400 = pneg %p223
        %p1401 = pneg %p247
        %p1402 = pneg %p244
        %p1403 = pneg %p268
        %p1404 = pneg %p265
        %p1405 = pneg %p289
        %p1406 = pneg %p286
        %p1407 = pneg %p310
        %p1408 = pneg %p307
        %p1409 = pneg %p331
        %p1410 = pneg %p328
        %p1411 = pneg %p352
        %p1412 = pneg %p349
        %p1413 = pneg %p373
        %p1414 = pneg %p370
        %p1415 = pneg %p394
        %p1416 = pneg %p391
        %p1417 = pneg %p415
        %p1418 = pneg %p412
        %p1419 = pneg %p436
        %p1420 = pneg %p433
        %p1421 = pneg %p457
        %p1422 = pneg %p454
        %p1423 = pneg %p478
        %p1424 = pneg %p475
        %p1425 = pneg %p499
        %p1426 = pneg %p496
        %p1427 = pneg %p520
        %p1428 = pneg %p517
        %p1429 = pneg %p541
        %p1430 = pneg %p538
        %p1431 = pneg %p562
        %p1432 = pneg %p559
        %p1433 = pneg %p583
        %p1434 = pneg %p580
        %p1435 = pneg %p604
        %p1436 = pneg %p601
        %p1437 = pneg %p625
        %p1438 = pneg %p622
        %p1439 = pneg %p646
        %p1440 = pneg %p643
        %p1441 = pneg %p667
        %p1442 = pneg %p664
        %p1443 = pneg %p688
        %p1444 = pneg %p685
        %p1445 = pneg %p709
        %p1446 = pneg %p706
        %p1447 = pneg %p730
        %p1448 = pneg %p727
        %p1449 = pneg %p751
        %p1450 = pneg %p748
        %p1451 = pneg %p772
        %p1452 = pneg %p769
        %p1453 = pneg %p793
        %p1454 = pneg %p790
        %p1455 = pneg %p814
        %p1456 = pneg %p811
        %p1457 = pneg %p835
        %p1458 = pneg %p832
        %p1459 = pneg %p856
        %p1460 = pneg %p853
        %p1461 = pneg %p877
        %p1462 = pneg %p874
        %p1463 = pneg %p903
        %p1464 = pneg %p900
        %s1465 = sand.u32 %s890, 1
        %s1466 = scalar_lea.sflag [#allocation6], %s1465
        %s1467 = sand.u32 %s890, 1
        %s1468 = smul.addr %s1467, 32
        %s1469 = scalar_lea.vmem [#allocation37], %s1468
        %s1470 = smul.u32 2, %s100
        %p1471 = scmp.lt.s32.totalorder %s1470, 3
        %s1472 = scalar_select %p1471, %s1470, 3
        %s1473 = smul.addr %s1472, 2
        %s1474 = smul.addr %s1473, 8
        %s1475 = scalar_lea.vmem %s1, %s1474
        %s1476 = smul.u32 2, %s100
        %s1477 = smul.u32 2, %s100
        %1479 = vst [vmem:[#allocation2] sm:$0xf] 0
        %1480 = vst [vmem:[#allocation2 + $0xc] sm:$0xf] 0
        %1481 = vst [vmem:[#allocation3 + $0x8] sm:$0xf] 0
        %1482 = vst [vmem:[#allocation3 + $0x14] sm:$0xf] 0
        %v1483 = vld [vmem:[%s3] sm:$0x3]
        %v1484 = vld [vmem:[%s1475] sm:$0xff]
        %v1485 = vld [vmem:[%s1475 + $0x8] sm:$0xff]
        %v1486 = vpack.c.bf16 %v1485, %v1484
        %vm1487 = vcmask 31744
        %v1489 = vsel %vm1487, %v1486, 0
        %vm1491 = vcmask 1041408
        %v1493 = vsel %vm1491, %v1483, 0
        %1495 = vmatpush.bf16.msra.mxu0 0
        %1496 = vmatpush.bf16.msra.mxu0 0
        %1497 = vmatpush.bf16.msra.mxu0 0
        %1498 = vmatpush.bf16.msra.mxu0 0
        %1499 = vmatpush.bf16.msra.mxu0 0
        %1500 = vmatpush.bf16.msra.mxu0 0
        %1501 = vmatpush.bf16.msra.mxu0 0
        %1502 = vmatpush.bf16.msra.mxu0 %v1493
        %1503 = vmatmul.bf16.gmra.mxu0 %v1489
        %v1504 = vpop.f32.mrf.mxu0
        %v1505 = vadd.f32 0.0, %v1504
        %v1506 = vpop.f32.mrf.mxu0
        %v1507 = vadd.f32 0.0, %v1506
        %1508 = vdwg.mxu0
        %s1509 = scalar_lea.vmem %s1475, 16
        %v1510 = vld [vmem:[%s1509] sm:$0xff]
        %v1511 = vld [vmem:[%s1509 + $0x8] sm:$0xff]
        %v1512 = vpack.c.bf16 %v1511, %v1510
        %v1514 = vsel %vm1487, %v1512, 0
        %1516 = vmatpush.bf16.msra.mxu0 0
        %1517 = vmatpush.bf16.msra.mxu0 0
        %1518 = vmatpush.bf16.msra.mxu0 0
        %1519 = vmatpush.bf16.msra.mxu0 0
        %1520 = vmatpush.bf16.msra.mxu0 0
        %1521 = vmatpush.bf16.msra.mxu0 0
        %1522 = vmatpush.bf16.msra.mxu0 0
        %1523 = vmatpush.bf16.msra.mxu0 %v1493
        %1524 = vmatmul.bf16.gmra.mxu0 %v1514
        %v1525 = vpop.f32.mrf.mxu0
        %v1526 = vadd.f32 0.0, %v1525
        %v1527 = vpop.f32.mrf.mxu0
        %v1528 = vadd.f32 0.0, %v1527
        %1529 = vdwg.mxu0
        %v1530 = vpack.c.bf16 %v1505, %v1505
        %v1531 = vpack.c.bf16 %v1507, %v1507
        %v1532 = vpack.c.bf16 %v1526, %v1526
        %v1533 = vpack.c.bf16 %v1528, %v1528
        %1534 = vst [vmem:[#allocation2 + $0x4] sm:$0xf] %v1530
        %1535 = vst [vmem:[#allocation2 + $0x8] sm:$0xf] %v1531
        %1536 = vst [vmem:[#allocation2 + $0x10] sm:$0xf] %v1532
        %1537 = vst [vmem:[#allocation2 + $0x14] sm:$0xf] %v1533
        %v1538 = vld [vmem:[#allocation4] sm:$0xf]
        %v1539 = vld [vmem:[#allocation4 + $0x4] sm:$0xf]
        %v1540 = vld [vmem:[#allocation4 + $0x8] sm:$0xf]
        %v1541 = vld [vmem:[#allocation4 + $0xc] sm:$0xf]
        %v1542 = vld [vmem:[#allocation4 + $0x10] sm:$0xf]
        %v1543 = vld [vmem:[#allocation4 + $0x14] sm:$0xf]
        %v1544 = vld [vmem:[#allocation4 + $0x18] sm:$0xf]
        %v1545 = vld [vmem:[#allocation4 + $0x1c] sm:$0xf]
        %v1546 = vld [vmem:[#allocation4 + $0x20] sm:$0xf]
        %v1547 = vld [vmem:[#allocation4 + $0x24] sm:$0xf]
        %v1548 = vld [vmem:[#allocation4 + $0x28] sm:$0xf]
        %v1549 = vld [vmem:[#allocation4 + $0x2c] sm:$0xf]
        %v1550 = vld [vmem:[#allocation4 + $0x30] sm:$0xf]
        %v1551 = vld [vmem:[#allocation4 + $0x34] sm:$0xf]
        %v1552 = vld [vmem:[#allocation4 + $0x38] sm:$0xf]
        %v1553 = vld [vmem:[#allocation4 + $0x3c] sm:$0xf]
        %v1554 = vld [vmem:[#allocation2] sm:$0x8]
        %v1555 = vld [vmem:[#allocation2 + $0x4] sm:$0xf]
        %v1556 = vld [vmem:[#allocation2 + $0x8] sm:$0xf]
        %v1557 = vld [vmem:[#allocation2 + $0xc] sm:$0x8]
        %v1558 = vld [vmem:[#allocation2 + $0x10] sm:$0xf]
        %v1559 = vld [vmem:[#allocation2 + $0x14] sm:$0xf]
        %vm1560 = vsmask.f32 256
        %vm1561 = vsmask.f32 4368
        %vm1562 = vmor %vm1560, %vm1561
        %v1564 = vshrl.u32 %v1554, 16
        %v1566 = vrot.slane %v1564, 7
        %v1567 = vrot.slane %v1566, 4
        %v1569 = vshrl.u32 %v1555, 16
        %v1571 = vrot.slane %v1569, 7
        %v1572 = vshll.u32 %v1555, 16
        %v1574 = vor.u32 %v1571, %v1572
        %v1575 = vsel %vm1562, %v1567, %v1574
        %v1576 = vrot.slane %v1571, 4
        %v1578 = vshrl.u32 %v1556, 16
        %v1580 = vrot.slane %v1578, 7
        %v1581 = vshll.u32 %v1556, 16
        %v1583 = vor.u32 %v1580, %v1581
        %v1584 = vsel %vm1562, %v1576, %v1583
        %v1586 = vshrl.u32 %v1557, 16
        %v1588 = vrot.slane %v1586, 7
        %v1589 = vrot.slane %v1588, 4
        %v1591 = vshrl.u32 %v1558, 16
        %v1593 = vrot.slane %v1591, 7
        %v1594 = vshll.u32 %v1558, 16
        %v1596 = vor.u32 %v1593, %v1594
        %v1597 = vsel %vm1562, %v1589, %v1596
        %v1598 = vrot.slane %v1593, 4
        %v1600 = vshrl.u32 %v1559, 16
        %v1602 = vrot.slane %v1600, 7
        %v1603 = vshll.u32 %v1559, 16
        %v1605 = vor.u32 %v1602, %v1603
        %v1606 = vsel %vm1562, %v1598, %v1605
        %v1607 = vld [vmem:[%s5] sm:$0xf]
        %v1608 = vld [vmem:[%s5 + $0x4] sm:$0xf]
        %v1609 = vld [vmem:[%s5 + $0x8] sm:$0xf]
        %v1610 = vld [vmem:[%s5 + $0xc] sm:$0xf]
        %v1611 = vld [vmem:[%s5 + $0x10] sm:$0xf]
        %v1612 = vld [vmem:[%s5 + $0x14] sm:$0xf]
        %v1613 = vld [vmem:[%s5 + $0x18] sm:$0xf]
        %v1614 = vld [vmem:[%s5 + $0x1c] sm:$0xf]
        %v1615 = vld [vmem:[%s5 + $0x20] sm:$0xf]
        %v1616 = vld [vmem:[%s5 + $0x24] sm:$0xf]
        %v1617 = vld [vmem:[%s5 + $0x28] sm:$0xf]
        %v1618 = vld [vmem:[%s5 + $0x2c] sm:$0xf]
        %v1619 = vld [vmem:[%s5 + $0x30] sm:$0xf]
        %v1620 = vld [vmem:[%s5 + $0x34] sm:$0xf]
        %v1621 = vld [vmem:[%s5 + $0x38] sm:$0xf]
        %v1622 = vld [vmem:[%s5 + $0x3c] sm:$0xf]
        %v1623 = vunpack.c.l.b16 %v1575
        %v1624 = vunpack.c.l.b16 %v1584
        %v1625 = vunpack.c.l.b16 %v1597
        %v1626 = vunpack.c.l.b16 %v1606
        %v1627 = vpack.c.b16 %v1624, %v1623
        %v1628 = vpack.c.b16 %v1626, %v1625
        %v1647 = vunpack.c.l.b16 %v1607
        %v1648 = vunpack.c.l.b16 %v1608
        %v1649 = vunpack.c.l.b16 %v1609
        %v1650 = vunpack.c.l.b16 %v1610
        %v1651 = vunpack.c.l.b16 %v1611
        %v1652 = vunpack.c.l.b16 %v1612
        %v1653 = vunpack.c.l.b16 %v1613
        %v1654 = vunpack.c.l.b16 %v1614
        %v1655 = vunpack.c.l.b16 %v1615
        %v1656 = vunpack.c.l.b16 %v1616
        %v1657 = vunpack.c.l.b16 %v1617
        %v1658 = vunpack.c.l.b16 %v1618
        %v1659 = vunpack.c.l.b16 %v1619
        %v1660 = vunpack.c.l.b16 %v1620
        %v1661 = vunpack.c.l.b16 %v1621
        %v1662 = vunpack.c.l.b16 %v1622
        %v1663 = vpack.c.b16 %v1648, %v1647
        %v1664 = vpack.c.b16 %v1650, %v1649
        %v1665 = vpack.c.b16 %v1652, %v1651
        %v1666 = vpack.c.b16 %v1654, %v1653
        %v1667 = vpack.c.b16 %v1656, %v1655
        %v1668 = vpack.c.b16 %v1658, %v1657
        %v1669 = vpack.c.b16 %v1660, %v1659
        %v1670 = vpack.c.b16 %v1662, %v1661
        %1679 = vmatpush.bf16.msra.mxu0 %v1670
        %1680 = vmatpush.bf16.msra.mxu0 %v1669
        %1681 = vmatpush.bf16.msra.mxu0 %v1668
        %1682 = vmatpush.bf16.msra.mxu0 %v1667
        %1683 = vmatpush.bf16.msra.mxu0 %v1666
        %1684 = vmatpush.bf16.msra.mxu0 %v1665
        %1685 = vmatpush.bf16.msra.mxu0 %v1664
        %1686 = vmatpush.bf16.msra.mxu0 %v1663
        %1687 = vmatmul.bf16.gmra.mxu0 %v1627
        %v1688 = vpop.f32.mrf.mxu0
        %v1689 = vadd.f32 0.0, %v1688
        %v1690 = vpop.f32.mrf.mxu0
        %v1691 = vadd.f32 0.0, %v1690
        %1692 = vmatmul.bf16.gmra.mxu0 %v1628
        %v1693 = vpop.f32.mrf.mxu0
        %v1694 = vadd.f32 0.0, %v1693
        %v1695 = vpop.f32.mrf.mxu0
        %v1696 = vadd.f32 0.0, %v1695
        %1697 = vdwg.mxu0
        %v1702 = vunpack.c.l.b16 %v1530
        %v1703 = vunpack.c.l.b16 %v1531
        %v1704 = vunpack.c.l.b16 %v1532
        %v1705 = vunpack.c.l.b16 %v1533
        %v1706 = vpack.c.b16 %v1703, %v1702
        %v1707 = vpack.c.b16 %v1705, %v1704
        %v1726 = vunpack.c.l.b16 %v1538
        %v1727 = vunpack.c.l.b16 %v1539
        %v1728 = vunpack.c.l.b16 %v1540
        %v1729 = vunpack.c.l.b16 %v1541
        %v1730 = vunpack.c.l.b16 %v1542
        %v1731 = vunpack.c.l.b16 %v1543
        %v1732 = vunpack.c.l.b16 %v1544
        %v1733 = vunpack.c.l.b16 %v1545
        %v1734 = vunpack.c.l.b16 %v1546
        %v1735 = vunpack.c.l.b16 %v1547
        %v1736 = vunpack.c.l.b16 %v1548
        %v1737 = vunpack.c.l.b16 %v1549
        %v1738 = vunpack.c.l.b16 %v1550
        %v1739 = vunpack.c.l.b16 %v1551
        %v1740 = vunpack.c.l.b16 %v1552
        %v1741 = vunpack.c.l.b16 %v1553
        %v1742 = vpack.c.b16 %v1727, %v1726
        %v1743 = vpack.c.b16 %v1729, %v1728
        %v1744 = vpack.c.b16 %v1731, %v1730
        %v1745 = vpack.c.b16 %v1733, %v1732
        %v1746 = vpack.c.b16 %v1735, %v1734
        %v1747 = vpack.c.b16 %v1737, %v1736
        %v1748 = vpack.c.b16 %v1739, %v1738
        %v1749 = vpack.c.b16 %v1741, %v1740
        %1758 = vmatpush.bf16.msra.mxu0 %v1749
        %1759 = vmatpush.bf16.msra.mxu0 %v1748
        %1760 = vmatpush.bf16.msra.mxu0 %v1747
        %1761 = vmatpush.bf16.msra.mxu0 %v1746
        %1762 = vmatpush.bf16.msra.mxu0 %v1745
        %1763 = vmatpush.bf16.msra.mxu0 %v1744
        %1764 = vmatpush.bf16.msra.mxu0 %v1743
        %1765 = vmatpush.bf16.msra.mxu0 %v1742
        %1766 = vmatmul.bf16.gmra.mxu0 %v1706
        %v1767 = vpop.f32.mrf.mxu0
        %v1768 = vadd.f32 %v1689, %v1767
        %v1769 = vpop.f32.mrf.mxu0
        %v1770 = vadd.f32 %v1691, %v1769
        %1771 = vmatmul.bf16.gmra.mxu0 %v1707
        %v1772 = vpop.f32.mrf.mxu0
        %v1773 = vadd.f32 %v1694, %v1772
        %v1774 = vpop.f32.mrf.mxu0
        %v1775 = vadd.f32 %v1696, %v1774
        %1776 = vdwg.mxu0
        %v1777 = vld [vmem:[%s9] sm:$0x1]
        %v1779 = vperm.slane %v1777, 0
        %v1781 = vadd.f32 %v1768, %v1779
        %v1782 = vadd.f32 %v1770, %v1779
        %v1783 = vadd.f32 %v1773, %v1779
        %v1784 = vadd.f32 %v1775, %v1779
        %v1785 = vmax.f32 %v1781, 0.0
        %v1786 = vmax.f32 %v1782, 0.0
        %v1787 = vmax.f32 %v1783, 0.0
        %v1788 = vmax.f32 %v1784, 0.0
        %v1789 = vpack.c.bf16 %v1785, %v1785
        %v1790 = vpack.c.bf16 %v1786, %v1786
        %v1791 = vpack.c.bf16 %v1787, %v1787
        %v1792 = vpack.c.bf16 %v1788, %v1788
        %1793 = vst [vmem:[#allocation2 + $0x4] sm:$0xf] %v1789
        %1794 = vst [vmem:[#allocation2 + $0x8] sm:$0xf] %v1790
        %1795 = vst [vmem:[#allocation2 + $0x10] sm:$0xf] %v1791
        %1796 = vst [vmem:[#allocation2 + $0x14] sm:$0xf] %v1792
        %v1797 = vld [vmem:[#allocation9] sm:$0xf]
        %v1798 = vld [vmem:[#allocation9 + $0x4] sm:$0xf]
        %v1799 = vld [vmem:[#allocation9 + $0x8] sm:$0xf]
        %v1800 = vld [vmem:[#allocation9 + $0xc] sm:$0xf]
        %v1801 = vld [vmem:[#allocation9 + $0x10] sm:$0xf]
        %v1802 = vld [vmem:[#allocation9 + $0x14] sm:$0xf]
        %v1803 = vld [vmem:[#allocation9 + $0x18] sm:$0xf]
        %v1804 = vld [vmem:[#allocation9 + $0x1c] sm:$0xf]
        %v1805 = vld [vmem:[#allocation9 + $0x20] sm:$0xf]
        %v1806 = vld [vmem:[#allocation9 + $0x24] sm:$0xf]
        %v1807 = vld [vmem:[#allocation9 + $0x28] sm:$0xf]
        %v1808 = vld [vmem:[#allocation9 + $0x2c] sm:$0xf]
        %v1809 = vld [vmem:[#allocation9 + $0x30] sm:$0xf]
        %v1810 = vld [vmem:[#allocation9 + $0x34] sm:$0xf]
        %v1811 = vld [vmem:[#allocation9 + $0x38] sm:$0xf]
        %v1812 = vld [vmem:[#allocation9 + $0x3c] sm:$0xf]
        %v1813 = vld [vmem:[#allocation2] sm:$0x8]
        %v1814 = vld [vmem:[#allocation2 + $0x4] sm:$0xf]
        %v1815 = vld [vmem:[#allocation2 + $0x8] sm:$0xf]
        %v1816 = vld [vmem:[#allocation2 + $0xc] sm:$0x8]
        %v1817 = vld [vmem:[#allocation2 + $0x10] sm:$0xf]
        %v1818 = vld [vmem:[#allocation2 + $0x14] sm:$0xf]
        %v1820 = vshrl.u32 %v1813, 16
        %v1822 = vrot.slane %v1820, 7
        %v1823 = vrot.slane %v1822, 4
        %v1825 = vshrl.u32 %v1814, 16
        %v1827 = vrot.slane %v1825, 7
        %v1828 = vshll.u32 %v1814, 16
        %v1830 = vor.u32 %v1827, %v1828
        %v1831 = vsel %vm1562, %v1823, %v1830
        %v1832 = vrot.slane %v1827, 4
        %v1834 = vshrl.u32 %v1815, 16
        %v1836 = vrot.slane %v1834, 7
        %v1837 = vshll.u32 %v1815, 16
        %v1839 = vor.u32 %v1836, %v1837
        %v1840 = vsel %vm1562, %v1832, %v1839
        %v1842 = vshrl.u32 %v1816, 16
        %v1844 = vrot.slane %v1842, 7
        %v1845 = vrot.slane %v1844, 4
        %v1847 = vshrl.u32 %v1817, 16
        %v1849 = vrot.slane %v1847, 7
        %v1850 = vshll.u32 %v1817, 16
        %v1852 = vor.u32 %v1849, %v1850
        %v1853 = vsel %vm1562, %v1845, %v1852
        %v1854 = vrot.slane %v1849, 4
        %v1856 = vshrl.u32 %v1818, 16
        %v1858 = vrot.slane %v1856, 7
        %v1859 = vshll.u32 %v1818, 16
        %v1861 = vor.u32 %v1858, %v1859
        %v1862 = vsel %vm1562, %v1854, %v1861
        %v1863 = vld [vmem:[#allocation7] sm:$0xf]
        %v1864 = vld [vmem:[#allocation7 + $0x4] sm:$0xf]
        %v1865 = vld [vmem:[#allocation7 + $0x8] sm:$0xf]
        %v1866 = vld [vmem:[#allocation7 + $0xc] sm:$0xf]
        %v1867 = vld [vmem:[#allocation7 + $0x10] sm:$0xf]
        %v1868 = vld [vmem:[#allocation7 + $0x14] sm:$0xf]
        %v1869 = vld [vmem:[#allocation7 + $0x18] sm:$0xf]
        %v1870 = vld [vmem:[#allocation7 + $0x1c] sm:$0xf]
        %v1871 = vld [vmem:[#allocation7 + $0x20] sm:$0xf]
        %v1872 = vld [vmem:[#allocation7 + $0x24] sm:$0xf]
        %v1873 = vld [vmem:[#allocation7 + $0x28] sm:$0xf]
        %v1874 = vld [vmem:[#allocation7 + $0x2c] sm:$0xf]
        %v1875 = vld [vmem:[#allocation7 + $0x30] sm:$0xf]
        %v1876 = vld [vmem:[#allocation7 + $0x34] sm:$0xf]
        %v1877 = vld [vmem:[#allocation7 + $0x38] sm:$0xf]
        %v1878 = vld [vmem:[#allocation7 + $0x3c] sm:$0xf]
        %v1879 = vunpack.c.l.b16 %v1831
        %v1880 = vunpack.c.l.b16 %v1840
        %v1881 = vunpack.c.l.b16 %v1853
        %v1882 = vunpack.c.l.b16 %v1862
        %v1883 = vpack.c.b16 %v1880, %v1879
        %v1884 = vpack.c.b16 %v1882, %v1881
        %v1903 = vunpack.c.l.b16 %v1863
        %v1904 = vunpack.c.l.b16 %v1864
        %v1905 = vunpack.c.l.b16 %v1865
        %v1906 = vunpack.c.l.b16 %v1866
        %v1907 = vunpack.c.l.b16 %v1867
        %v1908 = vunpack.c.l.b16 %v1868
        %v1909 = vunpack.c.l.b16 %v1869
        %v1910 = vunpack.c.l.b16 %v1870
        %v1911 = vunpack.c.l.b16 %v1871
        %v1912 = vunpack.c.l.b16 %v1872
        %v1913 = vunpack.c.l.b16 %v1873
        %v1914 = vunpack.c.l.b16 %v1874
        %v1915 = vunpack.c.l.b16 %v1875
        %v1916 = vunpack.c.l.b16 %v1876
        %v1917 = vunpack.c.l.b16 %v1877
        %v1918 = vunpack.c.l.b16 %v1878
        %v1919 = vpack.c.b16 %v1904, %v1903
        %v1920 = vpack.c.b16 %v1906, %v1905
        %v1921 = vpack.c.b16 %v1908, %v1907
        %v1922 = vpack.c.b16 %v1910, %v1909
        %v1923 = vpack.c.b16 %v1912, %v1911
        %v1924 = vpack.c.b16 %v1914, %v1913
        %v1925 = vpack.c.b16 %v1916, %v1915
        %v1926 = vpack.c.b16 %v1918, %v1917
        %1935 = vmatpush.bf16.msra.mxu0 %v1926
        %1936 = vmatpush.bf16.msra.mxu0 %v1925
        %1937 = vmatpush.bf16.msra.mxu0 %v1924
        %1938 = vmatpush.bf16.msra.mxu0 %v1923
        %1939 = vmatpush.bf16.msra.mxu0 %v1922
        %1940 = vmatpush.bf16.msra.mxu0 %v1921
        %1941 = vmatpush.bf16.msra.mxu0 %v1920
        %1942 = vmatpush.bf16.msra.mxu0 %v1919
        %1943 = vmatmul.bf16.gmra.mxu0 %v1883
        %v1944 = vpop.f32.mrf.mxu0
        %v1945 = vadd.f32 0.0, %v1944
        %v1946 = vpop.f32.mrf.mxu0
        %v1947 = vadd.f32 0.0, %v1946
        %1948 = vmatmul.bf16.gmra.mxu0 %v1884
        %v1949 = vpop.f32.mrf.mxu0
        %v1950 = vadd.f32 0.0, %v1949
        %v1951 = vpop.f32.mrf.mxu0
        %v1952 = vadd.f32 0.0, %v1951
        %1953 = vdwg.mxu0
        %v1958 = vunpack.c.l.b16 %v1789
        %v1959 = vunpack.c.l.b16 %v1790
        %v1960 = vunpack.c.l.b16 %v1791
        %v1961 = vunpack.c.l.b16 %v1792
        %v1962 = vpack.c.b16 %v1959, %v1958
        %v1963 = vpack.c.b16 %v1961, %v1960
        %v1982 = vunpack.c.l.b16 %v1797
        %v1983 = vunpack.c.l.b16 %v1798
        %v1984 = vunpack.c.l.b16 %v1799
        %v1985 = vunpack.c.l.b16 %v1800
        %v1986 = vunpack.c.l.b16 %v1801
        %v1987 = vunpack.c.l.b16 %v1802
        %v1988 = vunpack.c.l.b16 %v1803
        %v1989 = vunpack.c.l.b16 %v1804
        %v1990 = vunpack.c.l.b16 %v1805
        %v1991 = vunpack.c.l.b16 %v1806
        %v1992 = vunpack.c.l.b16 %v1807
        %v1993 = vunpack.c.l.b16 %v1808
        %v1994 = vunpack.c.l.b16 %v1809
        %v1995 = vunpack.c.l.b16 %v1810
        %v1996 = vunpack.c.l.b16 %v1811
        %v1997 = vunpack.c.l.b16 %v1812
        %v1998 = vpack.c.b16 %v1983, %v1982
        %v1999 = vpack.c.b16 %v1985, %v1984
        %v2000 = vpack.c.b16 %v1987, %v1986
        %v2001 = vpack.c.b16 %v1989, %v1988
        %v2002 = vpack.c.b16 %v1991, %v1990
        %v2003 = vpack.c.b16 %v1993, %v1992
        %v2004 = vpack.c.b16 %v1995, %v1994
        %v2005 = vpack.c.b16 %v1997, %v1996
        %2014 = vmatpush.bf16.msra.mxu0 %v2005
        %2015 = vmatpush.bf16.msra.mxu0 %v2004
        %2016 = vmatpush.bf16.msra.mxu0 %v2003
        %2017 = vmatpush.bf16.msra.mxu0 %v2002
        %2018 = vmatpush.bf16.msra.mxu0 %v2001
        %2019 = vmatpush.bf16.msra.mxu0 %v2000
        %2020 = vmatpush.bf16.msra.mxu0 %v1999
        %2021 = vmatpush.bf16.msra.mxu0 %v1998
        %2022 = vmatmul.bf16.gmra.mxu0 %v1962
        %v2023 = vpop.f32.mrf.mxu0
        %v2024 = vadd.f32 %v1945, %v2023
        %v2025 = vpop.f32.mrf.mxu0
        %v2026 = vadd.f32 %v1947, %v2025
        %2027 = vmatmul.bf16.gmra.mxu0 %v1963
        %v2028 = vpop.f32.mrf.mxu0
        %v2029 = vadd.f32 %v1950, %v2028
        %v2030 = vpop.f32.mrf.mxu0
        %v2031 = vadd.f32 %v1952, %v2030
        %2032 = vdwg.mxu0
        %v2033 = vld [vmem:[%s15] sm:$0x1]
        %v2035 = vperm.slane %v2033, 0
        %v2037 = vadd.f32 %v2024, %v2035
        %v2038 = vadd.f32 %v2026, %v2035
        %v2039 = vadd.f32 %v2029, %v2035
        %v2040 = vadd.f32 %v2031, %v2035
        %v2041 = vmax.f32 %v2037, 0.0
        %v2042 = vmax.f32 %v2038, 0.0
        %v2043 = vmax.f32 %v2039, 0.0
        %v2044 = vmax.f32 %v2040, 0.0
        %v2045 = vld [vmem:[#allocation10] sm:$0xf]
        %v2046 = vld [vmem:[#allocation10 + $0x4] sm:$0xf]
        %v2047 = vld [vmem:[#allocation10 + $0x8] sm:$0xf]
        %v2048 = vld [vmem:[#allocation10 + $0xc] sm:$0xf]
        %v2049 = vld [vmem:[#allocation10 + $0x10] sm:$0xf]
        %v2050 = vld [vmem:[#allocation10 + $0x14] sm:$0xf]
        %v2051 = vld [vmem:[#allocation10 + $0x18] sm:$0xf]
        %v2052 = vld [vmem:[#allocation10 + $0x1c] sm:$0xf]
        %v2053 = vld [vmem:[#allocation10 + $0x20] sm:$0xf]
        %v2054 = vld [vmem:[#allocation10 + $0x24] sm:$0xf]
        %v2055 = vld [vmem:[#allocation10 + $0x28] sm:$0xf]
        %v2056 = vld [vmem:[#allocation10 + $0x2c] sm:$0xf]
        %v2057 = vld [vmem:[#allocation10 + $0x30] sm:$0xf]
        %v2058 = vld [vmem:[#allocation10 + $0x34] sm:$0xf]
        %v2059 = vld [vmem:[#allocation10 + $0x38] sm:$0xf]
        %v2060 = vld [vmem:[#allocation10 + $0x3c] sm:$0xf]
        %v2061 = vld [vmem:[%s19] sm:$0x1]
        %v2063 = vperm.slane %v2061, 0
        %v2081 = vunpack.c.l.b16 %v2045
        %v2082 = vunpack.c.l.b16 %v2046
        %v2083 = vunpack.c.l.b16 %v2047
        %v2084 = vunpack.c.l.b16 %v2048
        %v2085 = vunpack.c.l.b16 %v2049
        %v2086 = vunpack.c.l.b16 %v2050
        %v2087 = vunpack.c.l.b16 %v2051
        %v2088 = vunpack.c.l.b16 %v2052
        %v2089 = vunpack.c.l.b16 %v2053
        %v2090 = vunpack.c.l.b16 %v2054
        %v2091 = vunpack.c.l.b16 %v2055
        %v2092 = vunpack.c.l.b16 %v2056
        %v2093 = vunpack.c.l.b16 %v2057
        %v2094 = vunpack.c.l.b16 %v2058
        %v2095 = vunpack.c.l.b16 %v2059
        %v2096 = vunpack.c.l.b16 %v2060
        %v2097 = vpack.c.b16 %v2082, %v2081
        %v2098 = vpack.c.b16 %v2084, %v2083
        %v2099 = vpack.c.b16 %v2086, %v2085
        %v2100 = vpack.c.b16 %v2088, %v2087
        %v2101 = vpack.c.b16 %v2090, %v2089
        %v2102 = vpack.c.b16 %v2092, %v2091
        %v2103 = vpack.c.b16 %v2094, %v2093
        %v2104 = vpack.c.b16 %v2096, %v2095
        %2113 = vmatpush.bf16.msra.mxu0 %v2104
        %2114 = vmatpush.bf16.msra.mxu0 %v2103
        %2115 = vmatpush.bf16.msra.mxu0 %v2102
        %2116 = vmatpush.bf16.msra.mxu0 %v2101
        %2117 = vmatpush.bf16.msra.mxu0 %v2100
        %2118 = vmatpush.bf16.msra.mxu0 %v2099
        %2119 = vmatpush.bf16.msra.mxu0 %v2098
        %2120 = vmatpush.bf16.msra.mxu0 %v2097
        %2121 = vmatmul.bf16.gmra.mxu0 %v1706
        %v2122 = vpop.f32.mrf.mxu0
        %v2123 = vadd.f32 %v2063, %v2122
        %v2124 = vpop.f32.mrf.mxu0
        %v2125 = vadd.f32 %v2063, %v2124
        %2126 = vmatmul.bf16.gmra.mxu0 %v1707
        %v2127 = vpop.f32.mrf.mxu0
        %v2128 = vadd.f32 %v2063, %v2127
        %v2129 = vpop.f32.mrf.mxu0
        %v2130 = vadd.f32 %v2063, %v2129
        %2131 = vdwg.mxu0
        %v2132 = vadd.f32 %v2041, %v2123
        %v2133 = vadd.f32 %v2042, %v2125
        %v2134 = vadd.f32 %v2043, %v2128
        %v2135 = vadd.f32 %v2044, %v2130
        %v2136 = vmax.f32 %v2132, 0.0
        %v2137 = vmax.f32 %v2133, 0.0
        %v2138 = vmax.f32 %v2134, 0.0
        %v2139 = vmax.f32 %v2135, 0.0
        %v2140 = vpack.c.bf16 %v2136, %v2136
        %v2141 = vpack.c.bf16 %v2137, %v2137
        %v2142 = vpack.c.bf16 %v2138, %v2138
        %v2143 = vpack.c.bf16 %v2139, %v2139
        %2144 = vst [vmem:[#allocation2 + $0x4] sm:$0xf] %v2140
        %2145 = vst [vmem:[#allocation2 + $0x8] sm:$0xf] %v2141
        %2146 = vst [vmem:[#allocation2 + $0x10] sm:$0xf] %v2142
        %2147 = vst [vmem:[#allocation2 + $0x14] sm:$0xf] %v2143
        %v2148 = vld [vmem:[#allocation13] sm:$0xf]
        %v2149 = vld [vmem:[#allocation13 + $0x4] sm:$0xf]
        %v2150 = vld [vmem:[#allocation13 + $0x8] sm:$0xf]
        %v2151 = vld [vmem:[#allocation13 + $0xc] sm:$0xf]
        %v2152 = vld [vmem:[#allocation13 + $0x10] sm:$0xf]
        %v2153 = vld [vmem:[#allocation13 + $0x14] sm:$0xf]
        %v2154 = vld [vmem:[#allocation13 + $0x18] sm:$0xf]
        %v2155 = vld [vmem:[#allocation13 + $0x1c] sm:$0xf]
        %v2156 = vld [vmem:[#allocation13 + $0x20] sm:$0xf]
        %v2157 = vld [vmem:[#allocation13 + $0x24] sm:$0xf]
        %v2158 = vld [vmem:[#allocation13 + $0x28] sm:$0xf]
        %v2159 = vld [vmem:[#allocation13 + $0x2c] sm:$0xf]
        %v2160 = vld [vmem:[#allocation13 + $0x30] sm:$0xf]
        %v2161 = vld [vmem:[#allocation13 + $0x34] sm:$0xf]
        %v2162 = vld [vmem:[#allocation13 + $0x38] sm:$0xf]
        %v2163 = vld [vmem:[#allocation13 + $0x3c] sm:$0xf]
        %v2164 = vld [vmem:[#allocation2] sm:$0x8]
        %v2165 = vld [vmem:[#allocation2 + $0x4] sm:$0xf]
        %v2166 = vld [vmem:[#allocation2 + $0x8] sm:$0x7]
        %v2167 = vld [vmem:[#allocation2 + $0xc] sm:$0x8]
        %v2168 = vld [vmem:[#allocation2 + $0x10] sm:$0xf]
        %v2169 = vld [vmem:[#allocation2 + $0x14] sm:$0x7]
        %vm2176 = vcmask 1040384
        %vm2177 = vcmask 1044484
        %vm2178 = vmor %vm2176, %vm2177
        %v2179 = vrot.slane %v2164, 7
        %v2180 = vrot.slane %v2179, 4
        %v2181 = vrot.slane %v2165, 7
        %v2182 = vsel %vm2178, %v2180, %v2181
        %v2183 = vrot.slane %v2181, 4
        %v2184 = vrot.slane %v2166, 7
        %v2185 = vsel %vm2178, %v2183, %v2184
        %v2186 = vrot.slane %v2167, 7
        %v2187 = vrot.slane %v2186, 4
        %v2188 = vrot.slane %v2168, 7
        %v2189 = vsel %vm2178, %v2187, %v2188
        %v2190 = vrot.slane %v2188, 4
        %v2191 = vrot.slane %v2169, 7
        %v2192 = vsel %vm2178, %v2190, %v2191
        %v2193 = vld [vmem:[#allocation12] sm:$0xf]
        %v2194 = vld [vmem:[#allocation12 + $0x4] sm:$0xf]
        %v2195 = vld [vmem:[#allocation12 + $0x8] sm:$0xf]
        %v2196 = vld [vmem:[#allocation12 + $0xc] sm:$0xf]
        %v2197 = vld [vmem:[#allocation12 + $0x10] sm:$0xf]
        %v2198 = vld [vmem:[#allocation12 + $0x14] sm:$0xf]
        %v2199 = vld [vmem:[#allocation12 + $0x18] sm:$0xf]
        %v2200 = vld [vmem:[#allocation12 + $0x1c] sm:$0xf]
        %v2201 = vld [vmem:[#allocation12 + $0x20] sm:$0xf]
        %v2202 = vld [vmem:[#allocation12 + $0x24] sm:$0xf]
        %v2203 = vld [vmem:[#allocation12 + $0x28] sm:$0xf]
        %v2204 = vld [vmem:[#allocation12 + $0x2c] sm:$0xf]
        %v2205 = vld [vmem:[#allocation12 + $0x30] sm:$0xf]
        %v2206 = vld [vmem:[#allocation12 + $0x34] sm:$0xf]
        %v2207 = vld [vmem:[#allocation12 + $0x38] sm:$0xf]
        %v2208 = vld [vmem:[#allocation12 + $0x3c] sm:$0xf]
        %v2209 = vunpack.c.l.b16 %v2182
        %v2210 = vunpack.c.l.b16 %v2185
        %v2211 = vunpack.c.l.b16 %v2189
        %v2212 = vunpack.c.l.b16 %v2192
        %v2213 = vpack.c.b16 %v2210, %v2209
        %v2214 = vpack.c.b16 %v2212, %v2211
        %v2233 = vunpack.c.l.b16 %v2193
        %v2234 = vunpack.c.l.b16 %v2194
        %v2235 = vunpack.c.l.b16 %v2195
        %v2236 = vunpack.c.l.b16 %v2196
        %v2237 = vunpack.c.l.b16 %v2197
        %v2238 = vunpack.c.l.b16 %v2198
        %v2239 = vunpack.c.l.b16 %v2199
        %v2240 = vunpack.c.l.b16 %v2200
        %v2241 = vunpack.c.l.b16 %v2201
        %v2242 = vunpack.c.l.b16 %v2202
        %v2243 = vunpack.c.l.b16 %v2203
        %v2244 = vunpack.c.l.b16 %v2204
        %v2245 = vunpack.c.l.b16 %v2205
        %v2246 = vunpack.c.l.b16 %v2206
        %v2247 = vunpack.c.l.b16 %v2207
        %v2248 = vunpack.c.l.b16 %v2208
        %v2249 = vpack.c.b16 %v2234, %v2233
        %v2250 = vpack.c.b16 %v2236, %v2235
        %v2251 = vpack.c.b16 %v2238, %v2237
        %v2252 = vpack.c.b16 %v2240, %v2239
        %v2253 = vpack.c.b16 %v2242, %v2241
        %v2254 = vpack.c.b16 %v2244, %v2243
        %v2255 = vpack.c.b16 %v2246, %v2245
        %v2256 = vpack.c.b16 %v2248, %v2247
        %2265 = vmatpush.bf16.msra.mxu0 %v2256
        %2266 = vmatpush.bf16.msra.mxu0 %v2255
        %2267 = vmatpush.bf16.msra.mxu0 %v2254
        %2268 = vmatpush.bf16.msra.mxu0 %v2253
        %2269 = vmatpush.bf16.msra.mxu0 %v2252
        %2270 = vmatpush.bf16.msra.mxu0 %v2251
        %2271 = vmatpush.bf16.msra.mxu0 %v2250
        %2272 = vmatpush.bf16.msra.mxu0 %v2249
        %2273 = vmatmul.bf16.gmra.mxu0 %v2213
        %v2274 = vpop.f32.mrf.mxu0
        %v2275 = vadd.f32 0.0, %v2274
        %v2276 = vpop.f32.mrf.mxu0
        %v2277 = vadd.f32 0.0, %v2276
        %2278 = vmatmul.bf16.gmra.mxu0 %v2214
        %v2279 = vpop.f32.mrf.mxu0
        %v2280 = vadd.f32 0.0, %v2279
        %v2281 = vpop.f32.mrf.mxu0
        %v2282 = vadd.f32 0.0, %v2281
        %2283 = vdwg.mxu0
        %v2288 = vunpack.c.l.b16 %v2140
        %v2289 = vunpack.c.l.b16 %v2141
        %v2290 = vunpack.c.l.b16 %v2142
        %v2291 = vunpack.c.l.b16 %v2143
        %v2292 = vpack.c.b16 %v2289, %v2288
        %v2293 = vpack.c.b16 %v2291, %v2290
        %v2312 = vunpack.c.l.b16 %v2148
        %v2313 = vunpack.c.l.b16 %v2149
        %v2314 = vunpack.c.l.b16 %v2150
        %v2315 = vunpack.c.l.b16 %v2151
        %v2316 = vunpack.c.l.b16 %v2152
        %v2317 = vunpack.c.l.b16 %v2153
        %v2318 = vunpack.c.l.b16 %v2154
        %v2319 = vunpack.c.l.b16 %v2155
        %v2320 = vunpack.c.l.b16 %v2156
        %v2321 = vunpack.c.l.b16 %v2157
        %v2322 = vunpack.c.l.b16 %v2158
        %v2323 = vunpack.c.l.b16 %v2159
        %v2324 = vunpack.c.l.b16 %v2160
        %v2325 = vunpack.c.l.b16 %v2161
        %v2326 = vunpack.c.l.b16 %v2162
        %v2327 = vunpack.c.l.b16 %v2163
        %v2328 = vpack.c.b16 %v2313, %v2312
        %v2329 = vpack.c.b16 %v2315, %v2314
        %v2330 = vpack.c.b16 %v2317, %v2316
        %v2331 = vpack.c.b16 %v2319, %v2318
        %v2332 = vpack.c.b16 %v2321, %v2320
        %v2333 = vpack.c.b16 %v2323, %v2322
        %v2334 = vpack.c.b16 %v2325, %v2324
        %v2335 = vpack.c.b16 %v2327, %v2326
        %2344 = vmatpush.bf16.msra.mxu0 %v2335
        %2345 = vmatpush.bf16.msra.mxu0 %v2334
        %2346 = vmatpush.bf16.msra.mxu0 %v2333
        %2347 = vmatpush.bf16.msra.mxu0 %v2332
        %2348 = vmatpush.bf16.msra.mxu0 %v2331
        %2349 = vmatpush.bf16.msra.mxu0 %v2330
        %2350 = vmatpush.bf16.msra.mxu0 %v2329
        %2351 = vmatpush.bf16.msra.mxu0 %v2328
        %2352 = vmatmul.bf16.gmra.mxu0 %v2292
        %v2353 = vpop.f32.mrf.mxu0
        %v2354 = vadd.f32 %v2275, %v2353
        %v2355 = vpop.f32.mrf.mxu0
        %v2356 = vadd.f32 %v2277, %v2355
        %2357 = vmatmul.bf16.gmra.mxu0 %v2293
        %v2358 = vpop.f32.mrf.mxu0
        %v2359 = vadd.f32 %v2280, %v2358
        %v2360 = vpop.f32.mrf.mxu0
        %v2361 = vadd.f32 %v2282, %v2360
        %2362 = vdwg.mxu0
        %v2363 = vld [vmem:[%s25] sm:$0x1]
        %v2365 = vperm.slane %v2363, 0
        %v2367 = vadd.f32 %v2354, %v2365
        %v2368 = vadd.f32 %v2356, %v2365
        %v2369 = vadd.f32 %v2359, %v2365
        %v2370 = vadd.f32 %v2361, %v2365
        %v2371 = vmax.f32 %v2367, 0.0
        %v2372 = vmax.f32 %v2368, 0.0
        %v2373 = vmax.f32 %v2369, 0.0
        %v2374 = vmax.f32 %v2370, 0.0
        %v2375 = vpack.c.bf16 %v2371, %v2371
        %v2376 = vpack.c.bf16 %v2372, %v2372
        %v2377 = vpack.c.bf16 %v2373, %v2373
        %v2378 = vpack.c.bf16 %v2374, %v2374
        %2379 = vst [vmem:[#allocation2 + $0x4] sm:$0xf] %v2375
        %2380 = vst [vmem:[#allocation2 + $0x8] sm:$0xf] %v2376
        %2381 = vst [vmem:[#allocation2 + $0x10] sm:$0xf] %v2377
        %2382 = vst [vmem:[#allocation2 + $0x14] sm:$0xf] %v2378
        %v2383 = vld [vmem:[#allocation16] sm:$0xf]
        %v2384 = vld [vmem:[#allocation16 + $0x4] sm:$0xf]
        %v2385 = vld [vmem:[#allocation16 + $0x8] sm:$0xf]
        %v2386 = vld [vmem:[#allocation16 + $0xc] sm:$0xf]
        %v2387 = vld [vmem:[#allocation16 + $0x10] sm:$0xf]
        %v2388 = vld [vmem:[#allocation16 + $0x14] sm:$0xf]
        %v2389 = vld [vmem:[#allocation16 + $0x18] sm:$0xf]
        %v2390 = vld [vmem:[#allocation16 + $0x1c] sm:$0xf]
        %v2391 = vld [vmem:[#allocation16 + $0x20] sm:$0xf]
        %v2392 = vld [vmem:[#allocation16 + $0x24] sm:$0xf]
        %v2393 = vld [vmem:[#allocation16 + $0x28] sm:$0xf]
        %v2394 = vld [vmem:[#allocation16 + $0x2c] sm:$0xf]
        %v2395 = vld [vmem:[#allocation16 + $0x30] sm:$0xf]
        %v2396 = vld [vmem:[#allocation16 + $0x34] sm:$0xf]
        %v2397 = vld [vmem:[#allocation16 + $0x38] sm:$0xf]
        %v2398 = vld [vmem:[#allocation16 + $0x3c] sm:$0xf]
        %v2399 = vld [vmem:[#allocation2] sm:$0x8]
        %v2400 = vld [vmem:[#allocation2 + $0x4] sm:$0xf]
        %v2401 = vld [vmem:[#allocation2 + $0x8] sm:$0x7]
        %v2402 = vld [vmem:[#allocation2 + $0xc] sm:$0x8]
        %v2403 = vld [vmem:[#allocation2 + $0x10] sm:$0xf]
        %v2404 = vld [vmem:[#allocation2 + $0x14] sm:$0x7]
        %v2411 = vrot.slane %v2399, 7
        %v2412 = vrot.slane %v2411, 4
        %v2413 = vrot.slane %v2400, 7
        %v2414 = vsel %vm2178, %v2412, %v2413
        %v2415 = vrot.slane %v2413, 4
        %v2416 = vrot.slane %v2401, 7
        %v2417 = vsel %vm2178, %v2415, %v2416
        %v2418 = vrot.slane %v2402, 7
        %v2419 = vrot.slane %v2418, 4
        %v2420 = vrot.slane %v2403, 7
        %v2421 = vsel %vm2178, %v2419, %v2420
        %v2422 = vrot.slane %v2420, 4
        %v2423 = vrot.slane %v2404, 7
        %v2424 = vsel %vm2178, %v2422, %v2423
        %v2425 = vld [vmem:[#allocation15] sm:$0xf]
        %v2426 = vld [vmem:[#allocation15 + $0x4] sm:$0xf]
        %v2427 = vld [vmem:[#allocation15 + $0x8] sm:$0xf]
        %v2428 = vld [vmem:[#allocation15 + $0xc] sm:$0xf]
        %v2429 = vld [vmem:[#allocation15 + $0x10] sm:$0xf]
        %v2430 = vld [vmem:[#allocation15 + $0x14] sm:$0xf]
        %v2431 = vld [vmem:[#allocation15 + $0x18] sm:$0xf]
        %v2432 = vld [vmem:[#allocation15 + $0x1c] sm:$0xf]
        %v2433 = vld [vmem:[#allocation15 + $0x20] sm:$0xf]
        %v2434 = vld [vmem:[#allocation15 + $0x24] sm:$0xf]
        %v2435 = vld [vmem:[#allocation15 + $0x28] sm:$0xf]
        %v2436 = vld [vmem:[#allocation15 + $0x2c] sm:$0xf]
        %v2437 = vld [vmem:[#allocation15 + $0x30] sm:$0xf]
        %v2438 = vld [vmem:[#allocation15 + $0x34] sm:$0xf]
        %v2439 = vld [vmem:[#allocation15 + $0x38] sm:$0xf]
        %v2440 = vld [vmem:[#allocation15 + $0x3c] sm:$0xf]
        %v2441 = vunpack.c.l.b16 %v2414
        %v2442 = vunpack.c.l.b16 %v2417
        %v2443 = vunpack.c.l.b16 %v2421
        %v2444 = vunpack.c.l.b16 %v2424
        %v2445 = vpack.c.b16 %v2442, %v2441
        %v2446 = vpack.c.b16 %v2444, %v2443
        %v2465 = vunpack.c.l.b16 %v2425
        %v2466 = vunpack.c.l.b16 %v2426
        %v2467 = vunpack.c.l.b16 %v2427
        %v2468 = vunpack.c.l.b16 %v2428
        %v2469 = vunpack.c.l.b16 %v2429
        %v2470 = vunpack.c.l.b16 %v2430
        %v2471 = vunpack.c.l.b16 %v2431
        %v2472 = vunpack.c.l.b16 %v2432
        %v2473 = vunpack.c.l.b16 %v2433
        %v2474 = vunpack.c.l.b16 %v2434
        %v2475 = vunpack.c.l.b16 %v2435
        %v2476 = vunpack.c.l.b16 %v2436
        %v2477 = vunpack.c.l.b16 %v2437
        %v2478 = vunpack.c.l.b16 %v2438
        %v2479 = vunpack.c.l.b16 %v2439
        %v2480 = vunpack.c.l.b16 %v2440
        %v2481 = vpack.c.b16 %v2466, %v2465
        %v2482 = vpack.c.b16 %v2468, %v2467
        %v2483 = vpack.c.b16 %v2470, %v2469
        %v2484 = vpack.c.b16 %v2472, %v2471
        %v2485 = vpack.c.b16 %v2474, %v2473
        %v2486 = vpack.c.b16 %v2476, %v2475
        %v2487 = vpack.c.b16 %v2478, %v2477
        %v2488 = vpack.c.b16 %v2480, %v2479
        %2497 = vmatpush.bf16.msra.mxu0 %v2488
        %2498 = vmatpush.bf16.msra.mxu0 %v2487
        %2499 = vmatpush.bf16.msra.mxu0 %v2486
        %2500 = vmatpush.bf16.msra.mxu0 %v2485
        %2501 = vmatpush.bf16.msra.mxu0 %v2484
        %2502 = vmatpush.bf16.msra.mxu0 %v2483
        %2503 = vmatpush.bf16.msra.mxu0 %v2482
        %2504 = vmatpush.bf16.msra.mxu0 %v2481
        %2505 = vmatmul.bf16.gmra.mxu0 %v2445
        %v2506 = vpop.f32.mrf.mxu0
        %v2507 = vadd.f32 0.0, %v2506
        %v2508 = vpop.f32.mrf.mxu0
        %v2509 = vadd.f32 0.0, %v2508
        %2510 = vmatmul.bf16.gmra.mxu0 %v2446
        %v2511 = vpop.f32.mrf.mxu0
        %v2512 = vadd.f32 0.0, %v2511
        %v2513 = vpop.f32.mrf.mxu0
        %v2514 = vadd.f32 0.0, %v2513
        %2515 = vdwg.mxu0
        %v2520 = vunpack.c.l.b16 %v2375
        %v2521 = vunpack.c.l.b16 %v2376
        %v2522 = vunpack.c.l.b16 %v2377
        %v2523 = vunpack.c.l.b16 %v2378
        %v2524 = vpack.c.b16 %v2521, %v2520
        %v2525 = vpack.c.b16 %v2523, %v2522
        %v2544 = vunpack.c.l.b16 %v2383
        %v2545 = vunpack.c.l.b16 %v2384
        %v2546 = vunpack.c.l.b16 %v2385
        %v2547 = vunpack.c.l.b16 %v2386
        %v2548 = vunpack.c.l.b16 %v2387
        %v2549 = vunpack.c.l.b16 %v2388
        %v2550 = vunpack.c.l.b16 %v2389
        %v2551 = vunpack.c.l.b16 %v2390
        %v2552 = vunpack.c.l.b16 %v2391
        %v2553 = vunpack.c.l.b16 %v2392
        %v2554 = vunpack.c.l.b16 %v2393
        %v2555 = vunpack.c.l.b16 %v2394
        %v2556 = vunpack.c.l.b16 %v2395
        %v2557 = vunpack.c.l.b16 %v2396
        %v2558 = vunpack.c.l.b16 %v2397
        %v2559 = vunpack.c.l.b16 %v2398
        %v2560 = vpack.c.b16 %v2545, %v2544
        %v2561 = vpack.c.b16 %v2547, %v2546
        %v2562 = vpack.c.b16 %v2549, %v2548
        %v2563 = vpack.c.b16 %v2551, %v2550
        %v2564 = vpack.c.b16 %v2553, %v2552
        %v2565 = vpack.c.b16 %v2555, %v2554
        %v2566 = vpack.c.b16 %v2557, %v2556
        %v2567 = vpack.c.b16 %v2559, %v2558
        %2576 = vmatpush.bf16.msra.mxu0 %v2567
        %2577 = vmatpush.bf16.msra.mxu0 %v2566
        %2578 = vmatpush.bf16.msra.mxu0 %v2565
        %2579 = vmatpush.bf16.msra.mxu0 %v2564
        %2580 = vmatpush.bf16.msra.mxu0 %v2563
        %2581 = vmatpush.bf16.msra.mxu0 %v2562
        %2582 = vmatpush.bf16.msra.mxu0 %v2561
        %2583 = vmatpush.bf16.msra.mxu0 %v2560
        %2584 = vmatmul.bf16.gmra.mxu0 %v2524
        %v2585 = vpop.f32.mrf.mxu0
        %v2586 = vadd.f32 %v2507, %v2585
        %v2587 = vpop.f32.mrf.mxu0
        %v2588 = vadd.f32 %v2509, %v2587
        %2589 = vmatmul.bf16.gmra.mxu0 %v2525
        %v2590 = vpop.f32.mrf.mxu0
        %v2591 = vadd.f32 %v2512, %v2590
        %v2592 = vpop.f32.mrf.mxu0
        %v2593 = vadd.f32 %v2514, %v2592
        %2594 = vdwg.mxu0
        %v2595 = vld [vmem:[%s31] sm:$0x1]
        %v2597 = vperm.slane %v2595, 0
        %v2599 = vadd.f32 %v2586, %v2597
        %v2600 = vadd.f32 %v2588, %v2597
        %v2601 = vadd.f32 %v2591, %v2597
        %v2602 = vadd.f32 %v2593, %v2597
        %v2603 = vmax.f32 %v2599, 0.0
        %v2604 = vmax.f32 %v2600, 0.0
        %v2605 = vmax.f32 %v2601, 0.0
        %v2606 = vmax.f32 %v2602, 0.0
        %v2607 = vld [vmem:[#allocation18] sm:$0xf]
        %v2608 = vld [vmem:[#allocation18 + $0x4] sm:$0xf]
        %v2609 = vld [vmem:[#allocation18 + $0x8] sm:$0xf]
        %v2610 = vld [vmem:[#allocation18 + $0xc] sm:$0xf]
        %v2611 = vld [vmem:[#allocation18 + $0x10] sm:$0xf]
        %v2612 = vld [vmem:[#allocation18 + $0x14] sm:$0xf]
        %v2613 = vld [vmem:[#allocation18 + $0x18] sm:$0xf]
        %v2614 = vld [vmem:[#allocation18 + $0x1c] sm:$0xf]
        %v2615 = vld [vmem:[#allocation18 + $0x20] sm:$0xf]
        %v2616 = vld [vmem:[#allocation18 + $0x24] sm:$0xf]
        %v2617 = vld [vmem:[#allocation18 + $0x28] sm:$0xf]
        %v2618 = vld [vmem:[#allocation18 + $0x2c] sm:$0xf]
        %v2619 = vld [vmem:[#allocation18 + $0x30] sm:$0xf]
        %v2620 = vld [vmem:[#allocation18 + $0x34] sm:$0xf]
        %v2621 = vld [vmem:[#allocation18 + $0x38] sm:$0xf]
        %v2622 = vld [vmem:[#allocation18 + $0x3c] sm:$0xf]
        %v2623 = vld [vmem:[%s35] sm:$0x1]
        %v2625 = vperm.slane %v2623, 0
        %v2643 = vunpack.c.l.b16 %v2607
        %v2644 = vunpack.c.l.b16 %v2608
        %v2645 = vunpack.c.l.b16 %v2609
        %v2646 = vunpack.c.l.b16 %v2610
        %v2647 = vunpack.c.l.b16 %v2611
        %v2648 = vunpack.c.l.b16 %v2612
        %v2649 = vunpack.c.l.b16 %v2613
        %v2650 = vunpack.c.l.b16 %v2614
        %v2651 = vunpack.c.l.b16 %v2615
        %v2652 = vunpack.c.l.b16 %v2616
        %v2653 = vunpack.c.l.b16 %v2617
        %v2654 = vunpack.c.l.b16 %v2618
        %v2655 = vunpack.c.l.b16 %v2619
        %v2656 = vunpack.c.l.b16 %v2620
        %v2657 = vunpack.c.l.b16 %v2621
        %v2658 = vunpack.c.l.b16 %v2622
        %v2659 = vpack.c.b16 %v2644, %v2643
        %v2660 = vpack.c.b16 %v2646, %v2645
        %v2661 = vpack.c.b16 %v2648, %v2647
        %v2662 = vpack.c.b16 %v2650, %v2649
        %v2663 = vpack.c.b16 %v2652, %v2651
        %v2664 = vpack.c.b16 %v2654, %v2653
        %v2665 = vpack.c.b16 %v2656, %v2655
        %v2666 = vpack.c.b16 %v2658, %v2657
        %2675 = vmatpush.bf16.msra.mxu0 %v2666
        %2676 = vmatpush.bf16.msra.mxu0 %v2665
        %2677 = vmatpush.bf16.msra.mxu0 %v2664
        %2678 = vmatpush.bf16.msra.mxu0 %v2663
        %2679 = vmatpush.bf16.msra.mxu0 %v2662
        %2680 = vmatpush.bf16.msra.mxu0 %v2661
        %2681 = vmatpush.bf16.msra.mxu0 %v2660
        %2682 = vmatpush.bf16.msra.mxu0 %v2659
        %2683 = vmatmul.bf16.gmra.mxu0 %v2292
        %v2684 = vpop.f32.mrf.mxu0
        %v2685 = vadd.f32 %v2625, %v2684
        %v2686 = vpop.f32.mrf.mxu0
        %v2687 = vadd.f32 %v2625, %v2686
        %2688 = vmatmul.bf16.gmra.mxu0 %v2293
        %v2689 = vpop.f32.mrf.mxu0
        %v2690 = vadd.f32 %v2625, %v2689
        %v2691 = vpop.f32.mrf.mxu0
        %v2692 = vadd.f32 %v2625, %v2691
        %2693 = vdwg.mxu0
        %v2694 = vadd.f32 %v2603, %v2685
        %v2695 = vadd.f32 %v2604, %v2687
        %v2696 = vadd.f32 %v2605, %v2690
        %v2697 = vadd.f32 %v2606, %v2692
        %v2698 = vmax.f32 %v2694, 0.0
        %v2699 = vmax.f32 %v2695, 0.0
        %v2700 = vmax.f32 %v2696, 0.0
        %v2701 = vmax.f32 %v2697, 0.0
        %v2702 = vpack.c.bf16 %v2699, %v2698
        %v2703 = vpack.c.bf16 %v2701, %v2700
        %2704 = vst [vmem:[#allocation3] sm:$0xf] %v1530
        %2705 = vst [vmem:[#allocation3 + $0x4] sm:$0xf] %v1531
        %2706 = vst [vmem:[#allocation3 + $0xc] sm:$0xf] %v1532
        %2707 = vst [vmem:[#allocation3 + $0x10] sm:$0xf] %v1533
        %v2708 = vld [vmem:[#allocation21] sm:$0xf]
        %v2709 = vld [vmem:[#allocation21 + $0x4] sm:$0xf]
        %v2710 = vld [vmem:[#allocation21 + $0x8] sm:$0xf]
        %v2711 = vld [vmem:[#allocation21 + $0xc] sm:$0xf]
        %v2712 = vld [vmem:[#allocation21 + $0x10] sm:$0xf]
        %v2713 = vld [vmem:[#allocation21 + $0x14] sm:$0xf]
        %v2714 = vld [vmem:[#allocation21 + $0x18] sm:$0xf]
        %v2715 = vld [vmem:[#allocation21 + $0x1c] sm:$0xf]
        %v2716 = vld [vmem:[#allocation21 + $0x20] sm:$0xf]
        %v2717 = vld [vmem:[#allocation21 + $0x24] sm:$0xf]
        %v2718 = vld [vmem:[#allocation21 + $0x28] sm:$0xf]
        %v2719 = vld [vmem:[#allocation21 + $0x2c] sm:$0xf]
        %v2720 = vld [vmem:[#allocation21 + $0x30] sm:$0xf]
        %v2721 = vld [vmem:[#allocation21 + $0x34] sm:$0xf]
        %v2722 = vld [vmem:[#allocation21 + $0x38] sm:$0xf]
        %v2723 = vld [vmem:[#allocation21 + $0x3c] sm:$0xf]
        %v2724 = vld [vmem:[#allocation3] sm:$0xf]
        %v2725 = vld [vmem:[#allocation3 + $0x4] sm:$0xf]
        %v2726 = vld [vmem:[#allocation3 + $0x8] sm:$0x1]
        %v2727 = vld [vmem:[#allocation3 + $0xc] sm:$0xf]
        %v2728 = vld [vmem:[#allocation3 + $0x10] sm:$0xf]
        %v2729 = vld [vmem:[#allocation3 + $0x14] sm:$0x1]
        %vm2730 = vsmask.f32 3328
        %vm2731 = vsmask.f32 7440
        %vm2732 = vmor %vm2730, %vm2731
        %v2734 = vshrl.u32 %v2724, 16
        %v2736 = vrot.slane %v2734, 4
        %v2737 = vshll.u32 %v2724, 16
        %v2739 = vrot.slane %v2737, 5
        %v2740 = vor.u32 %v2736, %v2739
        %v2741 = vrot.slane %v2740, 4
        %v2743 = vshll.u32 %v2725, 16
        %v2745 = vrot.slane %v2743, 5
        %v2746 = vsel %vm2732, %v2741, %v2745
        %v2747 = vshrl.u32 %v2725, 16
        %v2749 = vrot.slane %v2747, 4
        %v2750 = vor.u32 %v2749, %v2745
        %v2751 = vrot.slane %v2750, 4
        %v2753 = vshll.u32 %v2726, 16
        %v2755 = vrot.slane %v2753, 5
        %v2756 = vsel %vm2732, %v2751, %v2755
        %v2758 = vshrl.u32 %v2727, 16
        %v2760 = vrot.slane %v2758, 4
        %v2761 = vshll.u32 %v2727, 16
        %v2763 = vrot.slane %v2761, 5
        %v2764 = vor.u32 %v2760, %v2763
        %v2765 = vrot.slane %v2764, 4
        %v2767 = vshll.u32 %v2728, 16
        %v2769 = vrot.slane %v2767, 5
        %v2770 = vsel %vm2732, %v2765, %v2769
        %v2771 = vshrl.u32 %v2728, 16
        %v2773 = vrot.slane %v2771, 4
        %v2774 = vor.u32 %v2773, %v2769
        %v2775 = vrot.slane %v2774, 4
        %v2777 = vshll.u32 %v2729, 16
        %v2779 = vrot.slane %v2777, 5
        %v2780 = vsel %vm2732, %v2775, %v2779
        %v2781 = vld [vmem:[#allocation19] sm:$0xf]
        %v2782 = vld [vmem:[#allocation19 + $0x4] sm:$0xf]
        %v2783 = vld [vmem:[#allocation19 + $0x8] sm:$0xf]
        %v2784 = vld [vmem:[#allocation19 + $0xc] sm:$0xf]
        %v2785 = vld [vmem:[#allocation19 + $0x10] sm:$0xf]
        %v2786 = vld [vmem:[#allocation19 + $0x14] sm:$0xf]
        %v2787 = vld [vmem:[#allocation19 + $0x18] sm:$0xf]
        %v2788 = vld [vmem:[#allocation19 + $0x1c] sm:$0xf]
        %v2789 = vld [vmem:[#allocation19 + $0x20] sm:$0xf]
        %v2790 = vld [vmem:[#allocation19 + $0x24] sm:$0xf]
        %v2791 = vld [vmem:[#allocation19 + $0x28] sm:$0xf]
        %v2792 = vld [vmem:[#allocation19 + $0x2c] sm:$0xf]
        %v2793 = vld [vmem:[#allocation19 + $0x30] sm:$0xf]
        %v2794 = vld [vmem:[#allocation19 + $0x34] sm:$0xf]
        %v2795 = vld [vmem:[#allocation19 + $0x38] sm:$0xf]
        %v2796 = vld [vmem:[#allocation19 + $0x3c] sm:$0xf]
        %v2797 = vunpack.c.l.b16 %v2746
        %v2798 = vunpack.c.l.b16 %v2756
        %v2799 = vunpack.c.l.b16 %v2770
        %v2800 = vunpack.c.l.b16 %v2780
        %v2801 = vpack.c.b16 %v2798, %v2797
        %v2802 = vpack.c.b16 %v2800, %v2799
        %v2821 = vunpack.c.l.b16 %v2781
        %v2822 = vunpack.c.l.b16 %v2782
        %v2823 = vunpack.c.l.b16 %v2783
        %v2824 = vunpack.c.l.b16 %v2784
        %v2825 = vunpack.c.l.b16 %v2785
        %v2826 = vunpack.c.l.b16 %v2786
        %v2827 = vunpack.c.l.b16 %v2787
        %v2828 = vunpack.c.l.b16 %v2788
        %v2829 = vunpack.c.l.b16 %v2789
        %v2830 = vunpack.c.l.b16 %v2790
        %v2831 = vunpack.c.l.b16 %v2791
        %v2832 = vunpack.c.l.b16 %v2792
        %v2833 = vunpack.c.l.b16 %v2793
        %v2834 = vunpack.c.l.b16 %v2794
        %v2835 = vunpack.c.l.b16 %v2795
        %v2836 = vunpack.c.l.b16 %v2796
        %v2837 = vpack.c.b16 %v2822, %v2821
        %v2838 = vpack.c.b16 %v2824, %v2823
        %v2839 = vpack.c.b16 %v2826, %v2825
        %v2840 = vpack.c.b16 %v2828, %v2827
        %v2841 = vpack.c.b16 %v2830, %v2829
        %v2842 = vpack.c.b16 %v2832, %v2831
        %v2843 = vpack.c.b16 %v2834, %v2833
        %v2844 = vpack.c.b16 %v2836, %v2835
        %2853 = vmatpush.bf16.msra.mxu0 %v2844
        %2854 = vmatpush.bf16.msra.mxu0 %v2843
        %2855 = vmatpush.bf16.msra.mxu0 %v2842
        %2856 = vmatpush.bf16.msra.mxu0 %v2841
        %2857 = vmatpush.bf16.msra.mxu0 %v2840
        %2858 = vmatpush.bf16.msra.mxu0 %v2839
        %2859 = vmatpush.bf16.msra.mxu0 %v2838
        %2860 = vmatpush.bf16.msra.mxu0 %v2837
        %2861 = vmatmul.bf16.gmra.mxu0 %v2801
        %v2862 = vpop.f32.mrf.mxu0
        %v2863 = vadd.f32 0.0, %v2862
        %v2864 = vpop.f32.mrf.mxu0
        %v2865 = vadd.f32 0.0, %v2864
        %2866 = vmatmul.bf16.gmra.mxu0 %v2802
        %v2867 = vpop.f32.mrf.mxu0
        %v2868 = vadd.f32 0.0, %v2867
        %v2869 = vpop.f32.mrf.mxu0
        %v2870 = vadd.f32 0.0, %v2869
        %2871 = vdwg.mxu0
        %v2888 = vunpack.c.l.b16 %v2708
        %v2889 = vunpack.c.l.b16 %v2709
        %v2890 = vunpack.c.l.b16 %v2710
        %v2891 = vunpack.c.l.b16 %v2711
        %v2892 = vunpack.c.l.b16 %v2712
        %v2893 = vunpack.c.l.b16 %v2713
        %v2894 = vunpack.c.l.b16 %v2714
        %v2895 = vunpack.c.l.b16 %v2715
        %v2896 = vunpack.c.l.b16 %v2716
        %v2897 = vunpack.c.l.b16 %v2717
        %v2898 = vunpack.c.l.b16 %v2718
        %v2899 = vunpack.c.l.b16 %v2719
        %v2900 = vunpack.c.l.b16 %v2720
        %v2901 = vunpack.c.l.b16 %v2721
        %v2902 = vunpack.c.l.b16 %v2722
        %v2903 = vunpack.c.l.b16 %v2723
        %v2904 = vpack.c.b16 %v2889, %v2888
        %v2905 = vpack.c.b16 %v2891, %v2890
        %v2906 = vpack.c.b16 %v2893, %v2892
        %v2907 = vpack.c.b16 %v2895, %v2894
        %v2908 = vpack.c.b16 %v2897, %v2896
        %v2909 = vpack.c.b16 %v2899, %v2898
        %v2910 = vpack.c.b16 %v2901, %v2900
        %v2911 = vpack.c.b16 %v2903, %v2902
        %2920 = vmatpush.bf16.msra.mxu0 %v2911
        %2921 = vmatpush.bf16.msra.mxu0 %v2910
        %2922 = vmatpush.bf16.msra.mxu0 %v2909
        %2923 = vmatpush.bf16.msra.mxu0 %v2908
        %2924 = vmatpush.bf16.msra.mxu0 %v2907
        %2925 = vmatpush.bf16.msra.mxu0 %v2906
        %2926 = vmatpush.bf16.msra.mxu0 %v2905
        %2927 = vmatpush.bf16.msra.mxu0 %v2904
        %2928 = vmatmul.bf16.gmra.mxu0 %v1706
        %v2929 = vpop.f32.mrf.mxu0
        %v2930 = vadd.f32 %v2863, %v2929
        %v2931 = vpop.f32.mrf.mxu0
        %v2932 = vadd.f32 %v2865, %v2931
        %2933 = vmatmul.bf16.gmra.mxu0 %v1707
        %v2934 = vpop.f32.mrf.mxu0
        %v2935 = vadd.f32 %v2868, %v2934
        %v2936 = vpop.f32.mrf.mxu0
        %v2937 = vadd.f32 %v2870, %v2936
        %2938 = vdwg.mxu0
        %v2939 = vld [vmem:[%s41] sm:$0x1]
        %v2941 = vperm.slane %v2939, 0
        %v2943 = vadd.f32 %v2930, %v2941
        %v2944 = vadd.f32 %v2932, %v2941
        %v2945 = vadd.f32 %v2935, %v2941
        %v2946 = vadd.f32 %v2937, %v2941
        %v2947 = vmax.f32 %v2943, 0.0
        %v2948 = vmax.f32 %v2944, 0.0
        %v2949 = vmax.f32 %v2945, 0.0
        %v2950 = vmax.f32 %v2946, 0.0
        %v2951 = vpack.c.bf16 %v2947, %v2947
        %v2952 = vpack.c.bf16 %v2948, %v2948
        %v2953 = vpack.c.bf16 %v2949, %v2949
        %v2954 = vpack.c.bf16 %v2950, %v2950
        %2955 = vst [vmem:[#allocation3] sm:$0xf] %v2951
        %2956 = vst [vmem:[#allocation3 + $0x4] sm:$0xf] %v2952
        %2957 = vst [vmem:[#allocation3 + $0xc] sm:$0xf] %v2953
        %2958 = vst [vmem:[#allocation3 + $0x10] sm:$0xf] %v2954
        %v2959 = vld [vmem:[#allocation24] sm:$0xf]
        %v2960 = vld [vmem:[#allocation24 + $0x4] sm:$0xf]
        %v2961 = vld [vmem:[#allocation24 + $0x8] sm:$0xf]
        %v2962 = vld [vmem:[#allocation24 + $0xc] sm:$0xf]
        %v2963 = vld [vmem:[#allocation24 + $0x10] sm:$0xf]
        %v2964 = vld [vmem:[#allocation24 + $0x14] sm:$0xf]
        %v2965 = vld [vmem:[#allocation24 + $0x18] sm:$0xf]
        %v2966 = vld [vmem:[#allocation24 + $0x1c] sm:$0xf]
        %v2967 = vld [vmem:[#allocation24 + $0x20] sm:$0xf]
        %v2968 = vld [vmem:[#allocation24 + $0x24] sm:$0xf]
        %v2969 = vld [vmem:[#allocation24 + $0x28] sm:$0xf]
        %v2970 = vld [vmem:[#allocation24 + $0x2c] sm:$0xf]
        %v2971 = vld [vmem:[#allocation24 + $0x30] sm:$0xf]
        %v2972 = vld [vmem:[#allocation24 + $0x34] sm:$0xf]
        %v2973 = vld [vmem:[#allocation24 + $0x38] sm:$0xf]
        %v2974 = vld [vmem:[#allocation24 + $0x3c] sm:$0xf]
        %v2975 = vld [vmem:[#allocation3] sm:$0xf]
        %v2976 = vld [vmem:[#allocation3 + $0x4] sm:$0xf]
        %v2977 = vld [vmem:[#allocation3 + $0x8] sm:$0x1]
        %v2978 = vld [vmem:[#allocation3 + $0xc] sm:$0xf]
        %v2979 = vld [vmem:[#allocation3 + $0x10] sm:$0xf]
        %v2980 = vld [vmem:[#allocation3 + $0x14] sm:$0x1]
        %v2982 = vshrl.u32 %v2975, 16
        %v2984 = vrot.slane %v2982, 4
        %v2985 = vshll.u32 %v2975, 16
        %v2987 = vrot.slane %v2985, 5
        %v2988 = vor.u32 %v2984, %v2987
        %v2989 = vrot.slane %v2988, 4
        %v2991 = vshll.u32 %v2976, 16
        %v2993 = vrot.slane %v2991, 5
        %v2994 = vsel %vm2732, %v2989, %v2993
        %v2995 = vshrl.u32 %v2976, 16
        %v2997 = vrot.slane %v2995, 4
        %v2998 = vor.u32 %v2997, %v2993
        %v2999 = vrot.slane %v2998, 4
        %v3001 = vshll.u32 %v2977, 16
        %v3003 = vrot.slane %v3001, 5
        %v3004 = vsel %vm2732, %v2999, %v3003
        %v3006 = vshrl.u32 %v2978, 16
        %v3008 = vrot.slane %v3006, 4
        %v3009 = vshll.u32 %v2978, 16
        %v3011 = vrot.slane %v3009, 5
        %v3012 = vor.u32 %v3008, %v3011
        %v3013 = vrot.slane %v3012, 4
        %v3015 = vshll.u32 %v2979, 16
        %v3017 = vrot.slane %v3015, 5
        %v3018 = vsel %vm2732, %v3013, %v3017
        %v3019 = vshrl.u32 %v2979, 16
        %v3021 = vrot.slane %v3019, 4
        %v3022 = vor.u32 %v3021, %v3017
        %v3023 = vrot.slane %v3022, 4
        %v3025 = vshll.u32 %v2980, 16
        %v3027 = vrot.slane %v3025, 5
        %v3028 = vsel %vm2732, %v3023, %v3027
        %v3029 = vld [vmem:[#allocation22] sm:$0xf]
        %v3030 = vld [vmem:[#allocation22 + $0x4] sm:$0xf]
        %v3031 = vld [vmem:[#allocation22 + $0x8] sm:$0xf]
        %v3032 = vld [vmem:[#allocation22 + $0xc] sm:$0xf]
        %v3033 = vld [vmem:[#allocation22 + $0x10] sm:$0xf]
        %v3034 = vld [vmem:[#allocation22 + $0x14] sm:$0xf]
        %v3035 = vld [vmem:[#allocation22 + $0x18] sm:$0xf]
        %v3036 = vld [vmem:[#allocation22 + $0x1c] sm:$0xf]
        %v3037 = vld [vmem:[#allocation22 + $0x20] sm:$0xf]
        %v3038 = vld [vmem:[#allocation22 + $0x24] sm:$0xf]
        %v3039 = vld [vmem:[#allocation22 + $0x28] sm:$0xf]
        %v3040 = vld [vmem:[#allocation22 + $0x2c] sm:$0xf]
        %v3041 = vld [vmem:[#allocation22 + $0x30] sm:$0xf]
        %v3042 = vld [vmem:[#allocation22 + $0x34] sm:$0xf]
        %v3043 = vld [vmem:[#allocation22 + $0x38] sm:$0xf]
        %v3044 = vld [vmem:[#allocation22 + $0x3c] sm:$0xf]
        %v3045 = vunpack.c.l.b16 %v2994
        %v3046 = vunpack.c.l.b16 %v3004
        %v3047 = vunpack.c.l.b16 %v3018
        %v3048 = vunpack.c.l.b16 %v3028
        %v3049 = vpack.c.b16 %v3046, %v3045
        %v3050 = vpack.c.b16 %v3048, %v3047
        %v3069 = vunpack.c.l.b16 %v3029
        %v3070 = vunpack.c.l.b16 %v3030
        %v3071 = vunpack.c.l.b16 %v3031
        %v3072 = vunpack.c.l.b16 %v3032
        %v3073 = vunpack.c.l.b16 %v3033
        %v3074 = vunpack.c.l.b16 %v3034
        %v3075 = vunpack.c.l.b16 %v3035
        %v3076 = vunpack.c.l.b16 %v3036
        %v3077 = vunpack.c.l.b16 %v3037
        %v3078 = vunpack.c.l.b16 %v3038
        %v3079 = vunpack.c.l.b16 %v3039
        %v3080 = vunpack.c.l.b16 %v3040
        %v3081 = vunpack.c.l.b16 %v3041
        %v3082 = vunpack.c.l.b16 %v3042
        %v3083 = vunpack.c.l.b16 %v3043
        %v3084 = vunpack.c.l.b16 %v3044
        %v3085 = vpack.c.b16 %v3070, %v3069
        %v3086 = vpack.c.b16 %v3072, %v3071
        %v3087 = vpack.c.b16 %v3074, %v3073
        %v3088 = vpack.c.b16 %v3076, %v3075
        %v3089 = vpack.c.b16 %v3078, %v3077
        %v3090 = vpack.c.b16 %v3080, %v3079
        %v3091 = vpack.c.b16 %v3082, %v3081
        %v3092 = vpack.c.b16 %v3084, %v3083
        %3101 = vmatpush.bf16.msra.mxu0 %v3092
        %3102 = vmatpush.bf16.msra.mxu0 %v3091
        %3103 = vmatpush.bf16.msra.mxu0 %v3090
        %3104 = vmatpush.bf16.msra.mxu0 %v3089
        %3105 = vmatpush.bf16.msra.mxu0 %v3088
        %3106 = vmatpush.bf16.msra.mxu0 %v3087
        %3107 = vmatpush.bf16.msra.mxu0 %v3086
        %3108 = vmatpush.bf16.msra.mxu0 %v3085
        %3109 = vmatmul.bf16.gmra.mxu0 %v3049
        %v3110 = vpop.f32.mrf.mxu0
        %v3111 = vadd.f32 0.0, %v3110
        %v3112 = vpop.f32.mrf.mxu0
        %v3113 = vadd.f32 0.0, %v3112
        %3114 = vmatmul.bf16.gmra.mxu0 %v3050
        %v3115 = vpop.f32.mrf.mxu0
        %v3116 = vadd.f32 0.0, %v3115
        %v3117 = vpop.f32.mrf.mxu0
        %v3118 = vadd.f32 0.0, %v3117
        %3119 = vdwg.mxu0
        %v3124 = vunpack.c.l.b16 %v2951
        %v3125 = vunpack.c.l.b16 %v2952
        %v3126 = vunpack.c.l.b16 %v2953
        %v3127 = vunpack.c.l.b16 %v2954
        %v3128 = vpack.c.b16 %v3125, %v3124
        %v3129 = vpack.c.b16 %v3127, %v3126
        %v3148 = vunpack.c.l.b16 %v2959
        %v3149 = vunpack.c.l.b16 %v2960
        %v3150 = vunpack.c.l.b16 %v2961
        %v3151 = vunpack.c.l.b16 %v2962
        %v3152 = vunpack.c.l.b16 %v2963
        %v3153 = vunpack.c.l.b16 %v2964
        %v3154 = vunpack.c.l.b16 %v2965
        %v3155 = vunpack.c.l.b16 %v2966
        %v3156 = vunpack.c.l.b16 %v2967
        %v3157 = vunpack.c.l.b16 %v2968
        %v3158 = vunpack.c.l.b16 %v2969
        %v3159 = vunpack.c.l.b16 %v2970
        %v3160 = vunpack.c.l.b16 %v2971
        %v3161 = vunpack.c.l.b16 %v2972
        %v3162 = vunpack.c.l.b16 %v2973
        %v3163 = vunpack.c.l.b16 %v2974
        %v3164 = vpack.c.b16 %v3149, %v3148
        %v3165 = vpack.c.b16 %v3151, %v3150
        %v3166 = vpack.c.b16 %v3153, %v3152
        %v3167 = vpack.c.b16 %v3155, %v3154
        %v3168 = vpack.c.b16 %v3157, %v3156
        %v3169 = vpack.c.b16 %v3159, %v3158
        %v3170 = vpack.c.b16 %v3161, %v3160
        %v3171 = vpack.c.b16 %v3163, %v3162
        %3180 = vmatpush.bf16.msra.mxu0 %v3171
        %3181 = vmatpush.bf16.msra.mxu0 %v3170
        %3182 = vmatpush.bf16.msra.mxu0 %v3169
        %3183 = vmatpush.bf16.msra.mxu0 %v3168
        %3184 = vmatpush.bf16.msra.mxu0 %v3167
        %3185 = vmatpush.bf16.msra.mxu0 %v3166
        %3186 = vmatpush.bf16.msra.mxu0 %v3165
        %3187 = vmatpush.bf16.msra.mxu0 %v3164
        %3188 = vmatmul.bf16.gmra.mxu0 %v3128
        %v3189 = vpop.f32.mrf.mxu0
        %v3190 = vadd.f32 %v3111, %v3189
        %v3191 = vpop.f32.mrf.mxu0
        %v3192 = vadd.f32 %v3113, %v3191
        %3193 = vmatmul.bf16.gmra.mxu0 %v3129
        %v3194 = vpop.f32.mrf.mxu0
        %v3195 = vadd.f32 %v3116, %v3194
        %v3196 = vpop.f32.mrf.mxu0
        %v3197 = vadd.f32 %v3118, %v3196
        %3198 = vdwg.mxu0
        %v3199 = vld [vmem:[%s47] sm:$0x1]
        %v3201 = vperm.slane %v3199, 0
        %v3203 = vadd.f32 %v3190, %v3201
        %v3204 = vadd.f32 %v3192, %v3201
        %v3205 = vadd.f32 %v3195, %v3201
        %v3206 = vadd.f32 %v3197, %v3201
        %v3207 = vmax.f32 %v3203, 0.0
        %v3208 = vmax.f32 %v3204, 0.0
        %v3209 = vmax.f32 %v3205, 0.0
        %v3210 = vmax.f32 %v3206, 0.0
        %v3211 = vld [vmem:[#allocation25] sm:$0xf]
        %v3212 = vld [vmem:[#allocation25 + $0x4] sm:$0xf]
        %v3213 = vld [vmem:[#allocation25 + $0x8] sm:$0xf]
        %v3214 = vld [vmem:[#allocation25 + $0xc] sm:$0xf]
        %v3215 = vld [vmem:[#allocation25 + $0x10] sm:$0xf]
        %v3216 = vld [vmem:[#allocation25 + $0x14] sm:$0xf]
        %v3217 = vld [vmem:[#allocation25 + $0x18] sm:$0xf]
        %v3218 = vld [vmem:[#allocation25 + $0x1c] sm:$0xf]
        %v3219 = vld [vmem:[#allocation25 + $0x20] sm:$0xf]
        %v3220 = vld [vmem:[#allocation25 + $0x24] sm:$0xf]
        %v3221 = vld [vmem:[#allocation25 + $0x28] sm:$0xf]
        %v3222 = vld [vmem:[#allocation25 + $0x2c] sm:$0xf]
        %v3223 = vld [vmem:[#allocation25 + $0x30] sm:$0xf]
        %v3224 = vld [vmem:[#allocation25 + $0x34] sm:$0xf]
        %v3225 = vld [vmem:[#allocation25 + $0x38] sm:$0xf]
        %v3226 = vld [vmem:[#allocation25 + $0x3c] sm:$0xf]
        %v3227 = vld [vmem:[%s51] sm:$0x1]
        %v3229 = vperm.slane %v3227, 0
        %v3247 = vunpack.c.l.b16 %v3211
        %v3248 = vunpack.c.l.b16 %v3212
        %v3249 = vunpack.c.l.b16 %v3213
        %v3250 = vunpack.c.l.b16 %v3214
        %v3251 = vunpack.c.l.b16 %v3215
        %v3252 = vunpack.c.l.b16 %v3216
        %v3253 = vunpack.c.l.b16 %v3217
        %v3254 = vunpack.c.l.b16 %v3218
        %v3255 = vunpack.c.l.b16 %v3219
        %v3256 = vunpack.c.l.b16 %v3220
        %v3257 = vunpack.c.l.b16 %v3221
        %v3258 = vunpack.c.l.b16 %v3222
        %v3259 = vunpack.c.l.b16 %v3223
        %v3260 = vunpack.c.l.b16 %v3224
        %v3261 = vunpack.c.l.b16 %v3225
        %v3262 = vunpack.c.l.b16 %v3226
        %v3263 = vpack.c.b16 %v3248, %v3247
        %v3264 = vpack.c.b16 %v3250, %v3249
        %v3265 = vpack.c.b16 %v3252, %v3251
        %v3266 = vpack.c.b16 %v3254, %v3253
        %v3267 = vpack.c.b16 %v3256, %v3255
        %v3268 = vpack.c.b16 %v3258, %v3257
        %v3269 = vpack.c.b16 %v3260, %v3259
        %v3270 = vpack.c.b16 %v3262, %v3261
        %3279 = vmatpush.bf16.msra.mxu0 %v3270
        %3280 = vmatpush.bf16.msra.mxu0 %v3269
        %3281 = vmatpush.bf16.msra.mxu0 %v3268
        %3282 = vmatpush.bf16.msra.mxu0 %v3267
        %3283 = vmatpush.bf16.msra.mxu0 %v3266
        %3284 = vmatpush.bf16.msra.mxu0 %v3265
        %3285 = vmatpush.bf16.msra.mxu0 %v3264
        %3286 = vmatpush.bf16.msra.mxu0 %v3263
        %3287 = vmatmul.bf16.gmra.mxu0 %v1706
        %v3288 = vpop.f32.mrf.mxu0
        %v3289 = vadd.f32 %v3229, %v3288
        %v3290 = vpop.f32.mrf.mxu0
        %v3291 = vadd.f32 %v3229, %v3290
        %3292 = vmatmul.bf16.gmra.mxu0 %v1707
        %v3293 = vpop.f32.mrf.mxu0
        %v3294 = vadd.f32 %v3229, %v3293
        %v3295 = vpop.f32.mrf.mxu0
        %v3296 = vadd.f32 %v3229, %v3295
        %3297 = vdwg.mxu0
        %v3298 = vadd.f32 %v3207, %v3289
        %v3299 = vadd.f32 %v3208, %v3291
        %v3300 = vadd.f32 %v3209, %v3294
        %v3301 = vadd.f32 %v3210, %v3296
        %v3302 = vmax.f32 %v3298, 0.0
        %v3303 = vmax.f32 %v3299, 0.0
        %v3304 = vmax.f32 %v3300, 0.0
        %v3305 = vmax.f32 %v3301, 0.0
        %v3306 = vpack.c.bf16 %v3302, %v3302
        %v3307 = vpack.c.bf16 %v3303, %v3303
        %v3308 = vpack.c.bf16 %v3304, %v3304
        %v3309 = vpack.c.bf16 %v3305, %v3305
        %3310 = vst [vmem:[#allocation3] sm:$0xf] %v3306
        %3311 = vst [vmem:[#allocation3 + $0x4] sm:$0xf] %v3307
        %3312 = vst [vmem:[#allocation3 + $0xc] sm:$0xf] %v3308
        %3313 = vst [vmem:[#allocation3 + $0x10] sm:$0xf] %v3309
        %v3314 = vld [vmem:[#allocation28] sm:$0xf]
        %v3315 = vld [vmem:[#allocation28 + $0x4] sm:$0xf]
        %v3316 = vld [vmem:[#allocation28 + $0x8] sm:$0xf]
        %v3317 = vld [vmem:[#allocation28 + $0xc] sm:$0xf]
        %v3318 = vld [vmem:[#allocation28 + $0x10] sm:$0xf]
        %v3319 = vld [vmem:[#allocation28 + $0x14] sm:$0xf]
        %v3320 = vld [vmem:[#allocation28 + $0x18] sm:$0xf]
        %v3321 = vld [vmem:[#allocation28 + $0x1c] sm:$0xf]
        %v3322 = vld [vmem:[#allocation28 + $0x20] sm:$0xf]
        %v3323 = vld [vmem:[#allocation28 + $0x24] sm:$0xf]
        %v3324 = vld [vmem:[#allocation28 + $0x28] sm:$0xf]
        %v3325 = vld [vmem:[#allocation28 + $0x2c] sm:$0xf]
        %v3326 = vld [vmem:[#allocation28 + $0x30] sm:$0xf]
        %v3327 = vld [vmem:[#allocation28 + $0x34] sm:$0xf]
        %v3328 = vld [vmem:[#allocation28 + $0x38] sm:$0xf]
        %v3329 = vld [vmem:[#allocation28 + $0x3c] sm:$0xf]
        %v3330 = vld [vmem:[#allocation3] sm:$0xe]
        %v3331 = vld [vmem:[#allocation3 + $0x4] sm:$0xf]
        %v3332 = vld [vmem:[#allocation3 + $0x8] sm:$0x1]
        %v3333 = vld [vmem:[#allocation3 + $0xc] sm:$0xe]
        %v3334 = vld [vmem:[#allocation3 + $0x10] sm:$0xf]
        %v3335 = vld [vmem:[#allocation3 + $0x14] sm:$0x1]
        %vm3342 = vcmask 1042432
        %vm3343 = vcmask 1046532
        %vm3344 = vmor %vm3342, %vm3343
        %v3345 = vrot.slane %v3330, 5
        %v3346 = vrot.slane %v3345, 4
        %v3347 = vrot.slane %v3331, 5
        %v3348 = vsel %vm3344, %v3346, %v3347
        %v3349 = vrot.slane %v3347, 4
        %v3350 = vrot.slane %v3332, 5
        %v3351 = vsel %vm3344, %v3349, %v3350
        %v3352 = vrot.slane %v3333, 5
        %v3353 = vrot.slane %v3352, 4
        %v3354 = vrot.slane %v3334, 5
        %v3355 = vsel %vm3344, %v3353, %v3354
        %v3356 = vrot.slane %v3354, 4
        %v3357 = vrot.slane %v3335, 5
        %v3358 = vsel %vm3344, %v3356, %v3357
        %v3359 = vld [vmem:[#allocation27] sm:$0xf]
        %v3360 = vld [vmem:[#allocation27 + $0x4] sm:$0xf]
        %v3361 = vld [vmem:[#allocation27 + $0x8] sm:$0xf]
        %v3362 = vld [vmem:[#allocation27 + $0xc] sm:$0xf]
        %v3363 = vld [vmem:[#allocation27 + $0x10] sm:$0xf]
        %v3364 = vld [vmem:[#allocation27 + $0x14] sm:$0xf]
        %v3365 = vld [vmem:[#allocation27 + $0x18] sm:$0xf]
        %v3366 = vld [vmem:[#allocation27 + $0x1c] sm:$0xf]
        %v3367 = vld [vmem:[#allocation27 + $0x20] sm:$0xf]
        %v3368 = vld [vmem:[#allocation27 + $0x24] sm:$0xf]
        %v3369 = vld [vmem:[#allocation27 + $0x28] sm:$0xf]
        %v3370 = vld [vmem:[#allocation27 + $0x2c] sm:$0xf]
        %v3371 = vld [vmem:[#allocation27 + $0x30] sm:$0xf]
        %v3372 = vld [vmem:[#allocation27 + $0x34] sm:$0xf]
        %v3373 = vld [vmem:[#allocation27 + $0x38] sm:$0xf]
        %v3374 = vld [vmem:[#allocation27 + $0x3c] sm:$0xf]
        %v3375 = vunpack.c.l.b16 %v3348
        %v3376 = vunpack.c.l.b16 %v3351
        %v3377 = vunpack.c.l.b16 %v3355
        %v3378 = vunpack.c.l.b16 %v3358
        %v3379 = vpack.c.b16 %v3376, %v3375
        %v3380 = vpack.c.b16 %v3378, %v3377
        %v3399 = vunpack.c.l.b16 %v3359
        %v3400 = vunpack.c.l.b16 %v3360
        %v3401 = vunpack.c.l.b16 %v3361
        %v3402 = vunpack.c.l.b16 %v3362
        %v3403 = vunpack.c.l.b16 %v3363
        %v3404 = vunpack.c.l.b16 %v3364
        %v3405 = vunpack.c.l.b16 %v3365
        %v3406 = vunpack.c.l.b16 %v3366
        %v3407 = vunpack.c.l.b16 %v3367
        %v3408 = vunpack.c.l.b16 %v3368
        %v3409 = vunpack.c.l.b16 %v3369
        %v3410 = vunpack.c.l.b16 %v3370
        %v3411 = vunpack.c.l.b16 %v3371
        %v3412 = vunpack.c.l.b16 %v3372
        %v3413 = vunpack.c.l.b16 %v3373
        %v3414 = vunpack.c.l.b16 %v3374
        %v3415 = vpack.c.b16 %v3400, %v3399
        %v3416 = vpack.c.b16 %v3402, %v3401
        %v3417 = vpack.c.b16 %v3404, %v3403
        %v3418 = vpack.c.b16 %v3406, %v3405
        %v3419 = vpack.c.b16 %v3408, %v3407
        %v3420 = vpack.c.b16 %v3410, %v3409
        %v3421 = vpack.c.b16 %v3412, %v3411
        %v3422 = vpack.c.b16 %v3414, %v3413
        %3431 = vmatpush.bf16.msra.mxu0 %v3422
        %3432 = vmatpush.bf16.msra.mxu0 %v3421
        %3433 = vmatpush.bf16.msra.mxu0 %v3420
        %3434 = vmatpush.bf16.msra.mxu0 %v3419
        %3435 = vmatpush.bf16.msra.mxu0 %v3418
        %3436 = vmatpush.bf16.msra.mxu0 %v3417
        %3437 = vmatpush.bf16.msra.mxu0 %v3416
        %3438 = vmatpush.bf16.msra.mxu0 %v3415
        %3439 = vmatmul.bf16.gmra.mxu0 %v3379
        %v3440 = vpop.f32.mrf.mxu0
        %v3441 = vadd.f32 0.0, %v3440
        %v3442 = vpop.f32.mrf.mxu0
        %v3443 = vadd.f32 0.0, %v3442
        %3444 = vmatmul.bf16.gmra.mxu0 %v3380
        %v3445 = vpop.f32.mrf.mxu0
        %v3446 = vadd.f32 0.0, %v3445
        %v3447 = vpop.f32.mrf.mxu0
        %v3448 = vadd.f32 0.0, %v3447
        %3449 = vdwg.mxu0
        %v3454 = vunpack.c.l.b16 %v3306
        %v3455 = vunpack.c.l.b16 %v3307
        %v3456 = vunpack.c.l.b16 %v3308
        %v3457 = vunpack.c.l.b16 %v3309
        %v3458 = vpack.c.b16 %v3455, %v3454
        %v3459 = vpack.c.b16 %v3457, %v3456
        %v3478 = vunpack.c.l.b16 %v3314
        %v3479 = vunpack.c.l.b16 %v3315
        %v3480 = vunpack.c.l.b16 %v3316
        %v3481 = vunpack.c.l.b16 %v3317
        %v3482 = vunpack.c.l.b16 %v3318
        %v3483 = vunpack.c.l.b16 %v3319
        %v3484 = vunpack.c.l.b16 %v3320
        %v3485 = vunpack.c.l.b16 %v3321
        %v3486 = vunpack.c.l.b16 %v3322
        %v3487 = vunpack.c.l.b16 %v3323
        %v3488 = vunpack.c.l.b16 %v3324
        %v3489 = vunpack.c.l.b16 %v3325
        %v3490 = vunpack.c.l.b16 %v3326
        %v3491 = vunpack.c.l.b16 %v3327
        %v3492 = vunpack.c.l.b16 %v3328
        %v3493 = vunpack.c.l.b16 %v3329
        %v3494 = vpack.c.b16 %v3479, %v3478
        %v3495 = vpack.c.b16 %v3481, %v3480
        %v3496 = vpack.c.b16 %v3483, %v3482
        %v3497 = vpack.c.b16 %v3485, %v3484
        %v3498 = vpack.c.b16 %v3487, %v3486
        %v3499 = vpack.c.b16 %v3489, %v3488
        %v3500 = vpack.c.b16 %v3491, %v3490
        %v3501 = vpack.c.b16 %v3493, %v3492
        %3510 = vmatpush.bf16.msra.mxu0 %v3501
        %3511 = vmatpush.bf16.msra.mxu0 %v3500
        %3512 = vmatpush.bf16.msra.mxu0 %v3499
        %3513 = vmatpush.bf16.msra.mxu0 %v3498
        %3514 = vmatpush.bf16.msra.mxu0 %v3497
        %3515 = vmatpush.bf16.msra.mxu0 %v3496
        %3516 = vmatpush.bf16.msra.mxu0 %v3495
        %3517 = vmatpush.bf16.msra.mxu0 %v3494
        %3518 = vmatmul.bf16.gmra.mxu0 %v3458
        %v3519 = vpop.f32.mrf.mxu0
        %v3520 = vadd.f32 %v3441, %v3519
        %v3521 = vpop.f32.mrf.mxu0
        %v3522 = vadd.f32 %v3443, %v3521
        %3523 = vmatmul.bf16.gmra.mxu0 %v3459
        %v3524 = vpop.f32.mrf.mxu0
        %v3525 = vadd.f32 %v3446, %v3524
        %v3526 = vpop.f32.mrf.mxu0
        %v3527 = vadd.f32 %v3448, %v3526
        %3528 = vdwg.mxu0
        %v3529 = vld [vmem:[%s57] sm:$0x1]
        %v3531 = vperm.slane %v3529, 0
        %v3533 = vadd.f32 %v3520, %v3531
        %v3534 = vadd.f32 %v3522, %v3531
        %v3535 = vadd.f32 %v3525, %v3531
        %v3536 = vadd.f32 %v3527, %v3531
        %v3537 = vmax.f32 %v3533, 0.0
        %v3538 = vmax.f32 %v3534, 0.0
        %v3539 = vmax.f32 %v3535, 0.0
        %v3540 = vmax.f32 %v3536, 0.0
        %v3541 = vpack.c.bf16 %v3537, %v3537
        %v3542 = vpack.c.bf16 %v3538, %v3538
        %v3543 = vpack.c.bf16 %v3539, %v3539
        %v3544 = vpack.c.bf16 %v3540, %v3540
        %3545 = vst [vmem:[#allocation3] sm:$0xf] %v3541
        %3546 = vst [vmem:[#allocation3 + $0x4] sm:$0xf] %v3542
        %3547 = vst [vmem:[#allocation3 + $0xc] sm:$0xf] %v3543
        %3548 = vst [vmem:[#allocation3 + $0x10] sm:$0xf] %v3544
        %v3549 = vld [vmem:[#allocation31] sm:$0xf]
        %v3550 = vld [vmem:[#allocation31 + $0x4] sm:$0xf]
        %v3551 = vld [vmem:[#allocation31 + $0x8] sm:$0xf]
        %v3552 = vld [vmem:[#allocation31 + $0xc] sm:$0xf]
        %v3553 = vld [vmem:[#allocation31 + $0x10] sm:$0xf]
        %v3554 = vld [vmem:[#allocation31 + $0x14] sm:$0xf]
        %v3555 = vld [vmem:[#allocation31 + $0x18] sm:$0xf]
        %v3556 = vld [vmem:[#allocation31 + $0x1c] sm:$0xf]
        %v3557 = vld [vmem:[#allocation31 + $0x20] sm:$0xf]
        %v3558 = vld [vmem:[#allocation31 + $0x24] sm:$0xf]
        %v3559 = vld [vmem:[#allocation31 + $0x28] sm:$0xf]
        %v3560 = vld [vmem:[#allocation31 + $0x2c] sm:$0xf]
        %v3561 = vld [vmem:[#allocation31 + $0x30] sm:$0xf]
        %v3562 = vld [vmem:[#allocation31 + $0x34] sm:$0xf]
        %v3563 = vld [vmem:[#allocation31 + $0x38] sm:$0xf]
        %v3564 = vld [vmem:[#allocation31 + $0x3c] sm:$0xf]
        %v3565 = vld [vmem:[#allocation3] sm:$0xe]
        %v3566 = vld [vmem:[#allocation3 + $0x4] sm:$0xf]
        %v3567 = vld [vmem:[#allocation3 + $0x8] sm:$0x1]
        %v3568 = vld [vmem:[#allocation3 + $0xc] sm:$0xe]
        %v3569 = vld [vmem:[#allocation3 + $0x10] sm:$0xf]
        %v3570 = vld [vmem:[#allocation3 + $0x14] sm:$0x1]
        %v3577 = vrot.slane %v3565, 5
        %v3578 = vrot.slane %v3577, 4
        %v3579 = vrot.slane %v3566, 5
        %v3580 = vsel %vm3344, %v3578, %v3579
        %v3581 = vrot.slane %v3579, 4
        %v3582 = vrot.slane %v3567, 5
        %v3583 = vsel %vm3344, %v3581, %v3582
        %v3584 = vrot.slane %v3568, 5
        %v3585 = vrot.slane %v3584, 4
        %v3586 = vrot.slane %v3569, 5
        %v3587 = vsel %vm3344, %v3585, %v3586
        %v3588 = vrot.slane %v3586, 4
        %v3589 = vrot.slane %v3570, 5
        %v3590 = vsel %vm3344, %v3588, %v3589
        %v3591 = vld [vmem:[#allocation30] sm:$0xf]
        %v3592 = vld [vmem:[#allocation30 + $0x4] sm:$0xf]
        %v3593 = vld [vmem:[#allocation30 + $0x8] sm:$0xf]
        %v3594 = vld [vmem:[#allocation30 + $0xc] sm:$0xf]
        %v3595 = vld [vmem:[#allocation30 + $0x10] sm:$0xf]
        %v3596 = vld [vmem:[#allocation30 + $0x14] sm:$0xf]
        %v3597 = vld [vmem:[#allocation30 + $0x18] sm:$0xf]
        %v3598 = vld [vmem:[#allocation30 + $0x1c] sm:$0xf]
        %v3599 = vld [vmem:[#allocation30 + $0x20] sm:$0xf]
        %v3600 = vld [vmem:[#allocation30 + $0x24] sm:$0xf]
        %v3601 = vld [vmem:[#allocation30 + $0x28] sm:$0xf]
        %v3602 = vld [vmem:[#allocation30 + $0x2c] sm:$0xf]
        %v3603 = vld [vmem:[#allocation30 + $0x30] sm:$0xf]
        %v3604 = vld [vmem:[#allocation30 + $0x34] sm:$0xf]
        %v3605 = vld [vmem:[#allocation30 + $0x38] sm:$0xf]
        %v3606 = vld [vmem:[#allocation30 + $0x3c] sm:$0xf]
        %v3607 = vunpack.c.l.b16 %v3580
        %v3608 = vunpack.c.l.b16 %v3583
        %v3609 = vunpack.c.l.b16 %v3587
        %v3610 = vunpack.c.l.b16 %v3590
        %v3611 = vpack.c.b16 %v3608, %v3607
        %v3612 = vpack.c.b16 %v3610, %v3609
        %v3631 = vunpack.c.l.b16 %v3591
        %v3632 = vunpack.c.l.b16 %v3592
        %v3633 = vunpack.c.l.b16 %v3593
        %v3634 = vunpack.c.l.b16 %v3594
        %v3635 = vunpack.c.l.b16 %v3595
        %v3636 = vunpack.c.l.b16 %v3596
        %v3637 = vunpack.c.l.b16 %v3597
        %v3638 = vunpack.c.l.b16 %v3598
        %v3639 = vunpack.c.l.b16 %v3599
        %v3640 = vunpack.c.l.b16 %v3600
        %v3641 = vunpack.c.l.b16 %v3601
        %v3642 = vunpack.c.l.b16 %v3602
        %v3643 = vunpack.c.l.b16 %v3603
        %v3644 = vunpack.c.l.b16 %v3604
        %v3645 = vunpack.c.l.b16 %v3605
        %v3646 = vunpack.c.l.b16 %v3606
        %v3647 = vpack.c.b16 %v3632, %v3631
        %v3648 = vpack.c.b16 %v3634, %v3633
        %v3649 = vpack.c.b16 %v3636, %v3635
        %v3650 = vpack.c.b16 %v3638, %v3637
        %v3651 = vpack.c.b16 %v3640, %v3639
        %v3652 = vpack.c.b16 %v3642, %v3641
        %v3653 = vpack.c.b16 %v3644, %v3643
        %v3654 = vpack.c.b16 %v3646, %v3645
        %3663 = vmatpush.bf16.msra.mxu0 %v3654
        %3664 = vmatpush.bf16.msra.mxu0 %v3653
        %3665 = vmatpush.bf16.msra.mxu0 %v3652
        %3666 = vmatpush.bf16.msra.mxu0 %v3651
        %3667 = vmatpush.bf16.msra.mxu0 %v3650
        %3668 = vmatpush.bf16.msra.mxu0 %v3649
        %3669 = vmatpush.bf16.msra.mxu0 %v3648
        %3670 = vmatpush.bf16.msra.mxu0 %v3647
        %3671 = vmatmul.bf16.gmra.mxu0 %v3611
        %v3672 = vpop.f32.mrf.mxu0
        %v3673 = vadd.f32 0.0, %v3672
        %v3674 = vpop.f32.mrf.mxu0
        %v3675 = vadd.f32 0.0, %v3674
        %3676 = vmatmul.bf16.gmra.mxu0 %v3612
        %v3677 = vpop.f32.mrf.mxu0
        %v3678 = vadd.f32 0.0, %v3677
        %v3679 = vpop.f32.mrf.mxu0
        %v3680 = vadd.f32 0.0, %v3679
        %3681 = vdwg.mxu0
        %v3686 = vunpack.c.l.b16 %v3541
        %v3687 = vunpack.c.l.b16 %v3542
        %v3688 = vunpack.c.l.b16 %v3543
        %v3689 = vunpack.c.l.b16 %v3544
        %v3690 = vpack.c.b16 %v3687, %v3686
        %v3691 = vpack.c.b16 %v3689, %v3688
        %v3710 = vunpack.c.l.b16 %v3549
        %v3711 = vunpack.c.l.b16 %v3550
        %v3712 = vunpack.c.l.b16 %v3551
        %v3713 = vunpack.c.l.b16 %v3552
        %v3714 = vunpack.c.l.b16 %v3553
        %v3715 = vunpack.c.l.b16 %v3554
        %v3716 = vunpack.c.l.b16 %v3555
        %v3717 = vunpack.c.l.b16 %v3556
        %v3718 = vunpack.c.l.b16 %v3557
        %v3719 = vunpack.c.l.b16 %v3558
        %v3720 = vunpack.c.l.b16 %v3559
        %v3721 = vunpack.c.l.b16 %v3560
        %v3722 = vunpack.c.l.b16 %v3561
        %v3723 = vunpack.c.l.b16 %v3562
        %v3724 = vunpack.c.l.b16 %v3563
        %v3725 = vunpack.c.l.b16 %v3564
        %v3726 = vpack.c.b16 %v3711, %v3710
        %v3727 = vpack.c.b16 %v3713, %v3712
        %v3728 = vpack.c.b16 %v3715, %v3714
        %v3729 = vpack.c.b16 %v3717, %v3716
        %v3730 = vpack.c.b16 %v3719, %v3718
        %v3731 = vpack.c.b16 %v3721, %v3720
        %v3732 = vpack.c.b16 %v3723, %v3722
        %v3733 = vpack.c.b16 %v3725, %v3724
        %3742 = vmatpush.bf16.msra.mxu0 %v3733
        %3743 = vmatpush.bf16.msra.mxu0 %v3732
        %3744 = vmatpush.bf16.msra.mxu0 %v3731
        %3745 = vmatpush.bf16.msra.mxu0 %v3730
        %3746 = vmatpush.bf16.msra.mxu0 %v3729
        %3747 = vmatpush.bf16.msra.mxu0 %v3728
        %3748 = vmatpush.bf16.msra.mxu0 %v3727
        %3749 = vmatpush.bf16.msra.mxu0 %v3726
        %3750 = vmatmul.bf16.gmra.mxu0 %v3690
        %v3751 = vpop.f32.mrf.mxu0
        %v3752 = vadd.f32 %v3673, %v3751
        %v3753 = vpop.f32.mrf.mxu0
        %v3754 = vadd.f32 %v3675, %v3753
        %3755 = vmatmul.bf16.gmra.mxu0 %v3691
        %v3756 = vpop.f32.mrf.mxu0
        %v3757 = vadd.f32 %v3678, %v3756
        %v3758 = vpop.f32.mrf.mxu0
        %v3759 = vadd.f32 %v3680, %v3758
        %3760 = vdwg.mxu0
        %v3761 = vld [vmem:[%s63] sm:$0x1]
        %v3763 = vperm.slane %v3761, 0
        %v3765 = vadd.f32 %v3752, %v3763
        %v3766 = vadd.f32 %v3754, %v3763
        %v3767 = vadd.f32 %v3757, %v3763
        %v3768 = vadd.f32 %v3759, %v3763
        %v3769 = vmax.f32 %v3765, 0.0
        %v3770 = vmax.f32 %v3766, 0.0
        %v3771 = vmax.f32 %v3767, 0.0
        %v3772 = vmax.f32 %v3768, 0.0
        %v3773 = vld [vmem:[#allocation33] sm:$0xf]
        %v3774 = vld [vmem:[#allocation33 + $0x4] sm:$0xf]
        %v3775 = vld [vmem:[#allocation33 + $0x8] sm:$0xf]
        %v3776 = vld [vmem:[#allocation33 + $0xc] sm:$0xf]
        %v3777 = vld [vmem:[#allocation33 + $0x10] sm:$0xf]
        %v3778 = vld [vmem:[#allocation33 + $0x14] sm:$0xf]
        %v3779 = vld [vmem:[#allocation33 + $0x18] sm:$0xf]
        %v3780 = vld [vmem:[#allocation33 + $0x1c] sm:$0xf]
        %v3781 = vld [vmem:[#allocation33 + $0x20] sm:$0xf]
        %v3782 = vld [vmem:[#allocation33 + $0x24] sm:$0xf]
        %v3783 = vld [vmem:[#allocation33 + $0x28] sm:$0xf]
        %v3784 = vld [vmem:[#allocation33 + $0x2c] sm:$0xf]
        %v3785 = vld [vmem:[#allocation33 + $0x30] sm:$0xf]
        %v3786 = vld [vmem:[#allocation33 + $0x34] sm:$0xf]
        %v3787 = vld [vmem:[#allocation33 + $0x38] sm:$0xf]
        %v3788 = vld [vmem:[#allocation33 + $0x3c] sm:$0xf]
        %v3789 = vld [vmem:[%s67] sm:$0x1]
        %v3791 = vperm.slane %v3789, 0
        %v3809 = vunpack.c.l.b16 %v3773
        %v3810 = vunpack.c.l.b16 %v3774
        %v3811 = vunpack.c.l.b16 %v3775
        %v3812 = vunpack.c.l.b16 %v3776
        %v3813 = vunpack.c.l.b16 %v3777
        %v3814 = vunpack.c.l.b16 %v3778
        %v3815 = vunpack.c.l.b16 %v3779
        %v3816 = vunpack.c.l.b16 %v3780
        %v3817 = vunpack.c.l.b16 %v3781
        %v3818 = vunpack.c.l.b16 %v3782
        %v3819 = vunpack.c.l.b16 %v3783
        %v3820 = vunpack.c.l.b16 %v3784
        %v3821 = vunpack.c.l.b16 %v3785
        %v3822 = vunpack.c.l.b16 %v3786
        %v3823 = vunpack.c.l.b16 %v3787
        %v3824 = vunpack.c.l.b16 %v3788
        %v3825 = vpack.c.b16 %v3810, %v3809
        %v3826 = vpack.c.b16 %v3812, %v3811
        %v3827 = vpack.c.b16 %v3814, %v3813
        %v3828 = vpack.c.b16 %v3816, %v3815
        %v3829 = vpack.c.b16 %v3818, %v3817
        %v3830 = vpack.c.b16 %v3820, %v3819
        %v3831 = vpack.c.b16 %v3822, %v3821
        %v3832 = vpack.c.b16 %v3824, %v3823
        %3841 = vmatpush.bf16.msra.mxu0 %v3832
        %3842 = vmatpush.bf16.msra.mxu0 %v3831
        %3843 = vmatpush.bf16.msra.mxu0 %v3830
        %3844 = vmatpush.bf16.msra.mxu0 %v3829
        %3845 = vmatpush.bf16.msra.mxu0 %v3828
        %3846 = vmatpush.bf16.msra.mxu0 %v3827
        %3847 = vmatpush.bf16.msra.mxu0 %v3826
        %3848 = vmatpush.bf16.msra.mxu0 %v3825
        %3849 = vmatmul.bf16.gmra.mxu0 %v3458
        %v3850 = vpop.f32.mrf.mxu0
        %v3851 = vadd.f32 %v3791, %v3850
        %v3852 = vpop.f32.mrf.mxu0
        %v3853 = vadd.f32 %v3791, %v3852
        %3854 = vmatmul.bf16.gmra.mxu0 %v3459
        %v3855 = vpop.f32.mrf.mxu0
        %v3856 = vadd.f32 %v3791, %v3855
        %v3857 = vpop.f32.mrf.mxu0
        %v3858 = vadd.f32 %v3791, %v3857
        %3859 = vdwg.mxu0
        %v3860 = vadd.f32 %v3769, %v3851
        %v3861 = vadd.f32 %v3770, %v3853
        %v3862 = vadd.f32 %v3771, %v3856
        %v3863 = vadd.f32 %v3772, %v3858
        %v3864 = vmax.f32 %v3860, 0.0
        %v3865 = vmax.f32 %v3861, 0.0
        %v3866 = vmax.f32 %v3862, 0.0
        %v3867 = vmax.f32 %v3863, 0.0
        %v3868 = vpack.c.bf16 %v3865, %v3864
        %v3869 = vpack.c.bf16 %v3867, %v3866
        %v3870 = vld [vmem:[#allocation34] sm:$0xf]
        %v3871 = vld [vmem:[#allocation34 + $0x4] sm:$0xf]
        %v3872 = vld [vmem:[#allocation34 + $0x8] sm:$0xf]
        %v3873 = vld [vmem:[#allocation34 + $0xc] sm:$0xf]
        %v3874 = vld [vmem:[#allocation34 + $0x10] sm:$0xf]
        %v3875 = vld [vmem:[#allocation34 + $0x14] sm:$0xf]
        %v3876 = vld [vmem:[#allocation34 + $0x18] sm:$0xf]
        %v3877 = vld [vmem:[#allocation34 + $0x1c] sm:$0xf]
        %v3878 = vld [vmem:[#allocation34 + $0x20] sm:$0xf]
        %v3879 = vld [vmem:[#allocation34 + $0x24] sm:$0xf]
        %v3880 = vld [vmem:[#allocation34 + $0x28] sm:$0xf]
        %v3881 = vld [vmem:[#allocation34 + $0x2c] sm:$0xf]
        %v3882 = vld [vmem:[#allocation34 + $0x30] sm:$0xf]
        %v3883 = vld [vmem:[#allocation34 + $0x34] sm:$0xf]
        %v3884 = vld [vmem:[#allocation34 + $0x38] sm:$0xf]
        %v3885 = vld [vmem:[#allocation34 + $0x3c] sm:$0xf]
        %v3886 = vld [vmem:[#allocation36] sm:$0xf]
        %v3887 = vld [vmem:[#allocation36 + $0x4] sm:$0xf]
        %v3888 = vld [vmem:[#allocation36 + $0x8] sm:$0xf]
        %v3889 = vld [vmem:[#allocation36 + $0xc] sm:$0xf]
        %v3890 = vld [vmem:[#allocation36 + $0x10] sm:$0xf]
        %v3891 = vld [vmem:[#allocation36 + $0x14] sm:$0xf]
        %v3892 = vld [vmem:[#allocation36 + $0x18] sm:$0xf]
        %v3893 = vld [vmem:[#allocation36 + $0x1c] sm:$0xf]
        %v3894 = vld [vmem:[#allocation36 + $0x20] sm:$0xf]
        %v3895 = vld [vmem:[#allocation36 + $0x24] sm:$0xf]
        %v3896 = vld [vmem:[#allocation36 + $0x28] sm:$0xf]
        %v3897 = vld [vmem:[#allocation36 + $0x2c] sm:$0xf]
        %v3898 = vld [vmem:[#allocation36 + $0x30] sm:$0xf]
        %v3899 = vld [vmem:[#allocation36 + $0x34] sm:$0xf]
        %v3900 = vld [vmem:[#allocation36 + $0x38] sm:$0xf]
        %v3901 = vld [vmem:[#allocation36 + $0x3c] sm:$0xf]
        %v3918 = vunpack.c.l.b16 %v3886
        %v3919 = vunpack.c.l.b16 %v3887
        %v3920 = vunpack.c.l.b16 %v3888
        %v3921 = vunpack.c.l.b16 %v3889
        %v3922 = vunpack.c.l.b16 %v3890
        %v3923 = vunpack.c.l.b16 %v3891
        %v3924 = vunpack.c.l.b16 %v3892
        %v3925 = vunpack.c.l.b16 %v3893
        %v3926 = vunpack.c.l.b16 %v3894
        %v3927 = vunpack.c.l.b16 %v3895
        %v3928 = vunpack.c.l.b16 %v3896
        %v3929 = vunpack.c.l.b16 %v3897
        %v3930 = vunpack.c.l.b16 %v3898
        %v3931 = vunpack.c.l.b16 %v3899
        %v3932 = vunpack.c.l.b16 %v3900
        %v3933 = vunpack.c.l.b16 %v3901
        %v3934 = vpack.c.b16 %v3919, %v3918
        %v3935 = vpack.c.b16 %v3921, %v3920
        %v3936 = vpack.c.b16 %v3923, %v3922
        %v3937 = vpack.c.b16 %v3925, %v3924
        %v3938 = vpack.c.b16 %v3927, %v3926
        %v3939 = vpack.c.b16 %v3929, %v3928
        %v3940 = vpack.c.b16 %v3931, %v3930
        %v3941 = vpack.c.b16 %v3933, %v3932
        %3950 = vmatpush.bf16.msra.mxu0 %v3941
        %3951 = vmatpush.bf16.msra.mxu0 %v3940
        %3952 = vmatpush.bf16.msra.mxu0 %v3939
        %3953 = vmatpush.bf16.msra.mxu0 %v3938
        %3954 = vmatpush.bf16.msra.mxu0 %v3937
        %3955 = vmatpush.bf16.msra.mxu0 %v3936
        %3956 = vmatpush.bf16.msra.mxu0 %v3935
        %3957 = vmatpush.bf16.msra.mxu0 %v3934
        %3958 = vmatmul.bf16.gmra.mxu0 %v3868
        %v3959 = vpop.f32.mrf.mxu0
        %v3960 = vadd.f32 0.0, %v3959
        %v3961 = vpop.f32.mrf.mxu0
        %v3962 = vadd.f32 0.0, %v3961
        %3963 = vmatmul.bf16.gmra.mxu0 %v3869
        %v3964 = vpop.f32.mrf.mxu0
        %v3965 = vadd.f32 0.0, %v3964
        %v3966 = vpop.f32.mrf.mxu0
        %v3967 = vadd.f32 0.0, %v3966
        %3968 = vdwg.mxu0
        %v3985 = vunpack.c.l.b16 %v3870
        %v3986 = vunpack.c.l.b16 %v3871
        %v3987 = vunpack.c.l.b16 %v3872
        %v3988 = vunpack.c.l.b16 %v3873
        %v3989 = vunpack.c.l.b16 %v3874
        %v3990 = vunpack.c.l.b16 %v3875
        %v3991 = vunpack.c.l.b16 %v3876
        %v3992 = vunpack.c.l.b16 %v3877
        %v3993 = vunpack.c.l.b16 %v3878
        %v3994 = vunpack.c.l.b16 %v3879
        %v3995 = vunpack.c.l.b16 %v3880
        %v3996 = vunpack.c.l.b16 %v3881
        %v3997 = vunpack.c.l.b16 %v3882
        %v3998 = vunpack.c.l.b16 %v3883
        %v3999 = vunpack.c.l.b16 %v3884
        %v4000 = vunpack.c.l.b16 %v3885
        %v4001 = vpack.c.b16 %v3986, %v3985
        %v4002 = vpack.c.b16 %v3988, %v3987
        %v4003 = vpack.c.b16 %v3990, %v3989
        %v4004 = vpack.c.b16 %v3992, %v3991
        %v4005 = vpack.c.b16 %v3994, %v3993
        %v4006 = vpack.c.b16 %v3996, %v3995
        %v4007 = vpack.c.b16 %v3998, %v3997
        %v4008 = vpack.c.b16 %v4000, %v3999
        %4017 = vmatpush.bf16.msra.mxu0 %v4008
        %4018 = vmatpush.bf16.msra.mxu0 %v4007
        %4019 = vmatpush.bf16.msra.mxu0 %v4006
        %4020 = vmatpush.bf16.msra.mxu0 %v4005
        %4021 = vmatpush.bf16.msra.mxu0 %v4004
        %4022 = vmatpush.bf16.msra.mxu0 %v4003
        %4023 = vmatpush.bf16.msra.mxu0 %v4002
        %4024 = vmatpush.bf16.msra.mxu0 %v4001
        %4025 = vmatmul.bf16.gmra.mxu0 %v2702
        %v4026 = vpop.f32.mrf.mxu0
        %v4027 = vadd.f32 %v3960, %v4026
        %v4028 = vpop.f32.mrf.mxu0
        %v4029 = vadd.f32 %v3962, %v4028
        %4030 = vmatmul.bf16.gmra.mxu0 %v2703
        %v4031 = vpop.f32.mrf.mxu0
        %v4032 = vadd.f32 %v3965, %v4031
        %v4033 = vpop.f32.mrf.mxu0
        %v4034 = vadd.f32 %v3967, %v4033
        %4035 = vdwg.mxu0
        %v4036 = vld [vmem:[%s73] sm:$0x1]
        %v4038 = vperm.slane %v4036, 0
        %v4040 = vadd.f32 %v4027, %v4038
        %v4041 = vadd.f32 %v4029, %v4038
        %v4042 = vadd.f32 %v4032, %v4038
        %v4043 = vadd.f32 %v4034, %v4038
        %4044 = vst [vmem:[%s1469] sm:$0xff] %v4040
        %4045 = vst [vmem:[%s1469 + $0x8] sm:$0xff] %v4041
        %s4046 = scalar_lea.vmem %s1469, 16 [#allocation37]
        %4047 = vst [vmem:[%s4046] sm:$0xff] %v4042
        %4048 = vst [vmem:[%s4046 + $0x8] sm:$0xff] %v4043
        %s4049 = sand.u32 %s890, 1
        %s4050 = scalar_lea.sflag [#allocation6], %s4049
        %s4051 = sand.u32 %s890, 1
        %s4052 = smul.addr %s4051, 32
        %s4053 = scalar_lea.vmem [#allocation37], %s4052
        // Predicated region
        $region253: #{tpu_custom_call.1} parent=167 // pred_check
          %p4054 = pneg %p900
        $region254: #{tpu_custom_call.1} parent=167 // pred_check_branch
          %4056 = sbr.rel (%p4054) target = $region256
        $region255: #{tpu_custom_call.1} parent=167 // pred_region
          %s4057 = smul.u32 2, %s100
          %4059 = vsyncadd %s4050, 0
          %s4060 = smul.addr %s4057, 2
          %s4061 = smul.addr %s4060, 8
          %s4062 = scalar_lea.hbm %s75, %s4061
          %s4063 = sshll.u32 %s4053, 4
          %s4064 = int_to_ptr.vmem [resolvable:$true] %s4063
          %s4065 = sshll.u32 %s4062, 4
          %s4066 = int_to_ptr.hbm [resolvable:$true] %s4065
          %4071 = dma.vmem_to_hbm [thread:$0]  %s4064, 512, %s4066, %s4050, 128, 128, 8
        $region256: #{tpu_custom_call.1} parent=167 // pred_fallthru
          _
      $region168: #{tpu_custom_call.1} parent=5 // pred_fallthru
        _
      %p4072 = scmp.le.s32.totalorder 2, %s95
      // Predicated region
      $region257: #{tpu_custom_call.1} parent=5 // pred_check
        %p4073 = pneg %p4072
      $region258: #{tpu_custom_call.1} parent=5 // pred_check_branch
        %4075 = sbr.rel (%p4073) target = $region260
      $region259: #{tpu_custom_call.1} parent=5 // pred_region
        %s4076 = ssub.s32 %s95, 2
        // Predicated region
        $region261: #{tpu_custom_call.1} parent=259 // pred_check
          %p4077 = pneg %p906
        $region262: #{tpu_custom_call.1} parent=259 // pred_check_branch
          %4079 = sbr.rel (%p4077) target = $region264
        $region263: #{tpu_custom_call.1} parent=259 // pred_region
          %s4080 = sand.u32 %s891, 1
          %s4081 = scalar_lea.sflag [#allocation6], %s4080
          %s4082 = sand.u32 %s891, 1
          %s4083 = smul.addr %s4082, 32
          %s4084 = scalar_lea.vmem [#allocation37], %s4083
          %4086 = dma.done %s4081, 512
        $region264: #{tpu_custom_call.1} parent=259 // pred_fallthru
          _
      $region260: #{tpu_custom_call.1} parent=5 // pred_fallthru
        _
    $region6: #{tpu_custom_call.1} parent=1 // loop_footer
      %s99 = sadd.s32 1, %s95
    $region7: #{tpu_custom_call.1} parent=1 // loop_footer_branch
      %94 = sbr.rel target = $region3
    $region8: #{tpu_custom_call.1} parent=1 // loop_exit
      _
    %4087 = vsyncpa [#allocation5], 1
    %s4088 = scalar_lea.sflag [#allocation5], 1
    %4089 = vsyncpa %s4088, 1
    %4090 = vsyncpa [#allocation8], 1
    %4091 = vsyncpa [#allocation11], 1
    %4092 = vsyncpa [#allocation14], 1
    %4093 = vsyncpa [#allocation17], 1
    %4094 = vsyncpa [#allocation20], 1
    %4095 = vsyncpa [#allocation23], 1
    %4096 = vsyncpa [#allocation26], 1
    %4097 = vsyncpa [#allocation29], 1
    %4098 = vsyncpa [#allocation32], 1
    %4099 = vsyncpa [#allocation35], 1
    %4100 = vsyncpa [#allocation6], 1
    %s4101 = scalar_lea.sflag [#allocation6], 1
    %4102 = vsyncpa %s4101, 1

</llo_original>
